<compile_context>
chip_gen: v7x
topology: tpu7x:2x2x1
jax: 0.10.0
libtpu: 0.0.40
codegen_flags: <defaults>
</compile_context>

<pallas_src>
import jax
import jax.numpy as jnp
from jax.experimental import pallas as pl
from jax.experimental.pallas import tpu as pltpu

# ---------------------- static network geometry (L=256) -------------------- #
L_IN = 256                      # input length (so flatten size == 256)
C1 = 128                        # conv channel width
K1, S1 = 7, 3                   # conv1 kernel / stride
T1 = (L_IN - K1) // S1 + 1      # 84
PK1, PS1 = 7, 3                 # maxpool1
TP1 = (T1 - PK1) // PS1 + 1     # 26 (only first 24 positions feed conv2)
K2, S2 = 3, 3                   # conv2 kernel / stride
T2 = (TP1 - K2) // S2 + 1       # 8
PK2, PS2 = 3, 3                 # maxpool2
TP2 = (T2 - PK2) // PS2 + 1     # 2
FLAT = C1 * TP2                 # 256
H1, H2, NOUT = 512, 11, 2


# ------------------------------ fused kernel ------------------------------- #

def _cnn1d_fused_kernel(xs_ref, w1_ref, b1_ref, w2_ref, b2_ref,
                        wf1_ref, bf1_ref, wf2_ref, bf2_ref, wf3_ref, bf3_ref,
                        out_ref, y1_s, p2_s):
    # ---- conv1: Conv1d(1, 128, k=7, s=3) + ReLU via 7 VPU shift-and-MACs ----
    xs = xs_ref[0]                                  # (T1, K1) f32, one sample
    acc = xs[:, 0:1] * w1_ref[0:1, :]               # (T1, C1)
    for j in range(1, K1):
        acc = acc + xs[:, j:j + 1] * w1_ref[j:j + 1, :]
    y1_s[...] = jnp.maximum(acc + b1_ref[...], 0.0)  # (T1, C1) in VMEM scratch

    # ---- maxpool1 (k=7, s=3) fused with conv2 im2col -------------------------
    # pooled position p feeds conv2 tap (t2=p//3, j=p%3); write it straight
    # into the conv2 patch matrix.  Positions 24,25 are never consumed
    # downstream, so they are skipped (identical final output).
    for p in range(K2 * T2):                         # 24 positions
        t2, j = divmod(p, K2)
        w = y1_s[PS1 * p: PS1 * p + 1, :]            # (1, C1)
        for m in range(1, PK1):
            w = jnp.maximum(w, y1_s[PS1 * p + m: PS1 * p + m + 1, :])
        p2_s[t2:t2 + 1, C1 * j:C1 * (j + 1)] = w

    # ---- conv2: Conv1d(128, 128, k=3, s=3) + ReLU as one MXU matmul ----------
    p2 = p2_s[...].astype(jnp.bfloat16)              # (T2, K2*C1) = (8, 384)
    y2 = jnp.dot(p2, w2_ref[...], preferred_element_type=jnp.float32)
    y2 = jnp.maximum(y2 + b2_ref[...], 0.0)          # (T2, C1) f32

    # ---- maxpool2 (k=3, s=3) -> 2 positions, stays in vregs ------------------
    q0 = jnp.maximum(jnp.maximum(y2[0:1, :], y2[1:2, :]), y2[2:3, :])
    q1 = jnp.maximum(jnp.maximum(y2[3:4, :], y2[4:5, :]), y2[5:6, :])
    flat = jnp.concatenate([q0, q1], axis=1)         # (1, FLAT) in (l, c) order

    # ---- fc1 + ReLU, fc2 + ReLU, fc3 (dropouts are identity at inference) ----
    h = jnp.dot(flat.astype(jnp.bfloat16), wf1_ref[...],
                preferred_element_type=jnp.float32) + bf1_ref[...]
    h = jnp.maximum(h, 0.0)                          # (1, H1)
    h = jnp.dot(h.astype(jnp.bfloat16), wf2_ref[...],
                preferred_element_type=jnp.float32) + bf2_ref[...]
    h = jnp.maximum(h, 0.0)                          # (1, H2)
    out = jnp.dot(h, wf3_ref[...],
                  preferred_element_type=jnp.float32) + bf3_ref[...]
    out_ref[0] = out                                 # (1, NOUT)


# ------------------------------- JAX glue ----------------------------------- #

def init_params(key):
    # Deterministic synthetic parameters, PyTorch-default-style U(+-1/sqrt(fan_in)).
    ks = jax.random.split(key, 10)

    def u(k, shape, fan_in):
        bound = 1.0 / jnp.sqrt(jnp.float32(fan_in))
        return jax.random.uniform(k, shape, jnp.float32, -bound, bound)

    return {
        "w1": u(ks[0], (C1, 1, K1), K1),            # Conv1d(1, 128, k=7)  (out, in, k)
        "b1": u(ks[1], (C1,), K1),
        "w2": u(ks[2], (C1, C1, K2), C1 * K2),      # Conv1d(128, 128, k=3)
        "b2": u(ks[3], (C1,), C1 * K2),
        "wf1": u(ks[4], (FLAT, H1), FLAT),          # Linear(256, 512) stored (in, out)
        "bf1": u(ks[5], (H1,), FLAT),
        "wf2": u(ks[6], (H1, H2), H1),              # Linear(512, 11)
        "bf2": u(ks[7], (H2,), H1),
        "wf3": u(ks[8], (H2, NOUT), H2),            # Linear(11, 2)
        "bf3": u(ks[9], (NOUT,), H2),
    }


def cnn1d_forward(params, x):
    # x: (B, 1, L_IN) in PyTorch NCL layout.
    B = x.shape[0]
    x2 = x[:, 0, :].astype(jnp.float32)                        # (B, L)

    # conv1 patches (tiny: 84x7 per sample) — the only XLA-side gather.
    idx = jnp.arange(T1)[:, None] * S1 + jnp.arange(K1)[None, :]
    xs = x2[:, idx]                                            # (B, T1, K1)

    # One-time weight layout prep (outside the kernel).
    w1 = jnp.transpose(params["w1"][:, 0, :], (1, 0))          # (K1, C1) f32
    b1 = params["b1"].reshape(1, C1)
    w2 = jnp.transpose(params["w2"], (2, 1, 0)).reshape(K2 * C1, C1)
    w2 = w2.astype(jnp.bfloat16)                               # [(k,ci), co]
    b2 = params["b2"].reshape(1, C1)
    # fc1 weight rows permuted from PyTorch's flatten order (c*TP2 + l) to the
    # kernel's lane-concat order (l*C1 + c) so the in-kernel flatten is a
    # cheap lane concatenation instead of a transpose.
    wf1 = params["wf1"].reshape(C1, TP2, H1).transpose(1, 0, 2).reshape(FLAT, H1)
    wf1 = wf1.astype(jnp.bfloat16)
    bf1 = params["bf1"].reshape(1, H1)
    wf2 = params["wf2"].astype(jnp.bfloat16)                   # (H1, H2)
    bf2 = params["bf2"].reshape(1, H2)
    wf3 = params["wf3"]                                        # (H2, NOUT) f32
    bf3 = params["bf3"].reshape(1, NOUT)

    def full2(shape):
        return pl.BlockSpec(shape, lambda b: (0, 0))

    out3 = pl.pallas_call(
        _cnn1d_fused_kernel,
        grid=(B,),
        in_specs=[
            pl.BlockSpec((1, T1, K1), lambda b: (b, 0, 0)),    # conv1 patches
            full2((K1, C1)), full2((1, C1)),                   # w1, b1
            full2((K2 * C1, C1)), full2((1, C1)),              # w2, b2
            full2((FLAT, H1)), full2((1, H1)),                 # wf1, bf1
            full2((H1, H2)), full2((1, H2)),                   # wf2, bf2
            full2((H2, NOUT)), full2((1, NOUT)),               # wf3, bf3
        ],
        out_specs=pl.BlockSpec((1, 1, NOUT), lambda b: (b, 0, 0)),
        out_shape=jax.ShapeDtypeStruct((B, 1, NOUT), jnp.float32),
        scratch_shapes=[
            pltpu.VMEM((T1, C1), jnp.float32),                 # conv1 output
            pltpu.VMEM((T2, K2 * C1), jnp.float32),            # conv2 patch matrix
        ],
        compiler_params=pltpu.CompilerParams(
            dimension_semantics=("parallel",)),
    )(xs, w1, b1, w2, b2, wf1, bf1, wf2, bf2, wf3, bf3)
    return out3[:, 0, :]                                       # (B, NOUT)


if __name__ == "__main__":
    key = jax.random.PRNGKey(0)
    pkey, xkey = jax.random.split(key)
    params = init_params(pkey)
    # Input length 256 is required so that the flattened feature size is 256
    # (matching nn.Linear(256, 512)): 256 -> conv1 84 -> pool1 26 -> conv2 8 -> pool2 2.
    x = jax.random.normal(xkey, (2, 1, L_IN), jnp.float32)     # (B, C=1, L=256) NCL
    out = jax.jit(cnn1d_forward)(params, x)
    jax.block_until_ready(out)
    assert out.shape == (2, NOUT) and out.dtype == jnp.float32
    print("KERNEL_OK")
</pallas_src>

<mosaic_0001>
module attributes {stable_mosaic.version = 11 : i64} {
  func.func @_cnn1d_fused_kernel(%arg0: i32, %arg1: memref<1x84x7xf32, #tpu.memory_space<vmem>>, %arg2: memref<7x128xf32, #tpu.memory_space<vmem>>, %arg3: memref<1x128xf32, #tpu.memory_space<vmem>>, %arg4: memref<384x128xbf16, #tpu.memory_space<vmem>>, %arg5: memref<1x128xf32, #tpu.memory_space<vmem>>, %arg6: memref<256x512xbf16, #tpu.memory_space<vmem>>, %arg7: memref<1x512xf32, #tpu.memory_space<vmem>>, %arg8: memref<512x11xbf16, #tpu.memory_space<vmem>>, %arg9: memref<1x11xf32, #tpu.memory_space<vmem>>, %arg10: memref<11x2xf32, #tpu.memory_space<vmem>>, %arg11: memref<1x2xf32, #tpu.memory_space<vmem>>, %arg12: memref<1x1x2xf32, #tpu.memory_space<vmem>>, %arg13: memref<84x128xf32, #tpu.memory_space<vmem>>, %arg14: memref<8x384xf32, #tpu.memory_space<vmem>>) attributes {dimension_semantics = [#tpu.dimension_semantics<parallel>], iteration_bounds = array<i64: 2>, scalar_prefetch = 0 : i64, scratch_operands = 2 : i64, tpu.core_type = #tpu.core_type<tc>, window_params = [{transform_indices = @transform_0, window_bounds = array<i64: 1, 84, 7>}, {pipeline_mode = #tpu.pipeline_mode<synchronous>, transform_indices = @transform_1, window_bounds = array<i64: 7, 128>}, {pipeline_mode = #tpu.pipeline_mode<synchronous>, transform_indices = @transform_2, window_bounds = array<i64: 1, 128>}, {pipeline_mode = #tpu.pipeline_mode<synchronous>, transform_indices = @transform_3, window_bounds = array<i64: 384, 128>}, {pipeline_mode = #tpu.pipeline_mode<synchronous>, transform_indices = @transform_4, window_bounds = array<i64: 1, 128>}, {pipeline_mode = #tpu.pipeline_mode<synchronous>, transform_indices = @transform_5, window_bounds = array<i64: 256, 512>}, {pipeline_mode = #tpu.pipeline_mode<synchronous>, transform_indices = @transform_6, window_bounds = array<i64: 1, 512>}, {pipeline_mode = #tpu.pipeline_mode<synchronous>, transform_indices = @transform_7, window_bounds = array<i64: 512, 11>}, {pipeline_mode = #tpu.pipeline_mode<synchronous>, transform_indices = @transform_8, window_bounds = array<i64: 1, 11>}, {pipeline_mode = #tpu.pipeline_mode<synchronous>, transform_indices = @transform_9, window_bounds = array<i64: 11, 2>}, {pipeline_mode = #tpu.pipeline_mode<synchronous>, transform_indices = @transform_10, window_bounds = array<i64: 1, 2>}, {transform_indices = @transform_11, window_bounds = array<i64: 1, 1, 2>}]} {
    %c0 = arith.constant 0 : index
    %c0_0 = arith.constant 0 : index
    %c0_1 = arith.constant 0 : index
    %0 = vector.load %arg1[%c0, %c0_0, %c0_1] : memref<1x84x7xf32, #tpu.memory_space<vmem>>, vector<1x84x7xf32>
    %1 = vector.shape_cast %0 : vector<1x84x7xf32> to vector<84x7xf32>
    %2 = vector.extract_strided_slice %1 {offsets = [0, 0], sizes = [84, 1], strides = [1, 1]} : vector<84x7xf32> to vector<84x1xf32>
    %c0_2 = arith.constant 0 : index
    %c0_3 = arith.constant 0 : index
    %3 = vector.load %arg2[%c0_2, %c0_3] : memref<7x128xf32, #tpu.memory_space<vmem>>, vector<1x128xf32>
    %4 = vector.broadcast %2 : vector<84x1xf32> to vector<84x128xf32>
    %5 = vector.broadcast %3 : vector<1x128xf32> to vector<84x128xf32>
    %6 = arith.mulf %4, %5 : vector<84x128xf32>
    %7 = vector.extract_strided_slice %1 {offsets = [0, 1], sizes = [84, 1], strides = [1, 1]} : vector<84x7xf32> to vector<84x1xf32>
    %c1 = arith.constant 1 : index
    %c0_4 = arith.constant 0 : index
    %8 = vector.load %arg2[%c1, %c0_4] : memref<7x128xf32, #tpu.memory_space<vmem>>, vector<1x128xf32>
    %9 = vector.broadcast %7 : vector<84x1xf32> to vector<84x128xf32>
    %10 = vector.broadcast %8 : vector<1x128xf32> to vector<84x128xf32>
    %11 = arith.mulf %9, %10 : vector<84x128xf32>
    %12 = arith.addf %6, %11 : vector<84x128xf32>
    %13 = vector.extract_strided_slice %1 {offsets = [0, 2], sizes = [84, 1], strides = [1, 1]} : vector<84x7xf32> to vector<84x1xf32>
    %c2 = arith.constant 2 : index
    %c0_5 = arith.constant 0 : index
    %14 = vector.load %arg2[%c2, %c0_5] : memref<7x128xf32, #tpu.memory_space<vmem>>, vector<1x128xf32>
    %15 = vector.broadcast %13 : vector<84x1xf32> to vector<84x128xf32>
    %16 = vector.broadcast %14 : vector<1x128xf32> to vector<84x128xf32>
    %17 = arith.mulf %15, %16 : vector<84x128xf32>
    %18 = arith.addf %12, %17 : vector<84x128xf32>
    %19 = vector.extract_strided_slice %1 {offsets = [0, 3], sizes = [84, 1], strides = [1, 1]} : vector<84x7xf32> to vector<84x1xf32>
    %c3 = arith.constant 3 : index
    %c0_6 = arith.constant 0 : index
    %20 = vector.load %arg2[%c3, %c0_6] : memref<7x128xf32, #tpu.memory_space<vmem>>, vector<1x128xf32>
    %21 = vector.broadcast %19 : vector<84x1xf32> to vector<84x128xf32>
    %22 = vector.broadcast %20 : vector<1x128xf32> to vector<84x128xf32>
    %23 = arith.mulf %21, %22 : vector<84x128xf32>
    %24 = arith.addf %18, %23 : vector<84x128xf32>
    %25 = vector.extract_strided_slice %1 {offsets = [0, 4], sizes = [84, 1], strides = [1, 1]} : vector<84x7xf32> to vector<84x1xf32>
    %c4 = arith.constant 4 : index
    %c0_7 = arith.constant 0 : index
    %26 = vector.load %arg2[%c4, %c0_7] : memref<7x128xf32, #tpu.memory_space<vmem>>, vector<1x128xf32>
    %27 = vector.broadcast %25 : vector<84x1xf32> to vector<84x128xf32>
    %28 = vector.broadcast %26 : vector<1x128xf32> to vector<84x128xf32>
    %29 = arith.mulf %27, %28 : vector<84x128xf32>
    %30 = arith.addf %24, %29 : vector<84x128xf32>
    %31 = vector.extract_strided_slice %1 {offsets = [0, 5], sizes = [84, 1], strides = [1, 1]} : vector<84x7xf32> to vector<84x1xf32>
    %c5 = arith.constant 5 : index
    %c0_8 = arith.constant 0 : index
    %32 = vector.load %arg2[%c5, %c0_8] : memref<7x128xf32, #tpu.memory_space<vmem>>, vector<1x128xf32>
    %33 = vector.broadcast %31 : vector<84x1xf32> to vector<84x128xf32>
    %34 = vector.broadcast %32 : vector<1x128xf32> to vector<84x128xf32>
    %35 = arith.mulf %33, %34 : vector<84x128xf32>
    %36 = arith.addf %30, %35 : vector<84x128xf32>
    %37 = vector.extract_strided_slice %1 {offsets = [0, 6], sizes = [84, 1], strides = [1, 1]} : vector<84x7xf32> to vector<84x1xf32>
    %c6 = arith.constant 6 : index
    %c0_9 = arith.constant 0 : index
    %38 = vector.load %arg2[%c6, %c0_9] : memref<7x128xf32, #tpu.memory_space<vmem>>, vector<1x128xf32>
    %39 = vector.broadcast %37 : vector<84x1xf32> to vector<84x128xf32>
    %40 = vector.broadcast %38 : vector<1x128xf32> to vector<84x128xf32>
    %41 = arith.mulf %39, %40 : vector<84x128xf32>
    %42 = arith.addf %36, %41 : vector<84x128xf32>
    %c0_10 = arith.constant 0 : index
    %c0_11 = arith.constant 0 : index
    %43 = vector.load %arg3[%c0_10, %c0_11] : memref<1x128xf32, #tpu.memory_space<vmem>>, vector<1x128xf32>
    %44 = vector.broadcast %43 : vector<1x128xf32> to vector<84x128xf32>
    %45 = arith.addf %42, %44 : vector<84x128xf32>
    %cst = arith.constant 0.000000e+00 : f32
    %46 = vector.broadcast %cst : f32 to vector<84x128xf32>
    %47 = arith.maximumf %45, %46 : vector<84x128xf32>
    %c0_12 = arith.constant 0 : index
    %c0_13 = arith.constant 0 : index
    %48 = vector.load %arg13[%c0_12, %c0_13] : memref<84x128xf32, #tpu.memory_space<vmem>>, vector<84x128xf32>
    tpu.vector_store %arg13[%c0_12, %c0_13], %47 {strides = array<i32>} : memref<84x128xf32, #tpu.memory_space<vmem>>, vector<84x128xf32>,
    %c0_14 = arith.constant 0 : index
    %c0_15 = arith.constant 0 : index
    %49 = vector.load %arg13[%c0_14, %c0_15] : memref<84x128xf32, #tpu.memory_space<vmem>>, vector<1x128xf32>
    %c1_16 = arith.constant 1 : index
    %c0_17 = arith.constant 0 : index
    %50 = vector.load %arg13[%c1_16, %c0_17] : memref<84x128xf32, #tpu.memory_space<vmem>>, vector<1x128xf32>
    %51 = arith.maximumf %49, %50 : vector<1x128xf32>
    %c2_18 = arith.constant 2 : index
    %c0_19 = arith.constant 0 : index
    %52 = vector.load %arg13[%c2_18, %c0_19] : memref<84x128xf32, #tpu.memory_space<vmem>>, vector<1x128xf32>
    %53 = arith.maximumf %51, %52 : vector<1x128xf32>
    %c3_20 = arith.constant 3 : index
    %c0_21 = arith.constant 0 : index
    %54 = vector.load %arg13[%c3_20, %c0_21] : memref<84x128xf32, #tpu.memory_space<vmem>>, vector<1x128xf32>
    %55 = arith.maximumf %53, %54 : vector<1x128xf32>
    %c4_22 = arith.constant 4 : index
    %c0_23 = arith.constant 0 : index
    %56 = vector.load %arg13[%c4_22, %c0_23] : memref<84x128xf32, #tpu.memory_space<vmem>>, vector<1x128xf32>
    %57 = arith.maximumf %55, %56 : vector<1x128xf32>
    %c5_24 = arith.constant 5 : index
    %c0_25 = arith.constant 0 : index
    %58 = vector.load %arg13[%c5_24, %c0_25] : memref<84x128xf32, #tpu.memory_space<vmem>>, vector<1x128xf32>
    %59 = arith.maximumf %57, %58 : vector<1x128xf32>
    %c6_26 = arith.constant 6 : index
    %c0_27 = arith.constant 0 : index
    %60 = vector.load %arg13[%c6_26, %c0_27] : memref<84x128xf32, #tpu.memory_space<vmem>>, vector<1x128xf32>
    %61 = arith.maximumf %59, %60 : vector<1x128xf32>
    %c0_28 = arith.constant 0 : index
    %c0_29 = arith.constant 0 : index
    %62 = vector.load %arg14[%c0_28, %c0_29] : memref<8x384xf32, #tpu.memory_space<vmem>>, vector<1x128xf32>
    tpu.vector_store %arg14[%c0_28, %c0_29], %61 {strides = array<i32>} : memref<8x384xf32, #tpu.memory_space<vmem>>, vector<1x128xf32>,
    %c3_30 = arith.constant 3 : index
    %c0_31 = arith.constant 0 : index
    %63 = vector.load %arg13[%c3_30, %c0_31] : memref<84x128xf32, #tpu.memory_space<vmem>>, vector<1x128xf32>
    %c4_32 = arith.constant 4 : index
    %c0_33 = arith.constant 0 : index
    %64 = vector.load %arg13[%c4_32, %c0_33] : memref<84x128xf32, #tpu.memory_space<vmem>>, vector<1x128xf32>
    %65 = arith.maximumf %63, %64 : vector<1x128xf32>
    %c5_34 = arith.constant 5 : index
    %c0_35 = arith.constant 0 : index
    %66 = vector.load %arg13[%c5_34, %c0_35] : memref<84x128xf32, #tpu.memory_space<vmem>>, vector<1x128xf32>
    %67 = arith.maximumf %65, %66 : vector<1x128xf32>
    %c6_36 = arith.constant 6 : index
    %c0_37 = arith.constant 0 : index
    %68 = vector.load %arg13[%c6_36, %c0_37] : memref<84x128xf32, #tpu.memory_space<vmem>>, vector<1x128xf32>
    %69 = arith.maximumf %67, %68 : vector<1x128xf32>
    %c7 = arith.constant 7 : index
    %c0_38 = arith.constant 0 : index
    %70 = vector.load %arg13[%c7, %c0_38] : memref<84x128xf32, #tpu.memory_space<vmem>>, vector<1x128xf32>
    %71 = arith.maximumf %69, %70 : vector<1x128xf32>
    %c8 = arith.constant 8 : index
    %c0_39 = arith.constant 0 : index
    %72 = vector.load %arg13[%c8, %c0_39] : memref<84x128xf32, #tpu.memory_space<vmem>>, vector<1x128xf32>
    %73 = arith.maximumf %71, %72 : vector<1x128xf32>
    %c9 = arith.constant 9 : index
    %c0_40 = arith.constant 0 : index
    %74 = vector.load %arg13[%c9, %c0_40] : memref<84x128xf32, #tpu.memory_space<vmem>>, vector<1x128xf32>
    %75 = arith.maximumf %73, %74 : vector<1x128xf32>
    %c0_41 = arith.constant 0 : index
    %c128 = arith.constant 128 : index
    %76 = vector.load %arg14[%c0_41, %c128] : memref<8x384xf32, #tpu.memory_space<vmem>>, vector<1x128xf32>
    tpu.vector_store %arg14[%c0_41, %c128], %75 {strides = array<i32>} : memref<8x384xf32, #tpu.memory_space<vmem>>, vector<1x128xf32>,
    %c6_42 = arith.constant 6 : index
    %c0_43 = arith.constant 0 : index
    %77 = vector.load %arg13[%c6_42, %c0_43] : memref<84x128xf32, #tpu.memory_space<vmem>>, vector<1x128xf32>
    %c7_44 = arith.constant 7 : index
    %c0_45 = arith.constant 0 : index
    %78 = vector.load %arg13[%c7_44, %c0_45] : memref<84x128xf32, #tpu.memory_space<vmem>>, vector<1x128xf32>
    %79 = arith.maximumf %77, %78 : vector<1x128xf32>
    %c8_46 = arith.constant 8 : index
    %c0_47 = arith.constant 0 : index
    %80 = vector.load %arg13[%c8_46, %c0_47] : memref<84x128xf32, #tpu.memory_space<vmem>>, vector<1x128xf32>
    %81 = arith.maximumf %79, %80 : vector<1x128xf32>
    %c9_48 = arith.constant 9 : index
    %c0_49 = arith.constant 0 : index
    %82 = vector.load %arg13[%c9_48, %c0_49] : memref<84x128xf32, #tpu.memory_space<vmem>>, vector<1x128xf32>
    %83 = arith.maximumf %81, %82 : vector<1x128xf32>
    %c10 = arith.constant 10 : index
    %c0_50 = arith.constant 0 : index
    %84 = vector.load %arg13[%c10, %c0_50] : memref<84x128xf32, #tpu.memory_space<vmem>>, vector<1x128xf32>
    %85 = arith.maximumf %83, %84 : vector<1x128xf32>
    %c11 = arith.constant 11 : index
    %c0_51 = arith.constant 0 : index
    %86 = vector.load %arg13[%c11, %c0_51] : memref<84x128xf32, #tpu.memory_space<vmem>>, vector<1x128xf32>
    %87 = arith.maximumf %85, %86 : vector<1x128xf32>
    %c12 = arith.constant 12 : index
    %c0_52 = arith.constant 0 : index
    %88 = vector.load %arg13[%c12, %c0_52] : memref<84x128xf32, #tpu.memory_space<vmem>>, vector<1x128xf32>
    %89 = arith.maximumf %87, %88 : vector<1x128xf32>
    %c0_53 = arith.constant 0 : index
    %c256 = arith.constant 256 : index
    %90 = vector.load %arg14[%c0_53, %c256] : memref<8x384xf32, #tpu.memory_space<vmem>>, vector<1x128xf32>
    tpu.vector_store %arg14[%c0_53, %c256], %89 {strides = array<i32>} : memref<8x384xf32, #tpu.memory_space<vmem>>, vector<1x128xf32>,
    %c9_54 = arith.constant 9 : index
    %c0_55 = arith.constant 0 : index
    %91 = vector.load %arg13[%c9_54, %c0_55] : memref<84x128xf32, #tpu.memory_space<vmem>>, vector<1x128xf32>
    %c10_56 = arith.constant 10 : index
    %c0_57 = arith.constant 0 : index
    %92 = vector.load %arg13[%c10_56, %c0_57] : memref<84x128xf32, #tpu.memory_space<vmem>>, vector<1x128xf32>
    %93 = arith.maximumf %91, %92 : vector<1x128xf32>
    %c11_58 = arith.constant 11 : index
    %c0_59 = arith.constant 0 : index
    %94 = vector.load %arg13[%c11_58, %c0_59] : memref<84x128xf32, #tpu.memory_space<vmem>>, vector<1x128xf32>
    %95 = arith.maximumf %93, %94 : vector<1x128xf32>
    %c12_60 = arith.constant 12 : index
    %c0_61 = arith.constant 0 : index
    %96 = vector.load %arg13[%c12_60, %c0_61] : memref<84x128xf32, #tpu.memory_space<vmem>>, vector<1x128xf32>
    %97 = arith.maximumf %95, %96 : vector<1x128xf32>
    %c13 = arith.constant 13 : index
    %c0_62 = arith.constant 0 : index
    %98 = vector.load %arg13[%c13, %c0_62] : memref<84x128xf32, #tpu.memory_space<vmem>>, vector<1x128xf32>
    %99 = arith.maximumf %97, %98 : vector<1x128xf32>
    %c14 = arith.constant 14 : index
    %c0_63 = arith.constant 0 : index
    %100 = vector.load %arg13[%c14, %c0_63] : memref<84x128xf32, #tpu.memory_space<vmem>>, vector<1x128xf32>
    %101 = arith.maximumf %99, %100 : vector<1x128xf32>
    %c15 = arith.constant 15 : index
    %c0_64 = arith.constant 0 : index
    %102 = vector.load %arg13[%c15, %c0_64] : memref<84x128xf32, #tpu.memory_space<vmem>>, vector<1x128xf32>
    %103 = arith.maximumf %101, %102 : vector<1x128xf32>
    %c1_65 = arith.constant 1 : index
    %c0_66 = arith.constant 0 : index
    %104 = vector.load %arg14[%c1_65, %c0_66] : memref<8x384xf32, #tpu.memory_space<vmem>>, vector<1x128xf32>
    tpu.vector_store %arg14[%c1_65, %c0_66], %103 {strides = array<i32>} : memref<8x384xf32, #tpu.memory_space<vmem>>, vector<1x128xf32>,
    %c12_67 = arith.constant 12 : index
    %c0_68 = arith.constant 0 : index
    %105 = vector.load %arg13[%c12_67, %c0_68] : memref<84x128xf32, #tpu.memory_space<vmem>>, vector<1x128xf32>
    %c13_69 = arith.constant 13 : index
    %c0_70 = arith.constant 0 : index
    %106 = vector.load %arg13[%c13_69, %c0_70] : memref<84x128xf32, #tpu.memory_space<vmem>>, vector<1x128xf32>
    %107 = arith.maximumf %105, %106 : vector<1x128xf32>
    %c14_71 = arith.constant 14 : index
    %c0_72 = arith.constant 0 : index
    %108 = vector.load %arg13[%c14_71, %c0_72] : memref<84x128xf32, #tpu.memory_space<vmem>>, vector<1x128xf32>
    %109 = arith.maximumf %107, %108 : vector<1x128xf32>
    %c15_73 = arith.constant 15 : index
    %c0_74 = arith.constant 0 : index
    %110 = vector.load %arg13[%c15_73, %c0_74] : memref<84x128xf32, #tpu.memory_space<vmem>>, vector<1x128xf32>
    %111 = arith.maximumf %109, %110 : vector<1x128xf32>
    %c16 = arith.constant 16 : index
    %c0_75 = arith.constant 0 : index
    %112 = vector.load %arg13[%c16, %c0_75] : memref<84x128xf32, #tpu.memory_space<vmem>>, vector<1x128xf32>
    %113 = arith.maximumf %111, %112 : vector<1x128xf32>
    %c17 = arith.constant 17 : index
    %c0_76 = arith.constant 0 : index
    %114 = vector.load %arg13[%c17, %c0_76] : memref<84x128xf32, #tpu.memory_space<vmem>>, vector<1x128xf32>
    %115 = arith.maximumf %113, %114 : vector<1x128xf32>
    %c18 = arith.constant 18 : index
    %c0_77 = arith.constant 0 : index
    %116 = vector.load %arg13[%c18, %c0_77] : memref<84x128xf32, #tpu.memory_space<vmem>>, vector<1x128xf32>
    %117 = arith.maximumf %115, %116 : vector<1x128xf32>
    %c1_78 = arith.constant 1 : index
    %c128_79 = arith.constant 128 : index
    %118 = vector.load %arg14[%c1_78, %c128_79] : memref<8x384xf32, #tpu.memory_space<vmem>>, vector<1x128xf32>
    tpu.vector_store %arg14[%c1_78, %c128_79], %117 {strides = array<i32>} : memref<8x384xf32, #tpu.memory_space<vmem>>, vector<1x128xf32>,
    %c15_80 = arith.constant 15 : index
    %c0_81 = arith.constant 0 : index
    %119 = vector.load %arg13[%c15_80, %c0_81] : memref<84x128xf32, #tpu.memory_space<vmem>>, vector<1x128xf32>
    %c16_82 = arith.constant 16 : index
    %c0_83 = arith.constant 0 : index
    %120 = vector.load %arg13[%c16_82, %c0_83] : memref<84x128xf32, #tpu.memory_space<vmem>>, vector<1x128xf32>
    %121 = arith.maximumf %119, %120 : vector<1x128xf32>
    %c17_84 = arith.constant 17 : index
    %c0_85 = arith.constant 0 : index
    %122 = vector.load %arg13[%c17_84, %c0_85] : memref<84x128xf32, #tpu.memory_space<vmem>>, vector<1x128xf32>
    %123 = arith.maximumf %121, %122 : vector<1x128xf32>
    %c18_86 = arith.constant 18 : index
    %c0_87 = arith.constant 0 : index
    %124 = vector.load %arg13[%c18_86, %c0_87] : memref<84x128xf32, #tpu.memory_space<vmem>>, vector<1x128xf32>
    %125 = arith.maximumf %123, %124 : vector<1x128xf32>
    %c19 = arith.constant 19 : index
    %c0_88 = arith.constant 0 : index
    %126 = vector.load %arg13[%c19, %c0_88] : memref<84x128xf32, #tpu.memory_space<vmem>>, vector<1x128xf32>
    %127 = arith.maximumf %125, %126 : vector<1x128xf32>
    %c20 = arith.constant 20 : index
    %c0_89 = arith.constant 0 : index
    %128 = vector.load %arg13[%c20, %c0_89] : memref<84x128xf32, #tpu.memory_space<vmem>>, vector<1x128xf32>
    %129 = arith.maximumf %127, %128 : vector<1x128xf32>
    %c21 = arith.constant 21 : index
    %c0_90 = arith.constant 0 : index
    %130 = vector.load %arg13[%c21, %c0_90] : memref<84x128xf32, #tpu.memory_space<vmem>>, vector<1x128xf32>
    %131 = arith.maximumf %129, %130 : vector<1x128xf32>
    %c1_91 = arith.constant 1 : index
    %c256_92 = arith.constant 256 : index
    %132 = vector.load %arg14[%c1_91, %c256_92] : memref<8x384xf32, #tpu.memory_space<vmem>>, vector<1x128xf32>
    tpu.vector_store %arg14[%c1_91, %c256_92], %131 {strides = array<i32>} : memref<8x384xf32, #tpu.memory_space<vmem>>, vector<1x128xf32>,
    %c18_93 = arith.constant 18 : index
    %c0_94 = arith.constant 0 : index
    %133 = vector.load %arg13[%c18_93, %c0_94] : memref<84x128xf32, #tpu.memory_space<vmem>>, vector<1x128xf32>
    %c19_95 = arith.constant 19 : index
    %c0_96 = arith.constant 0 : index
    %134 = vector.load %arg13[%c19_95, %c0_96] : memref<84x128xf32, #tpu.memory_space<vmem>>, vector<1x128xf32>
    %135 = arith.maximumf %133, %134 : vector<1x128xf32>
    %c20_97 = arith.constant 20 : index
    %c0_98 = arith.constant 0 : index
    %136 = vector.load %arg13[%c20_97, %c0_98] : memref<84x128xf32, #tpu.memory_space<vmem>>, vector<1x128xf32>
    %137 = arith.maximumf %135, %136 : vector<1x128xf32>
    %c21_99 = arith.constant 21 : index
    %c0_100 = arith.constant 0 : index
    %138 = vector.load %arg13[%c21_99, %c0_100] : memref<84x128xf32, #tpu.memory_space<vmem>>, vector<1x128xf32>
    %139 = arith.maximumf %137, %138 : vector<1x128xf32>
    %c22 = arith.constant 22 : index
    %c0_101 = arith.constant 0 : index
    %140 = vector.load %arg13[%c22, %c0_101] : memref<84x128xf32, #tpu.memory_space<vmem>>, vector<1x128xf32>
    %141 = arith.maximumf %139, %140 : vector<1x128xf32>
    %c23 = arith.constant 23 : index
    %c0_102 = arith.constant 0 : index
    %142 = vector.load %arg13[%c23, %c0_102] : memref<84x128xf32, #tpu.memory_space<vmem>>, vector<1x128xf32>
    %143 = arith.maximumf %141, %142 : vector<1x128xf32>
    %c24 = arith.constant 24 : index
    %c0_103 = arith.constant 0 : index
    %144 = vector.load %arg13[%c24, %c0_103] : memref<84x128xf32, #tpu.memory_space<vmem>>, vector<1x128xf32>
    %145 = arith.maximumf %143, %144 : vector<1x128xf32>
    %c2_104 = arith.constant 2 : index
    %c0_105 = arith.constant 0 : index
    %146 = vector.load %arg14[%c2_104, %c0_105] : memref<8x384xf32, #tpu.memory_space<vmem>>, vector<1x128xf32>
    tpu.vector_store %arg14[%c2_104, %c0_105], %145 {strides = array<i32>} : memref<8x384xf32, #tpu.memory_space<vmem>>, vector<1x128xf32>,
    %c21_106 = arith.constant 21 : index
    %c0_107 = arith.constant 0 : index
    %147 = vector.load %arg13[%c21_106, %c0_107] : memref<84x128xf32, #tpu.memory_space<vmem>>, vector<1x128xf32>
    %c22_108 = arith.constant 22 : index
    %c0_109 = arith.constant 0 : index
    %148 = vector.load %arg13[%c22_108, %c0_109] : memref<84x128xf32, #tpu.memory_space<vmem>>, vector<1x128xf32>
    %149 = arith.maximumf %147, %148 : vector<1x128xf32>
    %c23_110 = arith.constant 23 : index
    %c0_111 = arith.constant 0 : index
    %150 = vector.load %arg13[%c23_110, %c0_111] : memref<84x128xf32, #tpu.memory_space<vmem>>, vector<1x128xf32>
    %151 = arith.maximumf %149, %150 : vector<1x128xf32>
    %c24_112 = arith.constant 24 : index
    %c0_113 = arith.constant 0 : index
    %152 = vector.load %arg13[%c24_112, %c0_113] : memref<84x128xf32, #tpu.memory_space<vmem>>, vector<1x128xf32>
    %153 = arith.maximumf %151, %152 : vector<1x128xf32>
    %c25 = arith.constant 25 : index
    %c0_114 = arith.constant 0 : index
    %154 = vector.load %arg13[%c25, %c0_114] : memref<84x128xf32, #tpu.memory_space<vmem>>, vector<1x128xf32>
    %155 = arith.maximumf %153, %154 : vector<1x128xf32>
    %c26 = arith.constant 26 : index
    %c0_115 = arith.constant 0 : index
    %156 = vector.load %arg13[%c26, %c0_115] : memref<84x128xf32, #tpu.memory_space<vmem>>, vector<1x128xf32>
    %157 = arith.maximumf %155, %156 : vector<1x128xf32>
    %c27 = arith.constant 27 : index
    %c0_116 = arith.constant 0 : index
    %158 = vector.load %arg13[%c27, %c0_116] : memref<84x128xf32, #tpu.memory_space<vmem>>, vector<1x128xf32>
    %159 = arith.maximumf %157, %158 : vector<1x128xf32>
    %c2_117 = arith.constant 2 : index
    %c128_118 = arith.constant 128 : index
    %160 = vector.load %arg14[%c2_117, %c128_118] : memref<8x384xf32, #tpu.memory_space<vmem>>, vector<1x128xf32>
    tpu.vector_store %arg14[%c2_117, %c128_118], %159 {strides = array<i32>} : memref<8x384xf32, #tpu.memory_space<vmem>>, vector<1x128xf32>,
    %c24_119 = arith.constant 24 : index
    %c0_120 = arith.constant 0 : index
    %161 = vector.load %arg13[%c24_119, %c0_120] : memref<84x128xf32, #tpu.memory_space<vmem>>, vector<1x128xf32>
    %c25_121 = arith.constant 25 : index
    %c0_122 = arith.constant 0 : index
    %162 = vector.load %arg13[%c25_121, %c0_122] : memref<84x128xf32, #tpu.memory_space<vmem>>, vector<1x128xf32>
    %163 = arith.maximumf %161, %162 : vector<1x128xf32>
    %c26_123 = arith.constant 26 : index
    %c0_124 = arith.constant 0 : index
    %164 = vector.load %arg13[%c26_123, %c0_124] : memref<84x128xf32, #tpu.memory_space<vmem>>, vector<1x128xf32>
    %165 = arith.maximumf %163, %164 : vector<1x128xf32>
    %c27_125 = arith.constant 27 : index
    %c0_126 = arith.constant 0 : index
    %166 = vector.load %arg13[%c27_125, %c0_126] : memref<84x128xf32, #tpu.memory_space<vmem>>, vector<1x128xf32>
    %167 = arith.maximumf %165, %166 : vector<1x128xf32>
    %c28 = arith.constant 28 : index
    %c0_127 = arith.constant 0 : index
    %168 = vector.load %arg13[%c28, %c0_127] : memref<84x128xf32, #tpu.memory_space<vmem>>, vector<1x128xf32>
    %169 = arith.maximumf %167, %168 : vector<1x128xf32>
    %c29 = arith.constant 29 : index
    %c0_128 = arith.constant 0 : index
    %170 = vector.load %arg13[%c29, %c0_128] : memref<84x128xf32, #tpu.memory_space<vmem>>, vector<1x128xf32>
    %171 = arith.maximumf %169, %170 : vector<1x128xf32>
    %c30 = arith.constant 30 : index
    %c0_129 = arith.constant 0 : index
    %172 = vector.load %arg13[%c30, %c0_129] : memref<84x128xf32, #tpu.memory_space<vmem>>, vector<1x128xf32>
    %173 = arith.maximumf %171, %172 : vector<1x128xf32>
    %c2_130 = arith.constant 2 : index
    %c256_131 = arith.constant 256 : index
    %174 = vector.load %arg14[%c2_130, %c256_131] : memref<8x384xf32, #tpu.memory_space<vmem>>, vector<1x128xf32>
    tpu.vector_store %arg14[%c2_130, %c256_131], %173 {strides = array<i32>} : memref<8x384xf32, #tpu.memory_space<vmem>>, vector<1x128xf32>,
    %c27_132 = arith.constant 27 : index
    %c0_133 = arith.constant 0 : index
    %175 = vector.load %arg13[%c27_132, %c0_133] : memref<84x128xf32, #tpu.memory_space<vmem>>, vector<1x128xf32>
    %c28_134 = arith.constant 28 : index
    %c0_135 = arith.constant 0 : index
    %176 = vector.load %arg13[%c28_134, %c0_135] : memref<84x128xf32, #tpu.memory_space<vmem>>, vector<1x128xf32>
    %177 = arith.maximumf %175, %176 : vector<1x128xf32>
    %c29_136 = arith.constant 29 : index
    %c0_137 = arith.constant 0 : index
    %178 = vector.load %arg13[%c29_136, %c0_137] : memref<84x128xf32, #tpu.memory_space<vmem>>, vector<1x128xf32>
    %179 = arith.maximumf %177, %178 : vector<1x128xf32>
    %c30_138 = arith.constant 30 : index
    %c0_139 = arith.constant 0 : index
    %180 = vector.load %arg13[%c30_138, %c0_139] : memref<84x128xf32, #tpu.memory_space<vmem>>, vector<1x128xf32>
    %181 = arith.maximumf %179, %180 : vector<1x128xf32>
    %c31 = arith.constant 31 : index
    %c0_140 = arith.constant 0 : index
    %182 = vector.load %arg13[%c31, %c0_140] : memref<84x128xf32, #tpu.memory_space<vmem>>, vector<1x128xf32>
    %183 = arith.maximumf %181, %182 : vector<1x128xf32>
    %c32 = arith.constant 32 : index
    %c0_141 = arith.constant 0 : index
    %184 = vector.load %arg13[%c32, %c0_141] : memref<84x128xf32, #tpu.memory_space<vmem>>, vector<1x128xf32>
    %185 = arith.maximumf %183, %184 : vector<1x128xf32>
    %c33 = arith.constant 33 : index
    %c0_142 = arith.constant 0 : index
    %186 = vector.load %arg13[%c33, %c0_142] : memref<84x128xf32, #tpu.memory_space<vmem>>, vector<1x128xf32>
    %187 = arith.maximumf %185, %186 : vector<1x128xf32>
    %c3_143 = arith.constant 3 : index
    %c0_144 = arith.constant 0 : index
    %188 = vector.load %arg14[%c3_143, %c0_144] : memref<8x384xf32, #tpu.memory_space<vmem>>, vector<1x128xf32>
    tpu.vector_store %arg14[%c3_143, %c0_144], %187 {strides = array<i32>} : memref<8x384xf32, #tpu.memory_space<vmem>>, vector<1x128xf32>,
    %c30_145 = arith.constant 30 : index
    %c0_146 = arith.constant 0 : index
    %189 = vector.load %arg13[%c30_145, %c0_146] : memref<84x128xf32, #tpu.memory_space<vmem>>, vector<1x128xf32>
    %c31_147 = arith.constant 31 : index
    %c0_148 = arith.constant 0 : index
    %190 = vector.load %arg13[%c31_147, %c0_148] : memref<84x128xf32, #tpu.memory_space<vmem>>, vector<1x128xf32>
    %191 = arith.maximumf %189, %190 : vector<1x128xf32>
    %c32_149 = arith.constant 32 : index
    %c0_150 = arith.constant 0 : index
    %192 = vector.load %arg13[%c32_149, %c0_150] : memref<84x128xf32, #tpu.memory_space<vmem>>, vector<1x128xf32>
    %193 = arith.maximumf %191, %192 : vector<1x128xf32>
    %c33_151 = arith.constant 33 : index
    %c0_152 = arith.constant 0 : index
    %194 = vector.load %arg13[%c33_151, %c0_152] : memref<84x128xf32, #tpu.memory_space<vmem>>, vector<1x128xf32>
    %195 = arith.maximumf %193, %194 : vector<1x128xf32>
    %c34 = arith.constant 34 : index
    %c0_153 = arith.constant 0 : index
    %196 = vector.load %arg13[%c34, %c0_153] : memref<84x128xf32, #tpu.memory_space<vmem>>, vector<1x128xf32>
    %197 = arith.maximumf %195, %196 : vector<1x128xf32>
    %c35 = arith.constant 35 : index
    %c0_154 = arith.constant 0 : index
    %198 = vector.load %arg13[%c35, %c0_154] : memref<84x128xf32, #tpu.memory_space<vmem>>, vector<1x128xf32>
    %199 = arith.maximumf %197, %198 : vector<1x128xf32>
    %c36 = arith.constant 36 : index
    %c0_155 = arith.constant 0 : index
    %200 = vector.load %arg13[%c36, %c0_155] : memref<84x128xf32, #tpu.memory_space<vmem>>, vector<1x128xf32>
    %201 = arith.maximumf %199, %200 : vector<1x128xf32>
    %c3_156 = arith.constant 3 : index
    %c128_157 = arith.constant 128 : index
    %202 = vector.load %arg14[%c3_156, %c128_157] : memref<8x384xf32, #tpu.memory_space<vmem>>, vector<1x128xf32>
    tpu.vector_store %arg14[%c3_156, %c128_157], %201 {strides = array<i32>} : memref<8x384xf32, #tpu.memory_space<vmem>>, vector<1x128xf32>,
    %c33_158 = arith.constant 33 : index
    %c0_159 = arith.constant 0 : index
    %203 = vector.load %arg13[%c33_158, %c0_159] : memref<84x128xf32, #tpu.memory_space<vmem>>, vector<1x128xf32>
    %c34_160 = arith.constant 34 : index
    %c0_161 = arith.constant 0 : index
    %204 = vector.load %arg13[%c34_160, %c0_161] : memref<84x128xf32, #tpu.memory_space<vmem>>, vector<1x128xf32>
    %205 = arith.maximumf %203, %204 : vector<1x128xf32>
    %c35_162 = arith.constant 35 : index
    %c0_163 = arith.constant 0 : index
    %206 = vector.load %arg13[%c35_162, %c0_163] : memref<84x128xf32, #tpu.memory_space<vmem>>, vector<1x128xf32>
    %207 = arith.maximumf %205, %206 : vector<1x128xf32>
    %c36_164 = arith.constant 36 : index
    %c0_165 = arith.constant 0 : index
    %208 = vector.load %arg13[%c36_164, %c0_165] : memref<84x128xf32, #tpu.memory_space<vmem>>, vector<1x128xf32>
    %209 = arith.maximumf %207, %208 : vector<1x128xf32>
    %c37 = arith.constant 37 : index
    %c0_166 = arith.constant 0 : index
    %210 = vector.load %arg13[%c37, %c0_166] : memref<84x128xf32, #tpu.memory_space<vmem>>, vector<1x128xf32>
    %211 = arith.maximumf %209, %210 : vector<1x128xf32>
    %c38 = arith.constant 38 : index
    %c0_167 = arith.constant 0 : index
    %212 = vector.load %arg13[%c38, %c0_167] : memref<84x128xf32, #tpu.memory_space<vmem>>, vector<1x128xf32>
    %213 = arith.maximumf %211, %212 : vector<1x128xf32>
    %c39 = arith.constant 39 : index
    %c0_168 = arith.constant 0 : index
    %214 = vector.load %arg13[%c39, %c0_168] : memref<84x128xf32, #tpu.memory_space<vmem>>, vector<1x128xf32>
    %215 = arith.maximumf %213, %214 : vector<1x128xf32>
    %c3_169 = arith.constant 3 : index
    %c256_170 = arith.constant 256 : index
    %216 = vector.load %arg14[%c3_169, %c256_170] : memref<8x384xf32, #tpu.memory_space<vmem>>, vector<1x128xf32>
    tpu.vector_store %arg14[%c3_169, %c256_170], %215 {strides = array<i32>} : memref<8x384xf32, #tpu.memory_space<vmem>>, vector<1x128xf32>,
    %c36_171 = arith.constant 36 : index
    %c0_172 = arith.constant 0 : index
    %217 = vector.load %arg13[%c36_171, %c0_172] : memref<84x128xf32, #tpu.memory_space<vmem>>, vector<1x128xf32>
    %c37_173 = arith.constant 37 : index
    %c0_174 = arith.constant 0 : index
    %218 = vector.load %arg13[%c37_173, %c0_174] : memref<84x128xf32, #tpu.memory_space<vmem>>, vector<1x128xf32>
    %219 = arith.maximumf %217, %218 : vector<1x128xf32>
    %c38_175 = arith.constant 38 : index
    %c0_176 = arith.constant 0 : index
    %220 = vector.load %arg13[%c38_175, %c0_176] : memref<84x128xf32, #tpu.memory_space<vmem>>, vector<1x128xf32>
    %221 = arith.maximumf %219, %220 : vector<1x128xf32>
    %c39_177 = arith.constant 39 : index
    %c0_178 = arith.constant 0 : index
    %222 = vector.load %arg13[%c39_177, %c0_178] : memref<84x128xf32, #tpu.memory_space<vmem>>, vector<1x128xf32>
    %223 = arith.maximumf %221, %222 : vector<1x128xf32>
    %c40 = arith.constant 40 : index
    %c0_179 = arith.constant 0 : index
    %224 = vector.load %arg13[%c40, %c0_179] : memref<84x128xf32, #tpu.memory_space<vmem>>, vector<1x128xf32>
    %225 = arith.maximumf %223, %224 : vector<1x128xf32>
    %c41 = arith.constant 41 : index
    %c0_180 = arith.constant 0 : index
    %226 = vector.load %arg13[%c41, %c0_180] : memref<84x128xf32, #tpu.memory_space<vmem>>, vector<1x128xf32>
    %227 = arith.maximumf %225, %226 : vector<1x128xf32>
    %c42 = arith.constant 42 : index
    %c0_181 = arith.constant 0 : index
    %228 = vector.load %arg13[%c42, %c0_181] : memref<84x128xf32, #tpu.memory_space<vmem>>, vector<1x128xf32>
    %229 = arith.maximumf %227, %228 : vector<1x128xf32>
    %c4_182 = arith.constant 4 : index
    %c0_183 = arith.constant 0 : index
    %230 = vector.load %arg14[%c4_182, %c0_183] : memref<8x384xf32, #tpu.memory_space<vmem>>, vector<1x128xf32>
    tpu.vector_store %arg14[%c4_182, %c0_183], %229 {strides = array<i32>} : memref<8x384xf32, #tpu.memory_space<vmem>>, vector<1x128xf32>,
    %c39_184 = arith.constant 39 : index
    %c0_185 = arith.constant 0 : index
    %231 = vector.load %arg13[%c39_184, %c0_185] : memref<84x128xf32, #tpu.memory_space<vmem>>, vector<1x128xf32>
    %c40_186 = arith.constant 40 : index
    %c0_187 = arith.constant 0 : index
    %232 = vector.load %arg13[%c40_186, %c0_187] : memref<84x128xf32, #tpu.memory_space<vmem>>, vector<1x128xf32>
    %233 = arith.maximumf %231, %232 : vector<1x128xf32>
    %c41_188 = arith.constant 41 : index
    %c0_189 = arith.constant 0 : index
    %234 = vector.load %arg13[%c41_188, %c0_189] : memref<84x128xf32, #tpu.memory_space<vmem>>, vector<1x128xf32>
    %235 = arith.maximumf %233, %234 : vector<1x128xf32>
    %c42_190 = arith.constant 42 : index
    %c0_191 = arith.constant 0 : index
    %236 = vector.load %arg13[%c42_190, %c0_191] : memref<84x128xf32, #tpu.memory_space<vmem>>, vector<1x128xf32>
    %237 = arith.maximumf %235, %236 : vector<1x128xf32>
    %c43 = arith.constant 43 : index
    %c0_192 = arith.constant 0 : index
    %238 = vector.load %arg13[%c43, %c0_192] : memref<84x128xf32, #tpu.memory_space<vmem>>, vector<1x128xf32>
    %239 = arith.maximumf %237, %238 : vector<1x128xf32>
    %c44 = arith.constant 44 : index
    %c0_193 = arith.constant 0 : index
    %240 = vector.load %arg13[%c44, %c0_193] : memref<84x128xf32, #tpu.memory_space<vmem>>, vector<1x128xf32>
    %241 = arith.maximumf %239, %240 : vector<1x128xf32>
    %c45 = arith.constant 45 : index
    %c0_194 = arith.constant 0 : index
    %242 = vector.load %arg13[%c45, %c0_194] : memref<84x128xf32, #tpu.memory_space<vmem>>, vector<1x128xf32>
    %243 = arith.maximumf %241, %242 : vector<1x128xf32>
    %c4_195 = arith.constant 4 : index
    %c128_196 = arith.constant 128 : index
    %244 = vector.load %arg14[%c4_195, %c128_196] : memref<8x384xf32, #tpu.memory_space<vmem>>, vector<1x128xf32>
    tpu.vector_store %arg14[%c4_195, %c128_196], %243 {strides = array<i32>} : memref<8x384xf32, #tpu.memory_space<vmem>>, vector<1x128xf32>,
    %c42_197 = arith.constant 42 : index
    %c0_198 = arith.constant 0 : index
    %245 = vector.load %arg13[%c42_197, %c0_198] : memref<84x128xf32, #tpu.memory_space<vmem>>, vector<1x128xf32>
    %c43_199 = arith.constant 43 : index
    %c0_200 = arith.constant 0 : index
    %246 = vector.load %arg13[%c43_199, %c0_200] : memref<84x128xf32, #tpu.memory_space<vmem>>, vector<1x128xf32>
    %247 = arith.maximumf %245, %246 : vector<1x128xf32>
    %c44_201 = arith.constant 44 : index
    %c0_202 = arith.constant 0 : index
    %248 = vector.load %arg13[%c44_201, %c0_202] : memref<84x128xf32, #tpu.memory_space<vmem>>, vector<1x128xf32>
    %249 = arith.maximumf %247, %248 : vector<1x128xf32>
    %c45_203 = arith.constant 45 : index
    %c0_204 = arith.constant 0 : index
    %250 = vector.load %arg13[%c45_203, %c0_204] : memref<84x128xf32, #tpu.memory_space<vmem>>, vector<1x128xf32>
    %251 = arith.maximumf %249, %250 : vector<1x128xf32>
    %c46 = arith.constant 46 : index
    %c0_205 = arith.constant 0 : index
    %252 = vector.load %arg13[%c46, %c0_205] : memref<84x128xf32, #tpu.memory_space<vmem>>, vector<1x128xf32>
    %253 = arith.maximumf %251, %252 : vector<1x128xf32>
    %c47 = arith.constant 47 : index
    %c0_206 = arith.constant 0 : index
    %254 = vector.load %arg13[%c47, %c0_206] : memref<84x128xf32, #tpu.memory_space<vmem>>, vector<1x128xf32>
    %255 = arith.maximumf %253, %254 : vector<1x128xf32>
    %c48 = arith.constant 48 : index
    %c0_207 = arith.constant 0 : index
    %256 = vector.load %arg13[%c48, %c0_207] : memref<84x128xf32, #tpu.memory_space<vmem>>, vector<1x128xf32>
    %257 = arith.maximumf %255, %256 : vector<1x128xf32>
    %c4_208 = arith.constant 4 : index
    %c256_209 = arith.constant 256 : index
    %258 = vector.load %arg14[%c4_208, %c256_209] : memref<8x384xf32, #tpu.memory_space<vmem>>, vector<1x128xf32>
    tpu.vector_store %arg14[%c4_208, %c256_209], %257 {strides = array<i32>} : memref<8x384xf32, #tpu.memory_space<vmem>>, vector<1x128xf32>,
    %c45_210 = arith.constant 45 : index
    %c0_211 = arith.constant 0 : index
    %259 = vector.load %arg13[%c45_210, %c0_211] : memref<84x128xf32, #tpu.memory_space<vmem>>, vector<1x128xf32>
    %c46_212 = arith.constant 46 : index
    %c0_213 = arith.constant 0 : index
    %260 = vector.load %arg13[%c46_212, %c0_213] : memref<84x128xf32, #tpu.memory_space<vmem>>, vector<1x128xf32>
    %261 = arith.maximumf %259, %260 : vector<1x128xf32>
    %c47_214 = arith.constant 47 : index
    %c0_215 = arith.constant 0 : index
    %262 = vector.load %arg13[%c47_214, %c0_215] : memref<84x128xf32, #tpu.memory_space<vmem>>, vector<1x128xf32>
    %263 = arith.maximumf %261, %262 : vector<1x128xf32>
    %c48_216 = arith.constant 48 : index
    %c0_217 = arith.constant 0 : index
    %264 = vector.load %arg13[%c48_216, %c0_217] : memref<84x128xf32, #tpu.memory_space<vmem>>, vector<1x128xf32>
    %265 = arith.maximumf %263, %264 : vector<1x128xf32>
    %c49 = arith.constant 49 : index
    %c0_218 = arith.constant 0 : index
    %266 = vector.load %arg13[%c49, %c0_218] : memref<84x128xf32, #tpu.memory_space<vmem>>, vector<1x128xf32>
    %267 = arith.maximumf %265, %266 : vector<1x128xf32>
    %c50 = arith.constant 50 : index
    %c0_219 = arith.constant 0 : index
    %268 = vector.load %arg13[%c50, %c0_219] : memref<84x128xf32, #tpu.memory_space<vmem>>, vector<1x128xf32>
    %269 = arith.maximumf %267, %268 : vector<1x128xf32>
    %c51 = arith.constant 51 : index
    %c0_220 = arith.constant 0 : index
    %270 = vector.load %arg13[%c51, %c0_220] : memref<84x128xf32, #tpu.memory_space<vmem>>, vector<1x128xf32>
    %271 = arith.maximumf %269, %270 : vector<1x128xf32>
    %c5_221 = arith.constant 5 : index
    %c0_222 = arith.constant 0 : index
    %272 = vector.load %arg14[%c5_221, %c0_222] : memref<8x384xf32, #tpu.memory_space<vmem>>, vector<1x128xf32>
    tpu.vector_store %arg14[%c5_221, %c0_222], %271 {strides = array<i32>} : memref<8x384xf32, #tpu.memory_space<vmem>>, vector<1x128xf32>,
    %c48_223 = arith.constant 48 : index
    %c0_224 = arith.constant 0 : index
    %273 = vector.load %arg13[%c48_223, %c0_224] : memref<84x128xf32, #tpu.memory_space<vmem>>, vector<1x128xf32>
    %c49_225 = arith.constant 49 : index
    %c0_226 = arith.constant 0 : index
    %274 = vector.load %arg13[%c49_225, %c0_226] : memref<84x128xf32, #tpu.memory_space<vmem>>, vector<1x128xf32>
    %275 = arith.maximumf %273, %274 : vector<1x128xf32>
    %c50_227 = arith.constant 50 : index
    %c0_228 = arith.constant 0 : index
    %276 = vector.load %arg13[%c50_227, %c0_228] : memref<84x128xf32, #tpu.memory_space<vmem>>, vector<1x128xf32>
    %277 = arith.maximumf %275, %276 : vector<1x128xf32>
    %c51_229 = arith.constant 51 : index
    %c0_230 = arith.constant 0 : index
    %278 = vector.load %arg13[%c51_229, %c0_230] : memref<84x128xf32, #tpu.memory_space<vmem>>, vector<1x128xf32>
    %279 = arith.maximumf %277, %278 : vector<1x128xf32>
    %c52 = arith.constant 52 : index
    %c0_231 = arith.constant 0 : index
    %280 = vector.load %arg13[%c52, %c0_231] : memref<84x128xf32, #tpu.memory_space<vmem>>, vector<1x128xf32>
    %281 = arith.maximumf %279, %280 : vector<1x128xf32>
    %c53 = arith.constant 53 : index
    %c0_232 = arith.constant 0 : index
    %282 = vector.load %arg13[%c53, %c0_232] : memref<84x128xf32, #tpu.memory_space<vmem>>, vector<1x128xf32>
    %283 = arith.maximumf %281, %282 : vector<1x128xf32>
    %c54 = arith.constant 54 : index
    %c0_233 = arith.constant 0 : index
    %284 = vector.load %arg13[%c54, %c0_233] : memref<84x128xf32, #tpu.memory_space<vmem>>, vector<1x128xf32>
    %285 = arith.maximumf %283, %284 : vector<1x128xf32>
    %c5_234 = arith.constant 5 : index
    %c128_235 = arith.constant 128 : index
    %286 = vector.load %arg14[%c5_234, %c128_235] : memref<8x384xf32, #tpu.memory_space<vmem>>, vector<1x128xf32>
    tpu.vector_store %arg14[%c5_234, %c128_235], %285 {strides = array<i32>} : memref<8x384xf32, #tpu.memory_space<vmem>>, vector<1x128xf32>,
    %c51_236 = arith.constant 51 : index
    %c0_237 = arith.constant 0 : index
    %287 = vector.load %arg13[%c51_236, %c0_237] : memref<84x128xf32, #tpu.memory_space<vmem>>, vector<1x128xf32>
    %c52_238 = arith.constant 52 : index
    %c0_239 = arith.constant 0 : index
    %288 = vector.load %arg13[%c52_238, %c0_239] : memref<84x128xf32, #tpu.memory_space<vmem>>, vector<1x128xf32>
    %289 = arith.maximumf %287, %288 : vector<1x128xf32>
    %c53_240 = arith.constant 53 : index
    %c0_241 = arith.constant 0 : index
    %290 = vector.load %arg13[%c53_240, %c0_241] : memref<84x128xf32, #tpu.memory_space<vmem>>, vector<1x128xf32>
    %291 = arith.maximumf %289, %290 : vector<1x128xf32>
    %c54_242 = arith.constant 54 : index
    %c0_243 = arith.constant 0 : index
    %292 = vector.load %arg13[%c54_242, %c0_243] : memref<84x128xf32, #tpu.memory_space<vmem>>, vector<1x128xf32>
    %293 = arith.maximumf %291, %292 : vector<1x128xf32>
    %c55 = arith.constant 55 : index
    %c0_244 = arith.constant 0 : index
    %294 = vector.load %arg13[%c55, %c0_244] : memref<84x128xf32, #tpu.memory_space<vmem>>, vector<1x128xf32>
    %295 = arith.maximumf %293, %294 : vector<1x128xf32>
    %c56 = arith.constant 56 : index
    %c0_245 = arith.constant 0 : index
    %296 = vector.load %arg13[%c56, %c0_245] : memref<84x128xf32, #tpu.memory_space<vmem>>, vector<1x128xf32>
    %297 = arith.maximumf %295, %296 : vector<1x128xf32>
    %c57 = arith.constant 57 : index
    %c0_246 = arith.constant 0 : index
    %298 = vector.load %arg13[%c57, %c0_246] : memref<84x128xf32, #tpu.memory_space<vmem>>, vector<1x128xf32>
    %299 = arith.maximumf %297, %298 : vector<1x128xf32>
    %c5_247 = arith.constant 5 : index
    %c256_248 = arith.constant 256 : index
    %300 = vector.load %arg14[%c5_247, %c256_248] : memref<8x384xf32, #tpu.memory_space<vmem>>, vector<1x128xf32>
    tpu.vector_store %arg14[%c5_247, %c256_248], %299 {strides = array<i32>} : memref<8x384xf32, #tpu.memory_space<vmem>>, vector<1x128xf32>,
    %c54_249 = arith.constant 54 : index
    %c0_250 = arith.constant 0 : index
    %301 = vector.load %arg13[%c54_249, %c0_250] : memref<84x128xf32, #tpu.memory_space<vmem>>, vector<1x128xf32>
    %c55_251 = arith.constant 55 : index
    %c0_252 = arith.constant 0 : index
    %302 = vector.load %arg13[%c55_251, %c0_252] : memref<84x128xf32, #tpu.memory_space<vmem>>, vector<1x128xf32>
    %303 = arith.maximumf %301, %302 : vector<1x128xf32>
    %c56_253 = arith.constant 56 : index
    %c0_254 = arith.constant 0 : index
    %304 = vector.load %arg13[%c56_253, %c0_254] : memref<84x128xf32, #tpu.memory_space<vmem>>, vector<1x128xf32>
    %305 = arith.maximumf %303, %304 : vector<1x128xf32>
    %c57_255 = arith.constant 57 : index
    %c0_256 = arith.constant 0 : index
    %306 = vector.load %arg13[%c57_255, %c0_256] : memref<84x128xf32, #tpu.memory_space<vmem>>, vector<1x128xf32>
    %307 = arith.maximumf %305, %306 : vector<1x128xf32>
    %c58 = arith.constant 58 : index
    %c0_257 = arith.constant 0 : index
    %308 = vector.load %arg13[%c58, %c0_257] : memref<84x128xf32, #tpu.memory_space<vmem>>, vector<1x128xf32>
    %309 = arith.maximumf %307, %308 : vector<1x128xf32>
    %c59 = arith.constant 59 : index
    %c0_258 = arith.constant 0 : index
    %310 = vector.load %arg13[%c59, %c0_258] : memref<84x128xf32, #tpu.memory_space<vmem>>, vector<1x128xf32>
    %311 = arith.maximumf %309, %310 : vector<1x128xf32>
    %c60 = arith.constant 60 : index
    %c0_259 = arith.constant 0 : index
    %312 = vector.load %arg13[%c60, %c0_259] : memref<84x128xf32, #tpu.memory_space<vmem>>, vector<1x128xf32>
    %313 = arith.maximumf %311, %312 : vector<1x128xf32>
    %c6_260 = arith.constant 6 : index
    %c0_261 = arith.constant 0 : index
    %314 = vector.load %arg14[%c6_260, %c0_261] : memref<8x384xf32, #tpu.memory_space<vmem>>, vector<1x128xf32>
    tpu.vector_store %arg14[%c6_260, %c0_261], %313 {strides = array<i32>} : memref<8x384xf32, #tpu.memory_space<vmem>>, vector<1x128xf32>,
    %c57_262 = arith.constant 57 : index
    %c0_263 = arith.constant 0 : index
    %315 = vector.load %arg13[%c57_262, %c0_263] : memref<84x128xf32, #tpu.memory_space<vmem>>, vector<1x128xf32>
    %c58_264 = arith.constant 58 : index
    %c0_265 = arith.constant 0 : index
    %316 = vector.load %arg13[%c58_264, %c0_265] : memref<84x128xf32, #tpu.memory_space<vmem>>, vector<1x128xf32>
    %317 = arith.maximumf %315, %316 : vector<1x128xf32>
    %c59_266 = arith.constant 59 : index
    %c0_267 = arith.constant 0 : index
    %318 = vector.load %arg13[%c59_266, %c0_267] : memref<84x128xf32, #tpu.memory_space<vmem>>, vector<1x128xf32>
    %319 = arith.maximumf %317, %318 : vector<1x128xf32>
    %c60_268 = arith.constant 60 : index
    %c0_269 = arith.constant 0 : index
    %320 = vector.load %arg13[%c60_268, %c0_269] : memref<84x128xf32, #tpu.memory_space<vmem>>, vector<1x128xf32>
    %321 = arith.maximumf %319, %320 : vector<1x128xf32>
    %c61 = arith.constant 61 : index
    %c0_270 = arith.constant 0 : index
    %322 = vector.load %arg13[%c61, %c0_270] : memref<84x128xf32, #tpu.memory_space<vmem>>, vector<1x128xf32>
    %323 = arith.maximumf %321, %322 : vector<1x128xf32>
    %c62 = arith.constant 62 : index
    %c0_271 = arith.constant 0 : index
    %324 = vector.load %arg13[%c62, %c0_271] : memref<84x128xf32, #tpu.memory_space<vmem>>, vector<1x128xf32>
    %325 = arith.maximumf %323, %324 : vector<1x128xf32>
    %c63 = arith.constant 63 : index
    %c0_272 = arith.constant 0 : index
    %326 = vector.load %arg13[%c63, %c0_272] : memref<84x128xf32, #tpu.memory_space<vmem>>, vector<1x128xf32>
    %327 = arith.maximumf %325, %326 : vector<1x128xf32>
    %c6_273 = arith.constant 6 : index
    %c128_274 = arith.constant 128 : index
    %328 = vector.load %arg14[%c6_273, %c128_274] : memref<8x384xf32, #tpu.memory_space<vmem>>, vector<1x128xf32>
    tpu.vector_store %arg14[%c6_273, %c128_274], %327 {strides = array<i32>} : memref<8x384xf32, #tpu.memory_space<vmem>>, vector<1x128xf32>,
    %c60_275 = arith.constant 60 : index
    %c0_276 = arith.constant 0 : index
    %329 = vector.load %arg13[%c60_275, %c0_276] : memref<84x128xf32, #tpu.memory_space<vmem>>, vector<1x128xf32>
    %c61_277 = arith.constant 61 : index
    %c0_278 = arith.constant 0 : index
    %330 = vector.load %arg13[%c61_277, %c0_278] : memref<84x128xf32, #tpu.memory_space<vmem>>, vector<1x128xf32>
    %331 = arith.maximumf %329, %330 : vector<1x128xf32>
    %c62_279 = arith.constant 62 : index
    %c0_280 = arith.constant 0 : index
    %332 = vector.load %arg13[%c62_279, %c0_280] : memref<84x128xf32, #tpu.memory_space<vmem>>, vector<1x128xf32>
    %333 = arith.maximumf %331, %332 : vector<1x128xf32>
    %c63_281 = arith.constant 63 : index
    %c0_282 = arith.constant 0 : index
    %334 = vector.load %arg13[%c63_281, %c0_282] : memref<84x128xf32, #tpu.memory_space<vmem>>, vector<1x128xf32>
    %335 = arith.maximumf %333, %334 : vector<1x128xf32>
    %c64 = arith.constant 64 : index
    %c0_283 = arith.constant 0 : index
    %336 = vector.load %arg13[%c64, %c0_283] : memref<84x128xf32, #tpu.memory_space<vmem>>, vector<1x128xf32>
    %337 = arith.maximumf %335, %336 : vector<1x128xf32>
    %c65 = arith.constant 65 : index
    %c0_284 = arith.constant 0 : index
    %338 = vector.load %arg13[%c65, %c0_284] : memref<84x128xf32, #tpu.memory_space<vmem>>, vector<1x128xf32>
    %339 = arith.maximumf %337, %338 : vector<1x128xf32>
    %c66 = arith.constant 66 : index
    %c0_285 = arith.constant 0 : index
    %340 = vector.load %arg13[%c66, %c0_285] : memref<84x128xf32, #tpu.memory_space<vmem>>, vector<1x128xf32>
    %341 = arith.maximumf %339, %340 : vector<1x128xf32>
    %c6_286 = arith.constant 6 : index
    %c256_287 = arith.constant 256 : index
    %342 = vector.load %arg14[%c6_286, %c256_287] : memref<8x384xf32, #tpu.memory_space<vmem>>, vector<1x128xf32>
    tpu.vector_store %arg14[%c6_286, %c256_287], %341 {strides = array<i32>} : memref<8x384xf32, #tpu.memory_space<vmem>>, vector<1x128xf32>,
    %c63_288 = arith.constant 63 : index
    %c0_289 = arith.constant 0 : index
    %343 = vector.load %arg13[%c63_288, %c0_289] : memref<84x128xf32, #tpu.memory_space<vmem>>, vector<1x128xf32>
    %c64_290 = arith.constant 64 : index
    %c0_291 = arith.constant 0 : index
    %344 = vector.load %arg13[%c64_290, %c0_291] : memref<84x128xf32, #tpu.memory_space<vmem>>, vector<1x128xf32>
    %345 = arith.maximumf %343, %344 : vector<1x128xf32>
    %c65_292 = arith.constant 65 : index
    %c0_293 = arith.constant 0 : index
    %346 = vector.load %arg13[%c65_292, %c0_293] : memref<84x128xf32, #tpu.memory_space<vmem>>, vector<1x128xf32>
    %347 = arith.maximumf %345, %346 : vector<1x128xf32>
    %c66_294 = arith.constant 66 : index
    %c0_295 = arith.constant 0 : index
    %348 = vector.load %arg13[%c66_294, %c0_295] : memref<84x128xf32, #tpu.memory_space<vmem>>, vector<1x128xf32>
    %349 = arith.maximumf %347, %348 : vector<1x128xf32>
    %c67 = arith.constant 67 : index
    %c0_296 = arith.constant 0 : index
    %350 = vector.load %arg13[%c67, %c0_296] : memref<84x128xf32, #tpu.memory_space<vmem>>, vector<1x128xf32>
    %351 = arith.maximumf %349, %350 : vector<1x128xf32>
    %c68 = arith.constant 68 : index
    %c0_297 = arith.constant 0 : index
    %352 = vector.load %arg13[%c68, %c0_297] : memref<84x128xf32, #tpu.memory_space<vmem>>, vector<1x128xf32>
    %353 = arith.maximumf %351, %352 : vector<1x128xf32>
    %c69 = arith.constant 69 : index
    %c0_298 = arith.constant 0 : index
    %354 = vector.load %arg13[%c69, %c0_298] : memref<84x128xf32, #tpu.memory_space<vmem>>, vector<1x128xf32>
    %355 = arith.maximumf %353, %354 : vector<1x128xf32>
    %c7_299 = arith.constant 7 : index
    %c0_300 = arith.constant 0 : index
    %356 = vector.load %arg14[%c7_299, %c0_300] : memref<8x384xf32, #tpu.memory_space<vmem>>, vector<1x128xf32>
    tpu.vector_store %arg14[%c7_299, %c0_300], %355 {strides = array<i32>} : memref<8x384xf32, #tpu.memory_space<vmem>>, vector<1x128xf32>,
    %c66_301 = arith.constant 66 : index
    %c0_302 = arith.constant 0 : index
    %357 = vector.load %arg13[%c66_301, %c0_302] : memref<84x128xf32, #tpu.memory_space<vmem>>, vector<1x128xf32>
    %c67_303 = arith.constant 67 : index
    %c0_304 = arith.constant 0 : index
    %358 = vector.load %arg13[%c67_303, %c0_304] : memref<84x128xf32, #tpu.memory_space<vmem>>, vector<1x128xf32>
    %359 = arith.maximumf %357, %358 : vector<1x128xf32>
    %c68_305 = arith.constant 68 : index
    %c0_306 = arith.constant 0 : index
    %360 = vector.load %arg13[%c68_305, %c0_306] : memref<84x128xf32, #tpu.memory_space<vmem>>, vector<1x128xf32>
    %361 = arith.maximumf %359, %360 : vector<1x128xf32>
    %c69_307 = arith.constant 69 : index
    %c0_308 = arith.constant 0 : index
    %362 = vector.load %arg13[%c69_307, %c0_308] : memref<84x128xf32, #tpu.memory_space<vmem>>, vector<1x128xf32>
    %363 = arith.maximumf %361, %362 : vector<1x128xf32>
    %c70 = arith.constant 70 : index
    %c0_309 = arith.constant 0 : index
    %364 = vector.load %arg13[%c70, %c0_309] : memref<84x128xf32, #tpu.memory_space<vmem>>, vector<1x128xf32>
    %365 = arith.maximumf %363, %364 : vector<1x128xf32>
    %c71 = arith.constant 71 : index
    %c0_310 = arith.constant 0 : index
    %366 = vector.load %arg13[%c71, %c0_310] : memref<84x128xf32, #tpu.memory_space<vmem>>, vector<1x128xf32>
    %367 = arith.maximumf %365, %366 : vector<1x128xf32>
    %c72 = arith.constant 72 : index
    %c0_311 = arith.constant 0 : index
    %368 = vector.load %arg13[%c72, %c0_311] : memref<84x128xf32, #tpu.memory_space<vmem>>, vector<1x128xf32>
    %369 = arith.maximumf %367, %368 : vector<1x128xf32>
    %c7_312 = arith.constant 7 : index
    %c128_313 = arith.constant 128 : index
    %370 = vector.load %arg14[%c7_312, %c128_313] : memref<8x384xf32, #tpu.memory_space<vmem>>, vector<1x128xf32>
    tpu.vector_store %arg14[%c7_312, %c128_313], %369 {strides = array<i32>} : memref<8x384xf32, #tpu.memory_space<vmem>>, vector<1x128xf32>,
    %c69_314 = arith.constant 69 : index
    %c0_315 = arith.constant 0 : index
    %371 = vector.load %arg13[%c69_314, %c0_315] : memref<84x128xf32, #tpu.memory_space<vmem>>, vector<1x128xf32>
    %c70_316 = arith.constant 70 : index
    %c0_317 = arith.constant 0 : index
    %372 = vector.load %arg13[%c70_316, %c0_317] : memref<84x128xf32, #tpu.memory_space<vmem>>, vector<1x128xf32>
    %373 = arith.maximumf %371, %372 : vector<1x128xf32>
    %c71_318 = arith.constant 71 : index
    %c0_319 = arith.constant 0 : index
    %374 = vector.load %arg13[%c71_318, %c0_319] : memref<84x128xf32, #tpu.memory_space<vmem>>, vector<1x128xf32>
    %375 = arith.maximumf %373, %374 : vector<1x128xf32>
    %c72_320 = arith.constant 72 : index
    %c0_321 = arith.constant 0 : index
    %376 = vector.load %arg13[%c72_320, %c0_321] : memref<84x128xf32, #tpu.memory_space<vmem>>, vector<1x128xf32>
    %377 = arith.maximumf %375, %376 : vector<1x128xf32>
    %c73 = arith.constant 73 : index
    %c0_322 = arith.constant 0 : index
    %378 = vector.load %arg13[%c73, %c0_322] : memref<84x128xf32, #tpu.memory_space<vmem>>, vector<1x128xf32>
    %379 = arith.maximumf %377, %378 : vector<1x128xf32>
    %c74 = arith.constant 74 : index
    %c0_323 = arith.constant 0 : index
    %380 = vector.load %arg13[%c74, %c0_323] : memref<84x128xf32, #tpu.memory_space<vmem>>, vector<1x128xf32>
    %381 = arith.maximumf %379, %380 : vector<1x128xf32>
    %c75 = arith.constant 75 : index
    %c0_324 = arith.constant 0 : index
    %382 = vector.load %arg13[%c75, %c0_324] : memref<84x128xf32, #tpu.memory_space<vmem>>, vector<1x128xf32>
    %383 = arith.maximumf %381, %382 : vector<1x128xf32>
    %c7_325 = arith.constant 7 : index
    %c256_326 = arith.constant 256 : index
    %384 = vector.load %arg14[%c7_325, %c256_326] : memref<8x384xf32, #tpu.memory_space<vmem>>, vector<1x128xf32>
    tpu.vector_store %arg14[%c7_325, %c256_326], %383 {strides = array<i32>} : memref<8x384xf32, #tpu.memory_space<vmem>>, vector<1x128xf32>,
    %c0_327 = arith.constant 0 : index
    %c0_328 = arith.constant 0 : index
    %385 = vector.load %arg14[%c0_327, %c0_328] : memref<8x384xf32, #tpu.memory_space<vmem>>, vector<8x384xf32>
    %386 = arith.truncf %385 : vector<8x384xf32> to vector<8x384xbf16>
    %c0_329 = arith.constant 0 : index
    %c0_330 = arith.constant 0 : index
    %387 = vector.load %arg4[%c0_329, %c0_330] : memref<384x128xbf16, #tpu.memory_space<vmem>>, vector<384x128xbf16>
    %cst_331 = arith.constant dense<0.000000e+00> : vector<8x128xf32>
    %388 = tpu.matmul %386, %387, %cst_331 {dimension_numbers = #tpu.dot_dimension_numbers<[1], [0], [0], [1], [0, 0, 1, 1], [], []>} : vector<8x384xbf16>, vector<384x128xbf16>, vector<8x128xf32> -> vector<8x128xf32>
    %c0_332 = arith.constant 0 : index
    %c0_333 = arith.constant 0 : index
    %389 = vector.load %arg5[%c0_332, %c0_333] : memref<1x128xf32, #tpu.memory_space<vmem>>, vector<1x128xf32>
    %390 = vector.broadcast %389 : vector<1x128xf32> to vector<8x128xf32>
    %391 = arith.addf %388, %390 : vector<8x128xf32>
    %cst_334 = arith.constant 0.000000e+00 : f32
    %392 = vector.broadcast %cst_334 : f32 to vector<8x128xf32>
    %393 = arith.maximumf %391, %392 : vector<8x128xf32>
    %394 = vector.extract_strided_slice %393 {offsets = [0, 0], sizes = [1, 128], strides = [1, 1]} : vector<8x128xf32> to vector<1x128xf32>
    %395 = vector.extract_strided_slice %393 {offsets = [1, 0], sizes = [1, 128], strides = [1, 1]} : vector<8x128xf32> to vector<1x128xf32>
    %396 = arith.maximumf %394, %395 : vector<1x128xf32>
    %397 = vector.extract_strided_slice %393 {offsets = [2, 0], sizes = [1, 128], strides = [1, 1]} : vector<8x128xf32> to vector<1x128xf32>
    %398 = arith.maximumf %396, %397 : vector<1x128xf32>
    %399 = vector.extract_strided_slice %393 {offsets = [3, 0], sizes = [1, 128], strides = [1, 1]} : vector<8x128xf32> to vector<1x128xf32>
    %400 = vector.extract_strided_slice %393 {offsets = [4, 0], sizes = [1, 128], strides = [1, 1]} : vector<8x128xf32> to vector<1x128xf32>
    %401 = arith.maximumf %399, %400 : vector<1x128xf32>
    %402 = vector.extract_strided_slice %393 {offsets = [5, 0], sizes = [1, 128], strides = [1, 1]} : vector<8x128xf32> to vector<1x128xf32>
    %403 = arith.maximumf %401, %402 : vector<1x128xf32>
    %404 = tpu.concatenate %398, %403 in 1 : vector<1x128xf32>, vector<1x128xf32> -> vector<1x256xf32>
    %405 = arith.truncf %404 : vector<1x256xf32> to vector<1x256xbf16>
    %c0_335 = arith.constant 0 : index
    %c0_336 = arith.constant 0 : index
    %406 = vector.load %arg6[%c0_335, %c0_336] : memref<256x512xbf16, #tpu.memory_space<vmem>>, vector<256x512xbf16>
    %cst_337 = arith.constant dense<0.000000e+00> : vector<1x512xf32>
    %407 = tpu.matmul %405, %406, %cst_337 {dimension_numbers = #tpu.dot_dimension_numbers<[1], [0], [0], [1], [0, 0, 1, 1], [], []>} : vector<1x256xbf16>, vector<256x512xbf16>, vector<1x512xf32> -> vector<1x512xf32>
    %c0_338 = arith.constant 0 : index
    %c0_339 = arith.constant 0 : index
    %408 = vector.load %arg7[%c0_338, %c0_339] : memref<1x512xf32, #tpu.memory_space<vmem>>, vector<1x512xf32>
    %409 = arith.addf %407, %408 : vector<1x512xf32>
    %cst_340 = arith.constant 0.000000e+00 : f32
    %410 = vector.broadcast %cst_340 : f32 to vector<1x512xf32>
    %411 = arith.maximumf %409, %410 : vector<1x512xf32>
    %412 = arith.truncf %411 : vector<1x512xf32> to vector<1x512xbf16>
    %c0_341 = arith.constant 0 : index
    %c0_342 = arith.constant 0 : index
    %413 = vector.load %arg8[%c0_341, %c0_342] : memref<512x11xbf16, #tpu.memory_space<vmem>>, vector<512x11xbf16>
    %cst_343 = arith.constant dense<0.000000e+00> : vector<1x11xf32>
    %414 = tpu.matmul %412, %413, %cst_343 {dimension_numbers = #tpu.dot_dimension_numbers<[1], [0], [0], [1], [0, 0, 1, 1], [], []>} : vector<1x512xbf16>, vector<512x11xbf16>, vector<1x11xf32> -> vector<1x11xf32>
    %c0_344 = arith.constant 0 : index
    %c0_345 = arith.constant 0 : index
    %415 = vector.load %arg9[%c0_344, %c0_345] : memref<1x11xf32, #tpu.memory_space<vmem>>, vector<1x11xf32>
    %416 = arith.addf %414, %415 : vector<1x11xf32>
    %cst_346 = arith.constant 0.000000e+00 : f32
    %417 = vector.broadcast %cst_346 : f32 to vector<1x11xf32>
    %418 = arith.maximumf %416, %417 : vector<1x11xf32>
    %c0_347 = arith.constant 0 : index
    %c0_348 = arith.constant 0 : index
    %419 = vector.load %arg10[%c0_347, %c0_348] : memref<11x2xf32, #tpu.memory_space<vmem>>, vector<11x2xf32>
    %cst_349 = arith.constant dense<0.000000e+00> : vector<1x2xf32>
    %420 = tpu.matmul %418, %419, %cst_349 {dimension_numbers = #tpu.dot_dimension_numbers<[1], [0], [0], [1], [0, 0, 1, 1], [], []>} : vector<1x11xf32>, vector<11x2xf32>, vector<1x2xf32> -> vector<1x2xf32>
    %c0_350 = arith.constant 0 : index
    %c0_351 = arith.constant 0 : index
    %421 = vector.load %arg11[%c0_350, %c0_351] : memref<1x2xf32, #tpu.memory_space<vmem>>, vector<1x2xf32>
    %422 = arith.addf %420, %421 : vector<1x2xf32>
    %c0_352 = arith.constant 0 : index
    %c0_353 = arith.constant 0 : index
    %c0_354 = arith.constant 0 : index
    %423 = vector.load %arg12[%c0_352, %c0_353, %c0_354] : memref<1x1x2xf32, #tpu.memory_space<vmem>>, vector<1x1x2xf32>
    %424 = vector.shape_cast %423 : vector<1x1x2xf32> to vector<1x2xf32>
    %425 = vector.shape_cast %422 : vector<1x2xf32> to vector<1x1x2xf32>
    tpu.vector_store %arg12[%c0_352, %c0_353, %c0_354], %425 {strides = array<i32>} : memref<1x1x2xf32, #tpu.memory_space<vmem>>, vector<1x1x2xf32>,
    return
  }
  func.func @transform_0(%arg0: i32) -> (i32, i32, i32) {
    %c0_i32 = arith.constant 0 : i32
    %c0_i32_0 = arith.constant 0 : i32
    %c0_i32_1 = arith.constant 0 : i32
    return %arg0, %c0_i32, %c0_i32_0 : i32, i32, i32
  }
  func.func @transform_1(%arg0: i32) -> (i32, i32) {
    %c0_i32 = arith.constant 0 : i32
    %c0_i32_0 = arith.constant 0 : i32
    %c0_i32_1 = arith.constant 0 : i32
    return %c0_i32, %c0_i32_0 : i32, i32
  }
  func.func @transform_2(%arg0: i32) -> (i32, i32) {
    %c0_i32 = arith.constant 0 : i32
    %c0_i32_0 = arith.constant 0 : i32
    %c0_i32_1 = arith.constant 0 : i32
    return %c0_i32, %c0_i32_0 : i32, i32
  }
  func.func @transform_3(%arg0: i32) -> (i32, i32) {
    %c0_i32 = arith.constant 0 : i32
    %c0_i32_0 = arith.constant 0 : i32
    %c0_i32_1 = arith.constant 0 : i32
    return %c0_i32, %c0_i32_0 : i32, i32
  }
  func.func @transform_4(%arg0: i32) -> (i32, i32) {
    %c0_i32 = arith.constant 0 : i32
    %c0_i32_0 = arith.constant 0 : i32
    %c0_i32_1 = arith.constant 0 : i32
    return %c0_i32, %c0_i32_0 : i32, i32
  }
  func.func @transform_5(%arg0: i32) -> (i32, i32) {
    %c0_i32 = arith.constant 0 : i32
    %c0_i32_0 = arith.constant 0 : i32
    %c0_i32_1 = arith.constant 0 : i32
    return %c0_i32, %c0_i32_0 : i32, i32
  }
  func.func @transform_6(%arg0: i32) -> (i32, i32) {
    %c0_i32 = arith.constant 0 : i32
    %c0_i32_0 = arith.constant 0 : i32
    %c0_i32_1 = arith.constant 0 : i32
    return %c0_i32, %c0_i32_0 : i32, i32
  }
  func.func @transform_7(%arg0: i32) -> (i32, i32) {
    %c0_i32 = arith.constant 0 : i32
    %c0_i32_0 = arith.constant 0 : i32
    %c0_i32_1 = arith.constant 0 : i32
    return %c0_i32, %c0_i32_0 : i32, i32
  }
  func.func @transform_8(%arg0: i32) -> (i32, i32) {
    %c0_i32 = arith.constant 0 : i32
    %c0_i32_0 = arith.constant 0 : i32
    %c0_i32_1 = arith.constant 0 : i32
    return %c0_i32, %c0_i32_0 : i32, i32
  }
  func.func @transform_9(%arg0: i32) -> (i32, i32) {
    %c0_i32 = arith.constant 0 : i32
    %c0_i32_0 = arith.constant 0 : i32
    %c0_i32_1 = arith.constant 0 : i32
    return %c0_i32, %c0_i32_0 : i32, i32
  }
  func.func @transform_10(%arg0: i32) -> (i32, i32) {
    %c0_i32 = arith.constant 0 : i32
    %c0_i32_0 = arith.constant 0 : i32
    %c0_i32_1 = arith.constant 0 : i32
    return %c0_i32, %c0_i32_0 : i32, i32
  }
  func.func @transform_11(%arg0: i32) -> (i32, i32, i32) {
    %c0_i32 = arith.constant 0 : i32
    %c0_i32_0 = arith.constant 0 : i32
    %c0_i32_1 = arith.constant 0 : i32
    return %arg0, %c0_i32, %c0_i32_0 : i32, i32, i32
  }
}

</mosaic_0001>

<llo_original>
// kernel: cnn1d_forward.1
$region0: #{cnn1d_forward.1}
  #allocation0 [shape = 'u32[]', space=smem, size = 0x4, offset = 0x4, fixed_abs, tag = 'smem constant byte address 0x4 - core index']
  #allocation1 [shape = 'u32[144,128]{1,0:T(1,128)}', space=vmem, size = 0x12000, scoped, tag = 'internal scratch']
  #allocation2 [shape = 'f32[84,128]{1,0:T(8,128)}', space=vmem, size = 0xb000, scoped, tag = 'scratch operand']
  #allocation3 [shape = 'f32[8,384]{1,0:T(8,128)}', space=vmem, size = 0x3000, scoped, tag = 'scratch operand']
  %s0 = inlined_call_operand.vmem [shape: f32[2,84,7], index: 0, kind: input, shape index: {}]
  %s1 = inlined_call_operand.vmem [shape: f32[7,128], index: 1, kind: input, shape index: {}]
  %s2 = inlined_call_operand.vmem [shape: f32[1,128], index: 2, kind: input, shape index: {}]
  %s3 = inlined_call_operand.vmem [shape: bf16[384,128], index: 3, kind: input, shape index: {}]
  %s4 = inlined_call_operand.vmem [shape: f32[1,128], index: 4, kind: input, shape index: {}]
  %s5 = inlined_call_operand.vmem [shape: bf16[256,512], index: 5, kind: input, shape index: {}]
  %s6 = inlined_call_operand.vmem [shape: f32[1,512], index: 6, kind: input, shape index: {}]
  %s7 = inlined_call_operand.vmem [shape: bf16[512,11], index: 7, kind: input, shape index: {}]
  %s8 = inlined_call_operand.vmem [shape: f32[1,11], index: 8, kind: input, shape index: {}]
  %s9 = inlined_call_operand.vmem [shape: f32[11,2], index: 9, kind: input, shape index: {}]
  %s10 = inlined_call_operand.vmem [shape: f32[1,2], index: 10, kind: input, shape index: {}]
  %s11 = inlined_call_operand.hbm [shape: f32[2,1,2], index: 11, kind: output, shape index: {}]
  %s12 = sld [smem:[#allocation0]]
  $region77: #{cnn1d_forward.1} parent=0
    _
  %s14 = ssub.s32 1, %s12
  %s15 = scalar_select 0, %s14, %s12
  $region1: #{cnn1d_forward.1} parent=0
    #allocation4 [shape = 'u8[1024]{0}', space=vmem, size = 0x400, scoped, tag = 'output window, operand 0']
    #allocation5 [shape = 's32[2]{0}', space=sflag, size = 0x8, scoped, tag = 'scoped memory for cnn1d_forward.1']
    %16 = vsyncpa [#allocation5], 0
    %s17 = scalar_lea.sflag [#allocation5], 1
    %18 = vsyncpa %s17, 0
    loop: start=0, step=1, limit=4
    $region2: #{cnn1d_forward.1} parent=1 // loop_pre_header
      _
    $region3: #{cnn1d_forward.1} parent=1 // loop_header
      %s20 = sphi 0, %s24
      %p21 = scmp.ge.s32.totalorder %s20, 4
      %s30 = sphi 0, %s32
      %s33 = sphi 0, %s30
      %s34 = sphi 0, %s33
      %s50 = sphi 0, %s34
      %s54 = sphi 0, %s54
      %s56 = sphi 0, %s54
      %s57 = sphi 0, %s56
      %s71 = sphi 0, %s57
      %s75 = sphi 0, %s75
      %s77 = sphi 0, %s75
      %s78 = sphi 0, %s77
      %s92 = sphi 0, %s78
      %s96 = sphi 0, %s96
      %s98 = sphi 0, %s96
      %s99 = sphi 0, %s98
      %s113 = sphi 0, %s99
      %s117 = sphi 0, %s117
      %s119 = sphi 0, %s117
      %s120 = sphi 0, %s119
      %s134 = sphi 0, %s120
      %s138 = sphi 0, %s138
      %s140 = sphi 0, %s138
      %s141 = sphi 0, %s140
      %s155 = sphi 0, %s141
      %s159 = sphi 0, %s159
      %s161 = sphi 0, %s159
      %s162 = sphi 0, %s161
      %s176 = sphi 0, %s162
      %s180 = sphi 0, %s180
      %s182 = sphi 0, %s180
      %s183 = sphi 0, %s182
      %s197 = sphi 0, %s183
      %s201 = sphi 0, %s201
      %s203 = sphi 0, %s201
      %s204 = sphi 0, %s203
      %s218 = sphi 0, %s204
      %s222 = sphi 0, %s222
      %s224 = sphi 0, %s222
      %s225 = sphi 0, %s224
      %s239 = sphi 0, %s225
      %s243 = sphi 0, %s243
      %s245 = sphi 0, %s243
      %s246 = sphi 0, %s245
      %s260 = sphi 0, %s246
      %s266 = sphi 0, %s268
      %s269 = sphi 0, %s266
      %s270 = sphi 0, %s269
      %s286 = sphi 0, %s270
    $region4: #{cnn1d_forward.1} parent=1 // loop_header_branch
      %23 = sbr.rel (%p21) target = $region8
    $region5: #{cnn1d_forward.1} parent=1 // loop_body
      %s25 = ssub.s32 %s20, 1
      %s26 = ssub.s32 %s20, 2
      %s27 = sadd.s32 %s20, 1
      %s28 = ssub.s32 %s20, %s27
      %p29 = scmp.eq.s32.totalorder %s28, 0
      %s31 = sadd.s32 %s30, 1
      %s32 = scalar_select %p29, %s30, %s31
      %p35 = pneg %p29
      %p36 = scmp.eq.s32.totalorder %s20, 1
      %p37 = por %p35, %p36
      %p38 = scmp.ne.s32.totalorder %s30, %s33
      %p39 = scmp.eq.s32.totalorder %s20, 0
      %p40 = por %p38, %p39
      %p41 = scmp.ne.s32.totalorder %s30, %s33
      %p42 = scmp.eq.s32.totalorder %s25, 1
      %p43 = por %p41, %p42
      %p44 = scmp.ne.s32.totalorder %s33, %s34
      %p45 = scmp.eq.s32.totalorder %s25, 0
      %p46 = por %p44, %p45
      %p47 = scmp.ne.s32.totalorder %s33, %s34
      %p48 = scmp.eq.s32.totalorder %s26, 1
      %p49 = por %p47, %p48
      %p51 = scmp.ne.s32.totalorder %s34, %s50
      %p52 = scmp.eq.s32.totalorder %s26, 0
      %p53 = por %p51, %p52
      %s55 = sadd.s32 %s54, 1
      %p58 = scmp.eq.s32.totalorder %s20, 1
      %p59 = scmp.ne.s32.totalorder %s54, %s56
      %p60 = scmp.eq.s32.totalorder %s20, 0
      %p61 = por %p59, %p60
      %p62 = scmp.ne.s32.totalorder %s54, %s56
      %p63 = scmp.eq.s32.totalorder %s25, 1
      %p64 = por %p62, %p63
      %p65 = scmp.ne.s32.totalorder %s56, %s57
      %p66 = scmp.eq.s32.totalorder %s25, 0
      %p67 = por %p65, %p66
      %p68 = scmp.ne.s32.totalorder %s56, %s57
      %p69 = scmp.eq.s32.totalorder %s26, 1
      %p70 = por %p68, %p69
      %p72 = scmp.ne.s32.totalorder %s57, %s71
      %p73 = scmp.eq.s32.totalorder %s26, 0
      %p74 = por %p72, %p73
      %s76 = sadd.s32 %s75, 1
      %p79 = scmp.eq.s32.totalorder %s20, 1
      %p80 = scmp.ne.s32.totalorder %s75, %s77
      %p81 = scmp.eq.s32.totalorder %s20, 0
      %p82 = por %p80, %p81
      %p83 = scmp.ne.s32.totalorder %s75, %s77
      %p84 = scmp.eq.s32.totalorder %s25, 1
      %p85 = por %p83, %p84
      %p86 = scmp.ne.s32.totalorder %s77, %s78
      %p87 = scmp.eq.s32.totalorder %s25, 0
      %p88 = por %p86, %p87
      %p89 = scmp.ne.s32.totalorder %s77, %s78
      %p90 = scmp.eq.s32.totalorder %s26, 1
      %p91 = por %p89, %p90
      %p93 = scmp.ne.s32.totalorder %s78, %s92
      %p94 = scmp.eq.s32.totalorder %s26, 0
      %p95 = por %p93, %p94
      %s97 = sadd.s32 %s96, 1
      %p100 = scmp.eq.s32.totalorder %s20, 1
      %p101 = scmp.ne.s32.totalorder %s96, %s98
      %p102 = scmp.eq.s32.totalorder %s20, 0
      %p103 = por %p101, %p102
      %p104 = scmp.ne.s32.totalorder %s96, %s98
      %p105 = scmp.eq.s32.totalorder %s25, 1
      %p106 = por %p104, %p105
      %p107 = scmp.ne.s32.totalorder %s98, %s99
      %p108 = scmp.eq.s32.totalorder %s25, 0
      %p109 = por %p107, %p108
      %p110 = scmp.ne.s32.totalorder %s98, %s99
      %p111 = scmp.eq.s32.totalorder %s26, 1
      %p112 = por %p110, %p111
      %p114 = scmp.ne.s32.totalorder %s99, %s113
      %p115 = scmp.eq.s32.totalorder %s26, 0
      %p116 = por %p114, %p115
      %s118 = sadd.s32 %s117, 1
      %p121 = scmp.eq.s32.totalorder %s20, 1
      %p122 = scmp.ne.s32.totalorder %s117, %s119
      %p123 = scmp.eq.s32.totalorder %s20, 0
      %p124 = por %p122, %p123
      %p125 = scmp.ne.s32.totalorder %s117, %s119
      %p126 = scmp.eq.s32.totalorder %s25, 1
      %p127 = por %p125, %p126
      %p128 = scmp.ne.s32.totalorder %s119, %s120
      %p129 = scmp.eq.s32.totalorder %s25, 0
      %p130 = por %p128, %p129
      %p131 = scmp.ne.s32.totalorder %s119, %s120
      %p132 = scmp.eq.s32.totalorder %s26, 1
      %p133 = por %p131, %p132
      %p135 = scmp.ne.s32.totalorder %s120, %s134
      %p136 = scmp.eq.s32.totalorder %s26, 0
      %p137 = por %p135, %p136
      %s139 = sadd.s32 %s138, 1
      %p142 = scmp.eq.s32.totalorder %s20, 1
      %p143 = scmp.ne.s32.totalorder %s138, %s140
      %p144 = scmp.eq.s32.totalorder %s20, 0
      %p145 = por %p143, %p144
      %p146 = scmp.ne.s32.totalorder %s138, %s140
      %p147 = scmp.eq.s32.totalorder %s25, 1
      %p148 = por %p146, %p147
      %p149 = scmp.ne.s32.totalorder %s140, %s141
      %p150 = scmp.eq.s32.totalorder %s25, 0
      %p151 = por %p149, %p150
      %p152 = scmp.ne.s32.totalorder %s140, %s141
      %p153 = scmp.eq.s32.totalorder %s26, 1
      %p154 = por %p152, %p153
      %p156 = scmp.ne.s32.totalorder %s141, %s155
      %p157 = scmp.eq.s32.totalorder %s26, 0
      %p158 = por %p156, %p157
      %s160 = sadd.s32 %s159, 1
      %p163 = scmp.eq.s32.totalorder %s20, 1
      %p164 = scmp.ne.s32.totalorder %s159, %s161
      %p165 = scmp.eq.s32.totalorder %s20, 0
      %p166 = por %p164, %p165
      %p167 = scmp.ne.s32.totalorder %s159, %s161
      %p168 = scmp.eq.s32.totalorder %s25, 1
      %p169 = por %p167, %p168
      %p170 = scmp.ne.s32.totalorder %s161, %s162
      %p171 = scmp.eq.s32.totalorder %s25, 0
      %p172 = por %p170, %p171
      %p173 = scmp.ne.s32.totalorder %s161, %s162
      %p174 = scmp.eq.s32.totalorder %s26, 1
      %p175 = por %p173, %p174
      %p177 = scmp.ne.s32.totalorder %s162, %s176
      %p178 = scmp.eq.s32.totalorder %s26, 0
      %p179 = por %p177, %p178
      %s181 = sadd.s32 %s180, 1
      %p184 = scmp.eq.s32.totalorder %s20, 1
      %p185 = scmp.ne.s32.totalorder %s180, %s182
      %p186 = scmp.eq.s32.totalorder %s20, 0
      %p187 = por %p185, %p186
      %p188 = scmp.ne.s32.totalorder %s180, %s182
      %p189 = scmp.eq.s32.totalorder %s25, 1
      %p190 = por %p188, %p189
      %p191 = scmp.ne.s32.totalorder %s182, %s183
      %p192 = scmp.eq.s32.totalorder %s25, 0
      %p193 = por %p191, %p192
      %p194 = scmp.ne.s32.totalorder %s182, %s183
      %p195 = scmp.eq.s32.totalorder %s26, 1
      %p196 = por %p194, %p195
      %p198 = scmp.ne.s32.totalorder %s183, %s197
      %p199 = scmp.eq.s32.totalorder %s26, 0
      %p200 = por %p198, %p199
      %s202 = sadd.s32 %s201, 1
      %p205 = scmp.eq.s32.totalorder %s20, 1
      %p206 = scmp.ne.s32.totalorder %s201, %s203
      %p207 = scmp.eq.s32.totalorder %s20, 0
      %p208 = por %p206, %p207
      %p209 = scmp.ne.s32.totalorder %s201, %s203
      %p210 = scmp.eq.s32.totalorder %s25, 1
      %p211 = por %p209, %p210
      %p212 = scmp.ne.s32.totalorder %s203, %s204
      %p213 = scmp.eq.s32.totalorder %s25, 0
      %p214 = por %p212, %p213
      %p215 = scmp.ne.s32.totalorder %s203, %s204
      %p216 = scmp.eq.s32.totalorder %s26, 1
      %p217 = por %p215, %p216
      %p219 = scmp.ne.s32.totalorder %s204, %s218
      %p220 = scmp.eq.s32.totalorder %s26, 0
      %p221 = por %p219, %p220
      %s223 = sadd.s32 %s222, 1
      %p226 = scmp.eq.s32.totalorder %s20, 1
      %p227 = scmp.ne.s32.totalorder %s222, %s224
      %p228 = scmp.eq.s32.totalorder %s20, 0
      %p229 = por %p227, %p228
      %p230 = scmp.ne.s32.totalorder %s222, %s224
      %p231 = scmp.eq.s32.totalorder %s25, 1
      %p232 = por %p230, %p231
      %p233 = scmp.ne.s32.totalorder %s224, %s225
      %p234 = scmp.eq.s32.totalorder %s25, 0
      %p235 = por %p233, %p234
      %p236 = scmp.ne.s32.totalorder %s224, %s225
      %p237 = scmp.eq.s32.totalorder %s26, 1
      %p238 = por %p236, %p237
      %p240 = scmp.ne.s32.totalorder %s225, %s239
      %p241 = scmp.eq.s32.totalorder %s26, 0
      %p242 = por %p240, %p241
      %s244 = sadd.s32 %s243, 1
      %p247 = scmp.eq.s32.totalorder %s20, 1
      %p248 = scmp.ne.s32.totalorder %s243, %s245
      %p249 = scmp.eq.s32.totalorder %s20, 0
      %p250 = por %p248, %p249
      %p251 = scmp.ne.s32.totalorder %s243, %s245
      %p252 = scmp.eq.s32.totalorder %s25, 1
      %p253 = por %p251, %p252
      %p254 = scmp.ne.s32.totalorder %s245, %s246
      %p255 = scmp.eq.s32.totalorder %s25, 0
      %p256 = por %p254, %p255
      %p257 = scmp.ne.s32.totalorder %s245, %s246
      %p258 = scmp.eq.s32.totalorder %s26, 1
      %p259 = por %p257, %p258
      %p261 = scmp.ne.s32.totalorder %s246, %s260
      %p262 = scmp.eq.s32.totalorder %s26, 0
      %p263 = por %p261, %p262
      %s264 = ssub.s32 %s20, %s27
      %p265 = scmp.eq.s32.totalorder %s264, 0
      %s267 = sadd.s32 %s266, 1
      %s268 = scalar_select %p265, %s266, %s267
      %p271 = pneg %p265
      %p272 = scmp.eq.s32.totalorder %s20, 1
      %p273 = por %p271, %p272
      %p274 = scmp.ne.s32.totalorder %s266, %s269
      %p275 = scmp.eq.s32.totalorder %s20, 0
      %p276 = por %p274, %p275
      %p277 = scmp.ne.s32.totalorder %s266, %s269
      %p278 = scmp.eq.s32.totalorder %s25, 1
      %p279 = por %p277, %p278
      %p280 = scmp.ne.s32.totalorder %s269, %s270
      %p281 = scmp.eq.s32.totalorder %s25, 0
      %p282 = por %p280, %p281
      %p283 = scmp.ne.s32.totalorder %s269, %s270
      %p284 = scmp.eq.s32.totalorder %s26, 1
      %p285 = por %p283, %p284
      %p287 = scmp.ne.s32.totalorder %s270, %s286
      %p288 = scmp.eq.s32.totalorder %s26, 0
      %p289 = por %p287, %p288
      %p290 = scmp.le.s32.totalorder 1, %s20
      %p291 = scmp.lt.s32.totalorder %s20, 3
      %p292 = pnand %p290, %p291
      %p293 = pneg %p292
      // Predicated region
      $region9: #{cnn1d_forward.1} parent=5 // pred_check
        _
      $region10: #{cnn1d_forward.1} parent=5 // pred_check_branch
        %295 = sbr.rel (%p292) target = $region12
      $region11: #{cnn1d_forward.1} parent=5 // pred_region
        %s296 = ssub.s32 %s20, 1
        // Predicated region
        $region13: #{cnn1d_forward.1} parent=11 // pred_check
          %p297 = pneg %p67
        $region14: #{cnn1d_forward.1} parent=11 // pred_check_branch
          %299 = sbr.rel (%p297) target = $region16
        $region15: #{cnn1d_forward.1} parent=11 // pred_region
          _
        $region16: #{cnn1d_forward.1} parent=11 // pred_fallthru
          _
        // Predicated region
        $region17: #{cnn1d_forward.1} parent=11 // pred_check
          %p300 = pneg %p88
        $region18: #{cnn1d_forward.1} parent=11 // pred_check_branch
          %302 = sbr.rel (%p300) target = $region20
        $region19: #{cnn1d_forward.1} parent=11 // pred_region
          _
        $region20: #{cnn1d_forward.1} parent=11 // pred_fallthru
          _
        // Predicated region
        $region21: #{cnn1d_forward.1} parent=11 // pred_check
          %p303 = pneg %p109
        $region22: #{cnn1d_forward.1} parent=11 // pred_check_branch
          %305 = sbr.rel (%p303) target = $region24
        $region23: #{cnn1d_forward.1} parent=11 // pred_region
          _
        $region24: #{cnn1d_forward.1} parent=11 // pred_fallthru
          _
        // Predicated region
        $region25: #{cnn1d_forward.1} parent=11 // pred_check
          %p306 = pneg %p130
        $region26: #{cnn1d_forward.1} parent=11 // pred_check_branch
          %308 = sbr.rel (%p306) target = $region28
        $region27: #{cnn1d_forward.1} parent=11 // pred_region
          _
        $region28: #{cnn1d_forward.1} parent=11 // pred_fallthru
          _
        // Predicated region
        $region29: #{cnn1d_forward.1} parent=11 // pred_check
          %p309 = pneg %p151
        $region30: #{cnn1d_forward.1} parent=11 // pred_check_branch
          %311 = sbr.rel (%p309) target = $region32
        $region31: #{cnn1d_forward.1} parent=11 // pred_region
          _
        $region32: #{cnn1d_forward.1} parent=11 // pred_fallthru
          _
        // Predicated region
        $region33: #{cnn1d_forward.1} parent=11 // pred_check
          %p312 = pneg %p172
        $region34: #{cnn1d_forward.1} parent=11 // pred_check_branch
          %314 = sbr.rel (%p312) target = $region36
        $region35: #{cnn1d_forward.1} parent=11 // pred_region
          _
        $region36: #{cnn1d_forward.1} parent=11 // pred_fallthru
          _
        // Predicated region
        $region37: #{cnn1d_forward.1} parent=11 // pred_check
          %p315 = pneg %p193
        $region38: #{cnn1d_forward.1} parent=11 // pred_check_branch
          %317 = sbr.rel (%p315) target = $region40
        $region39: #{cnn1d_forward.1} parent=11 // pred_region
          _
        $region40: #{cnn1d_forward.1} parent=11 // pred_fallthru
          _
        // Predicated region
        $region41: #{cnn1d_forward.1} parent=11 // pred_check
          %p318 = pneg %p214
        $region42: #{cnn1d_forward.1} parent=11 // pred_check_branch
          %320 = sbr.rel (%p318) target = $region44
        $region43: #{cnn1d_forward.1} parent=11 // pred_region
          _
        $region44: #{cnn1d_forward.1} parent=11 // pred_fallthru
          _
        // Predicated region
        $region45: #{cnn1d_forward.1} parent=11 // pred_check
          %p321 = pneg %p235
        $region46: #{cnn1d_forward.1} parent=11 // pred_check_branch
          %323 = sbr.rel (%p321) target = $region48
        $region47: #{cnn1d_forward.1} parent=11 // pred_region
          _
        $region48: #{cnn1d_forward.1} parent=11 // pred_fallthru
          _
        // Predicated region
        $region49: #{cnn1d_forward.1} parent=11 // pred_check
          %p324 = pneg %p256
        $region50: #{cnn1d_forward.1} parent=11 // pred_check_branch
          %326 = sbr.rel (%p324) target = $region52
        $region51: #{cnn1d_forward.1} parent=11 // pred_region
          _
        $region52: #{cnn1d_forward.1} parent=11 // pred_fallthru
          _
      $region12: #{cnn1d_forward.1} parent=5 // pred_fallthru
        _
      %p327 = scmp.lt.s32.totalorder %s20, 2
      // Predicated region
      $region53: #{cnn1d_forward.1} parent=5 // pred_check
        %p328 = pneg %p327
      $region54: #{cnn1d_forward.1} parent=5 // pred_check_branch
        %330 = sbr.rel (%p328) target = $region56
      $region55: #{cnn1d_forward.1} parent=5 // pred_region
        // Predicated region
        $region57: #{cnn1d_forward.1} parent=55 // pred_check
          %p331 = pneg %p40
        $region58: #{cnn1d_forward.1} parent=55 // pred_check_branch
          %333 = sbr.rel (%p331) target = $region60
        $region59: #{cnn1d_forward.1} parent=55 // pred_region
          %p334 = scmp.lt.s32.totalorder %s20, 1
          %s335 = scalar_select %p334, %s20, 1
          %s336 = smul.addr %s335, 11
          %s337 = smul.addr %s336, 8
          %s338 = scalar_lea.vmem %s0, %s337
        $region60: #{cnn1d_forward.1} parent=55 // pred_fallthru
          _
      $region56: #{cnn1d_forward.1} parent=5 // pred_fallthru
        _
      %p339 = scmp.le.s32.totalorder 1, %s20
      %p340 = scmp.lt.s32.totalorder %s20, 3
      %p341 = pnand %p339, %p340
      %p342 = pneg %p341
      // Predicated region
      $region61: #{cnn1d_forward.1} parent=5 // pred_check
        _
      $region62: #{cnn1d_forward.1} parent=5 // pred_check_branch
        %344 = sbr.rel (%p341) target = $region64
      $region63: #{cnn1d_forward.1} parent=5 // pred_region
        %s345 = ssub.s32 %s20, 1
        %p346 = scmp.lt.s32.totalorder %s25, 1
        %s347 = scalar_select %p346, %s25, 1
        %s348 = smul.addr %s347, 11
        %s349 = smul.addr %s348, 8
        %s350 = scalar_lea.vmem %s0, %s349
        %p351 = pneg %p46
        %p352 = pneg %p43
        %p353 = pneg %p67
        %p354 = pneg %p64
        %p355 = pneg %p88
        %p356 = pneg %p85
        %p357 = pneg %p109
        %p358 = pneg %p106
        %p359 = pneg %p130
        %p360 = pneg %p127
        %p361 = pneg %p151
        %p362 = pneg %p148
        %p363 = pneg %p172
        %p364 = pneg %p169
        %p365 = pneg %p193
        %p366 = pneg %p190
        %p367 = pneg %p214
        %p368 = pneg %p211
        %p369 = pneg %p235
        %p370 = pneg %p232
        %p371 = pneg %p256
        %p372 = pneg %p253
        %p373 = pneg %p282
        %p374 = pneg %p279
        %s375 = sand.u32 %s269, 1
        %s376 = scalar_lea.sflag [#allocation5], %s375
        %s377 = sand.u32 %s269, 1
        %s378 = scalar_lea.vmem [#allocation4], %s377
        %p379 = scmp.lt.s32.totalorder %s25, 1
        %s380 = scalar_select %p379, %s25, 1
        %s381 = smul.addr %s380, 11
        %s382 = smul.addr %s381, 8
        %s383 = scalar_lea.vmem %s0, %s382
        %v385 = vld [vmem:[%s383] sm:$0xff]
        %v386 = vld [vmem:[%s383 + $0x8] sm:$0xff]
        %v387 = vld [vmem:[%s383 + $0x10] sm:$0xff]
        %v388 = vld [vmem:[%s383 + $0x18] sm:$0xff]
        %v389 = vld [vmem:[%s383 + $0x20] sm:$0xff]
        %v390 = vld [vmem:[%s383 + $0x28] sm:$0xff]
        %v391 = vld [vmem:[%s383 + $0x30] sm:$0xff]
        %v392 = vld [vmem:[%s383 + $0x38] sm:$0xff]
        %v393 = vld [vmem:[%s383 + $0x40] sm:$0xff]
        %v394 = vld [vmem:[%s383 + $0x48] sm:$0xff]
        %v395 = vld [vmem:[%s383 + $0x50] sm:$0xf]
        %v396 = vld [vmem:[%s1] sm:$0x1]
        %398 = vset.pattern.permute.xlu0 0
        %399 = vperm.xlu0 %398, %v385
        %v400 = vpop.permute.xlu0 %399
        %403 = vset.pattern.permute.xlu0 0
        %404 = vperm.xlu0 %403, %v386
        %v405 = vpop.permute.xlu0 %404
        %408 = vset.pattern.permute.xlu0 0
        %409 = vperm.xlu0 %408, %v387
        %v410 = vpop.permute.xlu0 %409
        %413 = vset.pattern.permute.xlu0 0
        %414 = vperm.xlu0 %413, %v388
        %v415 = vpop.permute.xlu0 %414
        %418 = vset.pattern.permute.xlu0 0
        %419 = vperm.xlu0 %418, %v389
        %v420 = vpop.permute.xlu0 %419
        %423 = vset.pattern.permute.xlu0 0
        %424 = vperm.xlu0 %423, %v390
        %v425 = vpop.permute.xlu0 %424
        %428 = vset.pattern.permute.xlu0 0
        %429 = vperm.xlu0 %428, %v391
        %v430 = vpop.permute.xlu0 %429
        %433 = vset.pattern.permute.xlu0 0
        %434 = vperm.xlu0 %433, %v392
        %v435 = vpop.permute.xlu0 %434
        %438 = vset.pattern.permute.xlu0 0
        %439 = vperm.xlu0 %438, %v393
        %v440 = vpop.permute.xlu0 %439
        %443 = vset.pattern.permute.xlu0 0
        %444 = vperm.xlu0 %443, %v394
        %v445 = vpop.permute.xlu0 %444
        %448 = vset.pattern.permute.xlu0 0
        %449 = vperm.xlu0 %448, %v395
        %v450 = vpop.permute.xlu0 %449
        %v452 = vlaneseq
        %v453 = vshrl.u32 %v452, 7
        %v454 = vsub.s32 0, %v453
        %v455 = vrot.slane %v396, %v454
        %v456 = vmul.f32 %v400, %v455
        %v457 = vmul.f32 %v405, %v455
        %v458 = vmul.f32 %v410, %v455
        %v459 = vmul.f32 %v415, %v455
        %v460 = vmul.f32 %v420, %v455
        %v461 = vmul.f32 %v425, %v455
        %v462 = vmul.f32 %v430, %v455
        %v463 = vmul.f32 %v435, %v455
        %v464 = vmul.f32 %v440, %v455
        %v465 = vmul.f32 %v445, %v455
        %v466 = vmul.f32 %v450, %v455
        %v467 = vld [vmem:[%s1 + $0x1] sm:$0x1]
        %468 = vset.pattern.permute.xlu0 1
        %469 = vperm.xlu0 %468, %v385
        %v470 = vpop.permute.xlu0 %469
        %472 = vset.pattern.permute.xlu0 1
        %473 = vperm.xlu0 %472, %v386
        %v474 = vpop.permute.xlu0 %473
        %476 = vset.pattern.permute.xlu0 1
        %477 = vperm.xlu0 %476, %v387
        %v478 = vpop.permute.xlu0 %477
        %480 = vset.pattern.permute.xlu0 1
        %481 = vperm.xlu0 %480, %v388
        %v482 = vpop.permute.xlu0 %481
        %484 = vset.pattern.permute.xlu0 1
        %485 = vperm.xlu0 %484, %v389
        %v486 = vpop.permute.xlu0 %485
        %488 = vset.pattern.permute.xlu0 1
        %489 = vperm.xlu0 %488, %v390
        %v490 = vpop.permute.xlu0 %489
        %492 = vset.pattern.permute.xlu0 1
        %493 = vperm.xlu0 %492, %v391
        %v494 = vpop.permute.xlu0 %493
        %496 = vset.pattern.permute.xlu0 1
        %497 = vperm.xlu0 %496, %v392
        %v498 = vpop.permute.xlu0 %497
        %500 = vset.pattern.permute.xlu0 1
        %501 = vperm.xlu0 %500, %v393
        %v502 = vpop.permute.xlu0 %501
        %504 = vset.pattern.permute.xlu0 1
        %505 = vperm.xlu0 %504, %v394
        %v506 = vpop.permute.xlu0 %505
        %508 = vset.pattern.permute.xlu0 1
        %509 = vperm.xlu0 %508, %v395
        %v510 = vpop.permute.xlu0 %509
        %v512 = vlaneseq
        %v513 = vshrl.u32 %v512, 7
        %v514 = vsub.s32 0, %v513
        %v515 = vrot.slane %v467, %v514
        %v516 = vmul.f32 %v470, %v515
        %v517 = vmul.f32 %v474, %v515
        %v518 = vmul.f32 %v478, %v515
        %v519 = vmul.f32 %v482, %v515
        %v520 = vmul.f32 %v486, %v515
        %v521 = vmul.f32 %v490, %v515
        %v522 = vmul.f32 %v494, %v515
        %v523 = vmul.f32 %v498, %v515
        %v524 = vmul.f32 %v502, %v515
        %v525 = vmul.f32 %v506, %v515
        %v526 = vmul.f32 %v510, %v515
        %v527 = vadd.f32 %v456, %v516
        %v528 = vadd.f32 %v457, %v517
        %v529 = vadd.f32 %v458, %v518
        %v530 = vadd.f32 %v459, %v519
        %v531 = vadd.f32 %v460, %v520
        %v532 = vadd.f32 %v461, %v521
        %v533 = vadd.f32 %v462, %v522
        %v534 = vadd.f32 %v463, %v523
        %v535 = vadd.f32 %v464, %v524
        %v536 = vadd.f32 %v465, %v525
        %v537 = vadd.f32 %v466, %v526
        %v538 = vld [vmem:[%s1 + $0x2] sm:$0x1]
        %539 = vset.pattern.permute.xlu0 2
        %540 = vperm.xlu0 %539, %v385
        %v541 = vpop.permute.xlu0 %540
        %543 = vset.pattern.permute.xlu0 2
        %544 = vperm.xlu0 %543, %v386
        %v545 = vpop.permute.xlu0 %544
        %547 = vset.pattern.permute.xlu0 2
        %548 = vperm.xlu0 %547, %v387
        %v549 = vpop.permute.xlu0 %548
        %551 = vset.pattern.permute.xlu0 2
        %552 = vperm.xlu0 %551, %v388
        %v553 = vpop.permute.xlu0 %552
        %555 = vset.pattern.permute.xlu0 2
        %556 = vperm.xlu0 %555, %v389
        %v557 = vpop.permute.xlu0 %556
        %559 = vset.pattern.permute.xlu0 2
        %560 = vperm.xlu0 %559, %v390
        %v561 = vpop.permute.xlu0 %560
        %563 = vset.pattern.permute.xlu0 2
        %564 = vperm.xlu0 %563, %v391
        %v565 = vpop.permute.xlu0 %564
        %567 = vset.pattern.permute.xlu0 2
        %568 = vperm.xlu0 %567, %v392
        %v569 = vpop.permute.xlu0 %568
        %571 = vset.pattern.permute.xlu0 2
        %572 = vperm.xlu0 %571, %v393
        %v573 = vpop.permute.xlu0 %572
        %575 = vset.pattern.permute.xlu0 2
        %576 = vperm.xlu0 %575, %v394
        %v577 = vpop.permute.xlu0 %576
        %579 = vset.pattern.permute.xlu0 2
        %580 = vperm.xlu0 %579, %v395
        %v581 = vpop.permute.xlu0 %580
        %v583 = vlaneseq
        %v584 = vshrl.u32 %v583, 7
        %v585 = vsub.s32 0, %v584
        %v586 = vrot.slane %v538, %v585
        %v587 = vmul.f32 %v541, %v586
        %v588 = vmul.f32 %v545, %v586
        %v589 = vmul.f32 %v549, %v586
        %v590 = vmul.f32 %v553, %v586
        %v591 = vmul.f32 %v557, %v586
        %v592 = vmul.f32 %v561, %v586
        %v593 = vmul.f32 %v565, %v586
        %v594 = vmul.f32 %v569, %v586
        %v595 = vmul.f32 %v573, %v586
        %v596 = vmul.f32 %v577, %v586
        %v597 = vmul.f32 %v581, %v586
        %v598 = vadd.f32 %v527, %v587
        %v599 = vadd.f32 %v528, %v588
        %v600 = vadd.f32 %v529, %v589
        %v601 = vadd.f32 %v530, %v590
        %v602 = vadd.f32 %v531, %v591
        %v603 = vadd.f32 %v532, %v592
        %v604 = vadd.f32 %v533, %v593
        %v605 = vadd.f32 %v534, %v594
        %v606 = vadd.f32 %v535, %v595
        %v607 = vadd.f32 %v536, %v596
        %v608 = vadd.f32 %v537, %v597
        %v609 = vld [vmem:[%s1 + $0x3] sm:$0x1]
        %610 = vset.pattern.permute.xlu0 3
        %611 = vperm.xlu0 %610, %v385
        %v612 = vpop.permute.xlu0 %611
        %614 = vset.pattern.permute.xlu0 3
        %615 = vperm.xlu0 %614, %v386
        %v616 = vpop.permute.xlu0 %615
        %618 = vset.pattern.permute.xlu0 3
        %619 = vperm.xlu0 %618, %v387
        %v620 = vpop.permute.xlu0 %619
        %622 = vset.pattern.permute.xlu0 3
        %623 = vperm.xlu0 %622, %v388
        %v624 = vpop.permute.xlu0 %623
        %626 = vset.pattern.permute.xlu0 3
        %627 = vperm.xlu0 %626, %v389
        %v628 = vpop.permute.xlu0 %627
        %630 = vset.pattern.permute.xlu0 3
        %631 = vperm.xlu0 %630, %v390
        %v632 = vpop.permute.xlu0 %631
        %634 = vset.pattern.permute.xlu0 3
        %635 = vperm.xlu0 %634, %v391
        %v636 = vpop.permute.xlu0 %635
        %638 = vset.pattern.permute.xlu0 3
        %639 = vperm.xlu0 %638, %v392
        %v640 = vpop.permute.xlu0 %639
        %642 = vset.pattern.permute.xlu0 3
        %643 = vperm.xlu0 %642, %v393
        %v644 = vpop.permute.xlu0 %643
        %646 = vset.pattern.permute.xlu0 3
        %647 = vperm.xlu0 %646, %v394
        %v648 = vpop.permute.xlu0 %647
        %650 = vset.pattern.permute.xlu0 3
        %651 = vperm.xlu0 %650, %v395
        %v652 = vpop.permute.xlu0 %651
        %v654 = vlaneseq
        %v655 = vshrl.u32 %v654, 7
        %v656 = vsub.s32 0, %v655
        %v657 = vrot.slane %v609, %v656
        %v658 = vmul.f32 %v612, %v657
        %v659 = vmul.f32 %v616, %v657
        %v660 = vmul.f32 %v620, %v657
        %v661 = vmul.f32 %v624, %v657
        %v662 = vmul.f32 %v628, %v657
        %v663 = vmul.f32 %v632, %v657
        %v664 = vmul.f32 %v636, %v657
        %v665 = vmul.f32 %v640, %v657
        %v666 = vmul.f32 %v644, %v657
        %v667 = vmul.f32 %v648, %v657
        %v668 = vmul.f32 %v652, %v657
        %v669 = vadd.f32 %v598, %v658
        %v670 = vadd.f32 %v599, %v659
        %v671 = vadd.f32 %v600, %v660
        %v672 = vadd.f32 %v601, %v661
        %v673 = vadd.f32 %v602, %v662
        %v674 = vadd.f32 %v603, %v663
        %v675 = vadd.f32 %v604, %v664
        %v676 = vadd.f32 %v605, %v665
        %v677 = vadd.f32 %v606, %v666
        %v678 = vadd.f32 %v607, %v667
        %v679 = vadd.f32 %v608, %v668
        %v680 = vld [vmem:[%s1 + $0x4] sm:$0x1]
        %681 = vset.pattern.permute.xlu0 4
        %682 = vperm.xlu0 %681, %v385
        %v683 = vpop.permute.xlu0 %682
        %685 = vset.pattern.permute.xlu0 4
        %686 = vperm.xlu0 %685, %v386
        %v687 = vpop.permute.xlu0 %686
        %689 = vset.pattern.permute.xlu0 4
        %690 = vperm.xlu0 %689, %v387
        %v691 = vpop.permute.xlu0 %690
        %693 = vset.pattern.permute.xlu0 4
        %694 = vperm.xlu0 %693, %v388
        %v695 = vpop.permute.xlu0 %694
        %697 = vset.pattern.permute.xlu0 4
        %698 = vperm.xlu0 %697, %v389
        %v699 = vpop.permute.xlu0 %698
        %701 = vset.pattern.permute.xlu0 4
        %702 = vperm.xlu0 %701, %v390
        %v703 = vpop.permute.xlu0 %702
        %705 = vset.pattern.permute.xlu0 4
        %706 = vperm.xlu0 %705, %v391
        %v707 = vpop.permute.xlu0 %706
        %709 = vset.pattern.permute.xlu0 4
        %710 = vperm.xlu0 %709, %v392
        %v711 = vpop.permute.xlu0 %710
        %713 = vset.pattern.permute.xlu0 4
        %714 = vperm.xlu0 %713, %v393
        %v715 = vpop.permute.xlu0 %714
        %717 = vset.pattern.permute.xlu0 4
        %718 = vperm.xlu0 %717, %v394
        %v719 = vpop.permute.xlu0 %718
        %721 = vset.pattern.permute.xlu0 4
        %722 = vperm.xlu0 %721, %v395
        %v723 = vpop.permute.xlu0 %722
        %v725 = vlaneseq
        %v726 = vshrl.u32 %v725, 7
        %v727 = vsub.s32 0, %v726
        %v728 = vrot.slane %v680, %v727
        %v729 = vmul.f32 %v683, %v728
        %v730 = vmul.f32 %v687, %v728
        %v731 = vmul.f32 %v691, %v728
        %v732 = vmul.f32 %v695, %v728
        %v733 = vmul.f32 %v699, %v728
        %v734 = vmul.f32 %v703, %v728
        %v735 = vmul.f32 %v707, %v728
        %v736 = vmul.f32 %v711, %v728
        %v737 = vmul.f32 %v715, %v728
        %v738 = vmul.f32 %v719, %v728
        %v739 = vmul.f32 %v723, %v728
        %v740 = vadd.f32 %v669, %v729
        %v741 = vadd.f32 %v670, %v730
        %v742 = vadd.f32 %v671, %v731
        %v743 = vadd.f32 %v672, %v732
        %v744 = vadd.f32 %v673, %v733
        %v745 = vadd.f32 %v674, %v734
        %v746 = vadd.f32 %v675, %v735
        %v747 = vadd.f32 %v676, %v736
        %v748 = vadd.f32 %v677, %v737
        %v749 = vadd.f32 %v678, %v738
        %v750 = vadd.f32 %v679, %v739
        %v751 = vld [vmem:[%s1 + $0x5] sm:$0x1]
        %752 = vset.pattern.permute.xlu0 5
        %753 = vperm.xlu0 %752, %v385
        %v754 = vpop.permute.xlu0 %753
        %756 = vset.pattern.permute.xlu0 5
        %757 = vperm.xlu0 %756, %v386
        %v758 = vpop.permute.xlu0 %757
        %760 = vset.pattern.permute.xlu0 5
        %761 = vperm.xlu0 %760, %v387
        %v762 = vpop.permute.xlu0 %761
        %764 = vset.pattern.permute.xlu0 5
        %765 = vperm.xlu0 %764, %v388
        %v766 = vpop.permute.xlu0 %765
        %768 = vset.pattern.permute.xlu0 5
        %769 = vperm.xlu0 %768, %v389
        %v770 = vpop.permute.xlu0 %769
        %772 = vset.pattern.permute.xlu0 5
        %773 = vperm.xlu0 %772, %v390
        %v774 = vpop.permute.xlu0 %773
        %776 = vset.pattern.permute.xlu0 5
        %777 = vperm.xlu0 %776, %v391
        %v778 = vpop.permute.xlu0 %777
        %780 = vset.pattern.permute.xlu0 5
        %781 = vperm.xlu0 %780, %v392
        %v782 = vpop.permute.xlu0 %781
        %784 = vset.pattern.permute.xlu0 5
        %785 = vperm.xlu0 %784, %v393
        %v786 = vpop.permute.xlu0 %785
        %788 = vset.pattern.permute.xlu0 5
        %789 = vperm.xlu0 %788, %v394
        %v790 = vpop.permute.xlu0 %789
        %792 = vset.pattern.permute.xlu0 5
        %793 = vperm.xlu0 %792, %v395
        %v794 = vpop.permute.xlu0 %793
        %v796 = vlaneseq
        %v797 = vshrl.u32 %v796, 7
        %v798 = vsub.s32 0, %v797
        %v799 = vrot.slane %v751, %v798
        %v800 = vmul.f32 %v754, %v799
        %v801 = vmul.f32 %v758, %v799
        %v802 = vmul.f32 %v762, %v799
        %v803 = vmul.f32 %v766, %v799
        %v804 = vmul.f32 %v770, %v799
        %v805 = vmul.f32 %v774, %v799
        %v806 = vmul.f32 %v778, %v799
        %v807 = vmul.f32 %v782, %v799
        %v808 = vmul.f32 %v786, %v799
        %v809 = vmul.f32 %v790, %v799
        %v810 = vmul.f32 %v794, %v799
        %v811 = vadd.f32 %v740, %v800
        %v812 = vadd.f32 %v741, %v801
        %v813 = vadd.f32 %v742, %v802
        %v814 = vadd.f32 %v743, %v803
        %v815 = vadd.f32 %v744, %v804
        %v816 = vadd.f32 %v745, %v805
        %v817 = vadd.f32 %v746, %v806
        %v818 = vadd.f32 %v747, %v807
        %v819 = vadd.f32 %v748, %v808
        %v820 = vadd.f32 %v749, %v809
        %v821 = vadd.f32 %v750, %v810
        %v822 = vld [vmem:[%s1 + $0x6] sm:$0x1]
        %823 = vset.pattern.permute.xlu0 6
        %824 = vperm.xlu0 %823, %v385
        %v825 = vpop.permute.xlu0 %824
        %827 = vset.pattern.permute.xlu0 6
        %828 = vperm.xlu0 %827, %v386
        %v829 = vpop.permute.xlu0 %828
        %831 = vset.pattern.permute.xlu0 6
        %832 = vperm.xlu0 %831, %v387
        %v833 = vpop.permute.xlu0 %832
        %835 = vset.pattern.permute.xlu0 6
        %836 = vperm.xlu0 %835, %v388
        %v837 = vpop.permute.xlu0 %836
        %839 = vset.pattern.permute.xlu0 6
        %840 = vperm.xlu0 %839, %v389
        %v841 = vpop.permute.xlu0 %840
        %843 = vset.pattern.permute.xlu0 6
        %844 = vperm.xlu0 %843, %v390
        %v845 = vpop.permute.xlu0 %844
        %847 = vset.pattern.permute.xlu0 6
        %848 = vperm.xlu0 %847, %v391
        %v849 = vpop.permute.xlu0 %848
        %851 = vset.pattern.permute.xlu0 6
        %852 = vperm.xlu0 %851, %v392
        %v853 = vpop.permute.xlu0 %852
        %855 = vset.pattern.permute.xlu0 6
        %856 = vperm.xlu0 %855, %v393
        %v857 = vpop.permute.xlu0 %856
        %859 = vset.pattern.permute.xlu0 6
        %860 = vperm.xlu0 %859, %v394
        %v861 = vpop.permute.xlu0 %860
        %863 = vset.pattern.permute.xlu0 6
        %864 = vperm.xlu0 %863, %v395
        %v865 = vpop.permute.xlu0 %864
        %v867 = vlaneseq
        %v868 = vshrl.u32 %v867, 7
        %v869 = vsub.s32 0, %v868
        %v870 = vrot.slane %v822, %v869
        %v871 = vmul.f32 %v825, %v870
        %v872 = vmul.f32 %v829, %v870
        %v873 = vmul.f32 %v833, %v870
        %v874 = vmul.f32 %v837, %v870
        %v875 = vmul.f32 %v841, %v870
        %v876 = vmul.f32 %v845, %v870
        %v877 = vmul.f32 %v849, %v870
        %v878 = vmul.f32 %v853, %v870
        %v879 = vmul.f32 %v857, %v870
        %v880 = vmul.f32 %v861, %v870
        %v881 = vmul.f32 %v865, %v870
        %v882 = vadd.f32 %v811, %v871
        %v883 = vadd.f32 %v812, %v872
        %v884 = vadd.f32 %v813, %v873
        %v885 = vadd.f32 %v814, %v874
        %v886 = vadd.f32 %v815, %v875
        %v887 = vadd.f32 %v816, %v876
        %v888 = vadd.f32 %v817, %v877
        %v889 = vadd.f32 %v818, %v878
        %v890 = vadd.f32 %v819, %v879
        %v891 = vadd.f32 %v820, %v880
        %v892 = vadd.f32 %v821, %v881
        %v893 = vld [vmem:[%s2] sm:$0x1]
        %v895 = vlaneseq
        %v896 = vshrl.u32 %v895, 7
        %v897 = vsub.s32 0, %v896
        %v898 = vrot.slane %v893, %v897
        %v900 = vadd.f32 %v882, %v898
        %v901 = vadd.f32 %v883, %v898
        %v902 = vadd.f32 %v884, %v898
        %v903 = vadd.f32 %v885, %v898
        %v904 = vadd.f32 %v886, %v898
        %v905 = vadd.f32 %v887, %v898
        %v906 = vadd.f32 %v888, %v898
        %v907 = vadd.f32 %v889, %v898
        %v908 = vadd.f32 %v890, %v898
        %v909 = vadd.f32 %v891, %v898
        %v910 = vadd.f32 %v892, %v898
        %v911 = vmax.f32 %v900, 0.0
        %v912 = vmax.f32 %v901, 0.0
        %v913 = vmax.f32 %v902, 0.0
        %v914 = vmax.f32 %v903, 0.0
        %v915 = vmax.f32 %v904, 0.0
        %v916 = vmax.f32 %v905, 0.0
        %v917 = vmax.f32 %v906, 0.0
        %v918 = vmax.f32 %v907, 0.0
        %v919 = vmax.f32 %v908, 0.0
        %v920 = vmax.f32 %v909, 0.0
        %v921 = vmax.f32 %v910, 0.0
        %922 = vst [vmem:[#allocation2] sm:$0xff] %v911
        %923 = vst [vmem:[#allocation2 + $0x8] sm:$0xff] %v912
        %924 = vst [vmem:[#allocation2 + $0x10] sm:$0xff] %v913
        %925 = vst [vmem:[#allocation2 + $0x18] sm:$0xff] %v914
        %926 = vst [vmem:[#allocation2 + $0x20] sm:$0xff] %v915
        %927 = vst [vmem:[#allocation2 + $0x28] sm:$0xff] %v916
        %928 = vst [vmem:[#allocation2 + $0x30] sm:$0xff] %v917
        %929 = vst [vmem:[#allocation2 + $0x38] sm:$0xff] %v918
        %930 = vst [vmem:[#allocation2 + $0x40] sm:$0xff] %v919
        %931 = vst [vmem:[#allocation2 + $0x48] sm:$0xff] %v920
        %932 = vst [vmem:[#allocation2 + $0x50] sm:$0xf] %v921
        %v933 = vld [vmem:[#allocation2] sm:$0x1]
        %v934 = vld [vmem:[#allocation2 + $0x1] sm:$0x1]
        %v935 = vmax.f32 %v933, %v934
        %v936 = vld [vmem:[#allocation2 + $0x2] sm:$0x1]
        %v937 = vmax.f32 %v935, %v936
        %v938 = vld [vmem:[#allocation2 + $0x3] sm:$0x1]
        %v939 = vmax.f32 %v937, %v938
        %v940 = vld [vmem:[#allocation2 + $0x4] sm:$0x1]
        %v941 = vmax.f32 %v939, %v940
        %v942 = vld [vmem:[#allocation2 + $0x5] sm:$0x1]
        %v943 = vmax.f32 %v941, %v942
        %v944 = vld [vmem:[#allocation2 + $0x6] sm:$0x1]
        %v945 = vmax.f32 %v943, %v944
        %946 = vst [vmem:[#allocation3] sm:$0x1] %v945
        %v947 = vld [vmem:[#allocation2 + $0x3] sm:$0x1]
        %v948 = vld [vmem:[#allocation2 + $0x4] sm:$0x1]
        %v949 = vmax.f32 %v947, %v948
        %v950 = vld [vmem:[#allocation2 + $0x5] sm:$0x1]
        %v951 = vmax.f32 %v949, %v950
        %v952 = vld [vmem:[#allocation2 + $0x6] sm:$0x1]
        %v953 = vmax.f32 %v951, %v952
        %v954 = vld [vmem:[#allocation2 + $0x7] sm:$0x1]
        %v955 = vmax.f32 %v953, %v954
        %v956 = vld [vmem:[#allocation2 + $0x8] sm:$0x1]
        %v957 = vmax.f32 %v955, %v956
        %v958 = vld [vmem:[#allocation2 + $0x9] sm:$0x1]
        %v959 = vmax.f32 %v957, %v958
        %960 = vst [vmem:[#allocation3 + $0x8] sm:$0x1] %v959
        %v961 = vld [vmem:[#allocation2 + $0x6] sm:$0x1]
        %v962 = vld [vmem:[#allocation2 + $0x7] sm:$0x1]
        %v963 = vmax.f32 %v961, %v962
        %v964 = vld [vmem:[#allocation2 + $0x8] sm:$0x1]
        %v965 = vmax.f32 %v963, %v964
        %v966 = vld [vmem:[#allocation2 + $0x9] sm:$0x1]
        %v967 = vmax.f32 %v965, %v966
        %v968 = vld [vmem:[#allocation2 + $0xa] sm:$0x1]
        %v969 = vmax.f32 %v967, %v968
        %v970 = vld [vmem:[#allocation2 + $0xb] sm:$0x1]
        %v971 = vmax.f32 %v969, %v970
        %v972 = vld [vmem:[#allocation2 + $0xc] sm:$0x1]
        %v973 = vmax.f32 %v971, %v972
        %974 = vst [vmem:[#allocation3 + $0x10] sm:$0x1] %v973
        %v975 = vld [vmem:[#allocation2 + $0x9] sm:$0x1]
        %v976 = vld [vmem:[#allocation2 + $0xa] sm:$0x1]
        %v977 = vmax.f32 %v975, %v976
        %v978 = vld [vmem:[#allocation2 + $0xb] sm:$0x1]
        %v979 = vmax.f32 %v977, %v978
        %v980 = vld [vmem:[#allocation2 + $0xc] sm:$0x1]
        %v981 = vmax.f32 %v979, %v980
        %v982 = vld [vmem:[#allocation2 + $0xd] sm:$0x1]
        %v983 = vmax.f32 %v981, %v982
        %v984 = vld [vmem:[#allocation2 + $0xe] sm:$0x1]
        %v985 = vmax.f32 %v983, %v984
        %v986 = vld [vmem:[#allocation2 + $0xf] sm:$0x1]
        %v987 = vmax.f32 %v985, %v986
        %988 = vst [vmem:[#allocation3 + $0x1] sm:$0x1] %v987
        %v989 = vld [vmem:[#allocation2 + $0xc] sm:$0x1]
        %v990 = vld [vmem:[#allocation2 + $0xd] sm:$0x1]
        %v991 = vmax.f32 %v989, %v990
        %v992 = vld [vmem:[#allocation2 + $0xe] sm:$0x1]
        %v993 = vmax.f32 %v991, %v992
        %v994 = vld [vmem:[#allocation2 + $0xf] sm:$0x1]
        %v995 = vmax.f32 %v993, %v994
        %v996 = vld [vmem:[#allocation2 + $0x10] sm:$0x1]
        %v997 = vmax.f32 %v995, %v996
        %v998 = vld [vmem:[#allocation2 + $0x11] sm:$0x1]
        %v999 = vmax.f32 %v997, %v998
        %v1000 = vld [vmem:[#allocation2 + $0x12] sm:$0x1]
        %v1001 = vmax.f32 %v999, %v1000
        %1002 = vst [vmem:[#allocation3 + $0x9] sm:$0x1] %v1001
        %v1003 = vld [vmem:[#allocation2 + $0xf] sm:$0x1]
        %v1004 = vld [vmem:[#allocation2 + $0x10] sm:$0x1]
        %v1005 = vmax.f32 %v1003, %v1004
        %v1006 = vld [vmem:[#allocation2 + $0x11] sm:$0x1]
        %v1007 = vmax.f32 %v1005, %v1006
        %v1008 = vld [vmem:[#allocation2 + $0x12] sm:$0x1]
        %v1009 = vmax.f32 %v1007, %v1008
        %v1010 = vld [vmem:[#allocation2 + $0x13] sm:$0x1]
        %v1011 = vmax.f32 %v1009, %v1010
        %v1012 = vld [vmem:[#allocation2 + $0x14] sm:$0x1]
        %v1013 = vmax.f32 %v1011, %v1012
        %v1014 = vld [vmem:[#allocation2 + $0x15] sm:$0x1]
        %v1015 = vmax.f32 %v1013, %v1014
        %1016 = vst [vmem:[#allocation3 + $0x11] sm:$0x1] %v1015
        %v1017 = vld [vmem:[#allocation2 + $0x12] sm:$0x1]
        %v1018 = vld [vmem:[#allocation2 + $0x13] sm:$0x1]
        %v1019 = vmax.f32 %v1017, %v1018
        %v1020 = vld [vmem:[#allocation2 + $0x14] sm:$0x1]
        %v1021 = vmax.f32 %v1019, %v1020
        %v1022 = vld [vmem:[#allocation2 + $0x15] sm:$0x1]
        %v1023 = vmax.f32 %v1021, %v1022
        %v1024 = vld [vmem:[#allocation2 + $0x16] sm:$0x1]
        %v1025 = vmax.f32 %v1023, %v1024
        %v1026 = vld [vmem:[#allocation2 + $0x17] sm:$0x1]
        %v1027 = vmax.f32 %v1025, %v1026
        %v1028 = vld [vmem:[#allocation2 + $0x18] sm:$0x1]
        %v1029 = vmax.f32 %v1027, %v1028
        %1030 = vst [vmem:[#allocation3 + $0x2] sm:$0x1] %v1029
        %v1031 = vld [vmem:[#allocation2 + $0x15] sm:$0x1]
        %v1032 = vld [vmem:[#allocation2 + $0x16] sm:$0x1]
        %v1033 = vmax.f32 %v1031, %v1032
        %v1034 = vld [vmem:[#allocation2 + $0x17] sm:$0x1]
        %v1035 = vmax.f32 %v1033, %v1034
        %v1036 = vld [vmem:[#allocation2 + $0x18] sm:$0x1]
        %v1037 = vmax.f32 %v1035, %v1036
        %v1038 = vld [vmem:[#allocation2 + $0x19] sm:$0x1]
        %v1039 = vmax.f32 %v1037, %v1038
        %v1040 = vld [vmem:[#allocation2 + $0x1a] sm:$0x1]
        %v1041 = vmax.f32 %v1039, %v1040
        %v1042 = vld [vmem:[#allocation2 + $0x1b] sm:$0x1]
        %v1043 = vmax.f32 %v1041, %v1042
        %1044 = vst [vmem:[#allocation3 + $0xa] sm:$0x1] %v1043
        %v1045 = vld [vmem:[#allocation2 + $0x18] sm:$0x1]
        %v1046 = vld [vmem:[#allocation2 + $0x19] sm:$0x1]
        %v1047 = vmax.f32 %v1045, %v1046
        %v1048 = vld [vmem:[#allocation2 + $0x1a] sm:$0x1]
        %v1049 = vmax.f32 %v1047, %v1048
        %v1050 = vld [vmem:[#allocation2 + $0x1b] sm:$0x1]
        %v1051 = vmax.f32 %v1049, %v1050
        %v1052 = vld [vmem:[#allocation2 + $0x1c] sm:$0x1]
        %v1053 = vmax.f32 %v1051, %v1052
        %v1054 = vld [vmem:[#allocation2 + $0x1d] sm:$0x1]
        %v1055 = vmax.f32 %v1053, %v1054
        %v1056 = vld [vmem:[#allocation2 + $0x1e] sm:$0x1]
        %v1057 = vmax.f32 %v1055, %v1056
        %1058 = vst [vmem:[#allocation3 + $0x12] sm:$0x1] %v1057
        %v1059 = vld [vmem:[#allocation2 + $0x1b] sm:$0x1]
        %v1060 = vld [vmem:[#allocation2 + $0x1c] sm:$0x1]
        %v1061 = vmax.f32 %v1059, %v1060
        %v1062 = vld [vmem:[#allocation2 + $0x1d] sm:$0x1]
        %v1063 = vmax.f32 %v1061, %v1062
        %v1064 = vld [vmem:[#allocation2 + $0x1e] sm:$0x1]
        %v1065 = vmax.f32 %v1063, %v1064
        %v1066 = vld [vmem:[#allocation2 + $0x1f] sm:$0x1]
        %v1067 = vmax.f32 %v1065, %v1066
        %v1068 = vld [vmem:[#allocation2 + $0x20] sm:$0x1]
        %v1069 = vmax.f32 %v1067, %v1068
        %v1070 = vld [vmem:[#allocation2 + $0x21] sm:$0x1]
        %v1071 = vmax.f32 %v1069, %v1070
        %1072 = vst [vmem:[#allocation3 + $0x3] sm:$0x1] %v1071
        %v1073 = vld [vmem:[#allocation2 + $0x1e] sm:$0x1]
        %v1074 = vld [vmem:[#allocation2 + $0x1f] sm:$0x1]
        %v1075 = vmax.f32 %v1073, %v1074
        %v1076 = vld [vmem:[#allocation2 + $0x20] sm:$0x1]
        %v1077 = vmax.f32 %v1075, %v1076
        %v1078 = vld [vmem:[#allocation2 + $0x21] sm:$0x1]
        %v1079 = vmax.f32 %v1077, %v1078
        %v1080 = vld [vmem:[#allocation2 + $0x22] sm:$0x1]
        %v1081 = vmax.f32 %v1079, %v1080
        %v1082 = vld [vmem:[#allocation2 + $0x23] sm:$0x1]
        %v1083 = vmax.f32 %v1081, %v1082
        %v1084 = vld [vmem:[#allocation2 + $0x24] sm:$0x1]
        %v1085 = vmax.f32 %v1083, %v1084
        %1086 = vst [vmem:[#allocation3 + $0xb] sm:$0x1] %v1085
        %v1087 = vld [vmem:[#allocation2 + $0x21] sm:$0x1]
        %v1088 = vld [vmem:[#allocation2 + $0x22] sm:$0x1]
        %v1089 = vmax.f32 %v1087, %v1088
        %v1090 = vld [vmem:[#allocation2 + $0x23] sm:$0x1]
        %v1091 = vmax.f32 %v1089, %v1090
        %v1092 = vld [vmem:[#allocation2 + $0x24] sm:$0x1]
        %v1093 = vmax.f32 %v1091, %v1092
        %v1094 = vld [vmem:[#allocation2 + $0x25] sm:$0x1]
        %v1095 = vmax.f32 %v1093, %v1094
        %v1096 = vld [vmem:[#allocation2 + $0x26] sm:$0x1]
        %v1097 = vmax.f32 %v1095, %v1096
        %v1098 = vld [vmem:[#allocation2 + $0x27] sm:$0x1]
        %v1099 = vmax.f32 %v1097, %v1098
        %1100 = vst [vmem:[#allocation3 + $0x13] sm:$0x1] %v1099
        %v1101 = vld [vmem:[#allocation2 + $0x24] sm:$0x1]
        %v1102 = vld [vmem:[#allocation2 + $0x25] sm:$0x1]
        %v1103 = vmax.f32 %v1101, %v1102
        %v1104 = vld [vmem:[#allocation2 + $0x26] sm:$0x1]
        %v1105 = vmax.f32 %v1103, %v1104
        %v1106 = vld [vmem:[#allocation2 + $0x27] sm:$0x1]
        %v1107 = vmax.f32 %v1105, %v1106
        %v1108 = vld [vmem:[#allocation2 + $0x28] sm:$0x1]
        %v1109 = vmax.f32 %v1107, %v1108
        %v1110 = vld [vmem:[#allocation2 + $0x29] sm:$0x1]
        %v1111 = vmax.f32 %v1109, %v1110
        %v1112 = vld [vmem:[#allocation2 + $0x2a] sm:$0x1]
        %v1113 = vmax.f32 %v1111, %v1112
        %1114 = vst [vmem:[#allocation3 + $0x4] sm:$0x1] %v1113
        %v1115 = vld [vmem:[#allocation2 + $0x27] sm:$0x1]
        %v1116 = vld [vmem:[#allocation2 + $0x28] sm:$0x1]
        %v1117 = vmax.f32 %v1115, %v1116
        %v1118 = vld [vmem:[#allocation2 + $0x29] sm:$0x1]
        %v1119 = vmax.f32 %v1117, %v1118
        %v1120 = vld [vmem:[#allocation2 + $0x2a] sm:$0x1]
        %v1121 = vmax.f32 %v1119, %v1120
        %v1122 = vld [vmem:[#allocation2 + $0x2b] sm:$0x1]
        %v1123 = vmax.f32 %v1121, %v1122
        %v1124 = vld [vmem:[#allocation2 + $0x2c] sm:$0x1]
        %v1125 = vmax.f32 %v1123, %v1124
        %v1126 = vld [vmem:[#allocation2 + $0x2d] sm:$0x1]
        %v1127 = vmax.f32 %v1125, %v1126
        %1128 = vst [vmem:[#allocation3 + $0xc] sm:$0x1] %v1127
        %v1129 = vld [vmem:[#allocation2 + $0x2a] sm:$0x1]
        %v1130 = vld [vmem:[#allocation2 + $0x2b] sm:$0x1]
        %v1131 = vmax.f32 %v1129, %v1130
        %v1132 = vld [vmem:[#allocation2 + $0x2c] sm:$0x1]
        %v1133 = vmax.f32 %v1131, %v1132
        %v1134 = vld [vmem:[#allocation2 + $0x2d] sm:$0x1]
        %v1135 = vmax.f32 %v1133, %v1134
        %v1136 = vld [vmem:[#allocation2 + $0x2e] sm:$0x1]
        %v1137 = vmax.f32 %v1135, %v1136
        %v1138 = vld [vmem:[#allocation2 + $0x2f] sm:$0x1]
        %v1139 = vmax.f32 %v1137, %v1138
        %v1140 = vld [vmem:[#allocation2 + $0x30] sm:$0x1]
        %v1141 = vmax.f32 %v1139, %v1140
        %1142 = vst [vmem:[#allocation3 + $0x14] sm:$0x1] %v1141
        %v1143 = vld [vmem:[#allocation2 + $0x2d] sm:$0x1]
        %v1144 = vld [vmem:[#allocation2 + $0x2e] sm:$0x1]
        %v1145 = vmax.f32 %v1143, %v1144
        %v1146 = vld [vmem:[#allocation2 + $0x2f] sm:$0x1]
        %v1147 = vmax.f32 %v1145, %v1146
        %v1148 = vld [vmem:[#allocation2 + $0x30] sm:$0x1]
        %v1149 = vmax.f32 %v1147, %v1148
        %v1150 = vld [vmem:[#allocation2 + $0x31] sm:$0x1]
        %v1151 = vmax.f32 %v1149, %v1150
        %v1152 = vld [vmem:[#allocation2 + $0x32] sm:$0x1]
        %v1153 = vmax.f32 %v1151, %v1152
        %v1154 = vld [vmem:[#allocation2 + $0x33] sm:$0x1]
        %v1155 = vmax.f32 %v1153, %v1154
        %1156 = vst [vmem:[#allocation3 + $0x5] sm:$0x1] %v1155
        %v1157 = vld [vmem:[#allocation2 + $0x30] sm:$0x1]
        %v1158 = vld [vmem:[#allocation2 + $0x31] sm:$0x1]
        %v1159 = vmax.f32 %v1157, %v1158
        %v1160 = vld [vmem:[#allocation2 + $0x32] sm:$0x1]
        %v1161 = vmax.f32 %v1159, %v1160
        %v1162 = vld [vmem:[#allocation2 + $0x33] sm:$0x1]
        %v1163 = vmax.f32 %v1161, %v1162
        %v1164 = vld [vmem:[#allocation2 + $0x34] sm:$0x1]
        %v1165 = vmax.f32 %v1163, %v1164
        %v1166 = vld [vmem:[#allocation2 + $0x35] sm:$0x1]
        %v1167 = vmax.f32 %v1165, %v1166
        %v1168 = vld [vmem:[#allocation2 + $0x36] sm:$0x1]
        %v1169 = vmax.f32 %v1167, %v1168
        %1170 = vst [vmem:[#allocation3 + $0xd] sm:$0x1] %v1169
        %v1171 = vld [vmem:[#allocation2 + $0x33] sm:$0x1]
        %v1172 = vld [vmem:[#allocation2 + $0x34] sm:$0x1]
        %v1173 = vmax.f32 %v1171, %v1172
        %v1174 = vld [vmem:[#allocation2 + $0x35] sm:$0x1]
        %v1175 = vmax.f32 %v1173, %v1174
        %v1176 = vld [vmem:[#allocation2 + $0x36] sm:$0x1]
        %v1177 = vmax.f32 %v1175, %v1176
        %v1178 = vld [vmem:[#allocation2 + $0x37] sm:$0x1]
        %v1179 = vmax.f32 %v1177, %v1178
        %v1180 = vld [vmem:[#allocation2 + $0x38] sm:$0x1]
        %v1181 = vmax.f32 %v1179, %v1180
        %v1182 = vld [vmem:[#allocation2 + $0x39] sm:$0x1]
        %v1183 = vmax.f32 %v1181, %v1182
        %1184 = vst [vmem:[#allocation3 + $0x15] sm:$0x1] %v1183
        %v1185 = vld [vmem:[#allocation2 + $0x36] sm:$0x1]
        %v1186 = vld [vmem:[#allocation2 + $0x37] sm:$0x1]
        %v1187 = vmax.f32 %v1185, %v1186
        %v1188 = vld [vmem:[#allocation2 + $0x38] sm:$0x1]
        %v1189 = vmax.f32 %v1187, %v1188
        %v1190 = vld [vmem:[#allocation2 + $0x39] sm:$0x1]
        %v1191 = vmax.f32 %v1189, %v1190
        %v1192 = vld [vmem:[#allocation2 + $0x3a] sm:$0x1]
        %v1193 = vmax.f32 %v1191, %v1192
        %v1194 = vld [vmem:[#allocation2 + $0x3b] sm:$0x1]
        %v1195 = vmax.f32 %v1193, %v1194
        %v1196 = vld [vmem:[#allocation2 + $0x3c] sm:$0x1]
        %v1197 = vmax.f32 %v1195, %v1196
        %1198 = vst [vmem:[#allocation3 + $0x6] sm:$0x1] %v1197
        %v1199 = vld [vmem:[#allocation2 + $0x39] sm:$0x1]
        %v1200 = vld [vmem:[#allocation2 + $0x3a] sm:$0x1]
        %v1201 = vmax.f32 %v1199, %v1200
        %v1202 = vld [vmem:[#allocation2 + $0x3b] sm:$0x1]
        %v1203 = vmax.f32 %v1201, %v1202
        %v1204 = vld [vmem:[#allocation2 + $0x3c] sm:$0x1]
        %v1205 = vmax.f32 %v1203, %v1204
        %v1206 = vld [vmem:[#allocation2 + $0x3d] sm:$0x1]
        %v1207 = vmax.f32 %v1205, %v1206
        %v1208 = vld [vmem:[#allocation2 + $0x3e] sm:$0x1]
        %v1209 = vmax.f32 %v1207, %v1208
        %v1210 = vld [vmem:[#allocation2 + $0x3f] sm:$0x1]
        %v1211 = vmax.f32 %v1209, %v1210
        %1212 = vst [vmem:[#allocation3 + $0xe] sm:$0x1] %v1211
        %v1213 = vld [vmem:[#allocation2 + $0x3c] sm:$0x1]
        %v1214 = vld [vmem:[#allocation2 + $0x3d] sm:$0x1]
        %v1215 = vmax.f32 %v1213, %v1214
        %v1216 = vld [vmem:[#allocation2 + $0x3e] sm:$0x1]
        %v1217 = vmax.f32 %v1215, %v1216
        %v1218 = vld [vmem:[#allocation2 + $0x3f] sm:$0x1]
        %v1219 = vmax.f32 %v1217, %v1218
        %v1220 = vld [vmem:[#allocation2 + $0x40] sm:$0x1]
        %v1221 = vmax.f32 %v1219, %v1220
        %v1222 = vld [vmem:[#allocation2 + $0x41] sm:$0x1]
        %v1223 = vmax.f32 %v1221, %v1222
        %v1224 = vld [vmem:[#allocation2 + $0x42] sm:$0x1]
        %v1225 = vmax.f32 %v1223, %v1224
        %1226 = vst [vmem:[#allocation3 + $0x16] sm:$0x1] %v1225
        %v1227 = vld [vmem:[#allocation2 + $0x3f] sm:$0x1]
        %v1228 = vld [vmem:[#allocation2 + $0x40] sm:$0x1]
        %v1229 = vmax.f32 %v1227, %v1228
        %v1230 = vld [vmem:[#allocation2 + $0x41] sm:$0x1]
        %v1231 = vmax.f32 %v1229, %v1230
        %v1232 = vld [vmem:[#allocation2 + $0x42] sm:$0x1]
        %v1233 = vmax.f32 %v1231, %v1232
        %v1234 = vld [vmem:[#allocation2 + $0x43] sm:$0x1]
        %v1235 = vmax.f32 %v1233, %v1234
        %v1236 = vld [vmem:[#allocation2 + $0x44] sm:$0x1]
        %v1237 = vmax.f32 %v1235, %v1236
        %v1238 = vld [vmem:[#allocation2 + $0x45] sm:$0x1]
        %v1239 = vmax.f32 %v1237, %v1238
        %1240 = vst [vmem:[#allocation3 + $0x7] sm:$0x1] %v1239
        %v1241 = vld [vmem:[#allocation2 + $0x42] sm:$0x1]
        %v1242 = vld [vmem:[#allocation2 + $0x43] sm:$0x1]
        %v1243 = vmax.f32 %v1241, %v1242
        %v1244 = vld [vmem:[#allocation2 + $0x44] sm:$0x1]
        %v1245 = vmax.f32 %v1243, %v1244
        %v1246 = vld [vmem:[#allocation2 + $0x45] sm:$0x1]
        %v1247 = vmax.f32 %v1245, %v1246
        %v1248 = vld [vmem:[#allocation2 + $0x46] sm:$0x1]
        %v1249 = vmax.f32 %v1247, %v1248
        %v1250 = vld [vmem:[#allocation2 + $0x47] sm:$0x1]
        %v1251 = vmax.f32 %v1249, %v1250
        %v1252 = vld [vmem:[#allocation2 + $0x48] sm:$0x1]
        %v1253 = vmax.f32 %v1251, %v1252
        %1254 = vst [vmem:[#allocation3 + $0xf] sm:$0x1] %v1253
        %v1255 = vld [vmem:[#allocation2 + $0x45] sm:$0x1]
        %v1256 = vld [vmem:[#allocation2 + $0x46] sm:$0x1]
        %v1257 = vmax.f32 %v1255, %v1256
        %v1258 = vld [vmem:[#allocation2 + $0x47] sm:$0x1]
        %v1259 = vmax.f32 %v1257, %v1258
        %v1260 = vld [vmem:[#allocation2 + $0x48] sm:$0x1]
        %v1261 = vmax.f32 %v1259, %v1260
        %v1262 = vld [vmem:[#allocation2 + $0x49] sm:$0x1]
        %v1263 = vmax.f32 %v1261, %v1262
        %v1264 = vld [vmem:[#allocation2 + $0x4a] sm:$0x1]
        %v1265 = vmax.f32 %v1263, %v1264
        %v1266 = vld [vmem:[#allocation2 + $0x4b] sm:$0x1]
        %v1267 = vmax.f32 %v1265, %v1266
        %1268 = vst [vmem:[#allocation3 + $0x17] sm:$0x1] %v1267
        %v1269 = vld [vmem:[#allocation3] sm:$0xff]
        %v1270 = vld [vmem:[#allocation3 + $0x8] sm:$0xff]
        %v1271 = vld [vmem:[#allocation3 + $0x10] sm:$0xff]
        %v1272 = vpack.c.bf16 %v1269, %v1269
        %v1273 = vpack.c.bf16 %v1270, %v1270
        %v1274 = vpack.c.bf16 %v1271, %v1271
        %v1275 = vld [vmem:[%s3] sm:$0xf]
        %v1276 = vld [vmem:[%s3 + $0x4] sm:$0xf]
        %v1277 = vld [vmem:[%s3 + $0x8] sm:$0xf]
        %v1278 = vld [vmem:[%s3 + $0xc] sm:$0xf]
        %v1279 = vld [vmem:[%s3 + $0x10] sm:$0xf]
        %v1280 = vld [vmem:[%s3 + $0x14] sm:$0xf]
        %v1281 = vld [vmem:[%s3 + $0x18] sm:$0xf]
        %v1282 = vld [vmem:[%s3 + $0x1c] sm:$0xf]
        %v1283 = vld [vmem:[%s3 + $0x20] sm:$0xf]
        %v1284 = vld [vmem:[%s3 + $0x24] sm:$0xf]
        %v1285 = vld [vmem:[%s3 + $0x28] sm:$0xf]
        %v1286 = vld [vmem:[%s3 + $0x2c] sm:$0xf]
        %v1287 = vld [vmem:[%s3 + $0x30] sm:$0xf]
        %v1288 = vld [vmem:[%s3 + $0x34] sm:$0xf]
        %v1289 = vld [vmem:[%s3 + $0x38] sm:$0xf]
        %v1290 = vld [vmem:[%s3 + $0x3c] sm:$0xf]
        %v1291 = vld [vmem:[%s3 + $0x40] sm:$0xf]
        %v1292 = vld [vmem:[%s3 + $0x44] sm:$0xf]
        %v1293 = vld [vmem:[%s3 + $0x48] sm:$0xf]
        %v1294 = vld [vmem:[%s3 + $0x4c] sm:$0xf]
        %v1295 = vld [vmem:[%s3 + $0x50] sm:$0xf]
        %v1296 = vld [vmem:[%s3 + $0x54] sm:$0xf]
        %v1297 = vld [vmem:[%s3 + $0x58] sm:$0xf]
        %v1298 = vld [vmem:[%s3 + $0x5c] sm:$0xf]
        %v1299 = vld [vmem:[%s3 + $0x60] sm:$0xf]
        %v1300 = vld [vmem:[%s3 + $0x64] sm:$0xf]
        %v1301 = vld [vmem:[%s3 + $0x68] sm:$0xf]
        %v1302 = vld [vmem:[%s3 + $0x6c] sm:$0xf]
        %v1303 = vld [vmem:[%s3 + $0x70] sm:$0xf]
        %v1304 = vld [vmem:[%s3 + $0x74] sm:$0xf]
        %v1305 = vld [vmem:[%s3 + $0x78] sm:$0xf]
        %v1306 = vld [vmem:[%s3 + $0x7c] sm:$0xf]
        %v1307 = vld [vmem:[%s3 + $0x80] sm:$0xf]
        %v1308 = vld [vmem:[%s3 + $0x84] sm:$0xf]
        %v1309 = vld [vmem:[%s3 + $0x88] sm:$0xf]
        %v1310 = vld [vmem:[%s3 + $0x8c] sm:$0xf]
        %v1311 = vld [vmem:[%s3 + $0x90] sm:$0xf]
        %v1312 = vld [vmem:[%s3 + $0x94] sm:$0xf]
        %v1313 = vld [vmem:[%s3 + $0x98] sm:$0xf]
        %v1314 = vld [vmem:[%s3 + $0x9c] sm:$0xf]
        %v1315 = vld [vmem:[%s3 + $0xa0] sm:$0xf]
        %v1316 = vld [vmem:[%s3 + $0xa4] sm:$0xf]
        %v1317 = vld [vmem:[%s3 + $0xa8] sm:$0xf]
        %v1318 = vld [vmem:[%s3 + $0xac] sm:$0xf]
        %v1319 = vld [vmem:[%s3 + $0xb0] sm:$0xf]
        %v1320 = vld [vmem:[%s3 + $0xb4] sm:$0xf]
        %v1321 = vld [vmem:[%s3 + $0xb8] sm:$0xf]
        %v1322 = vld [vmem:[%s3 + $0xbc] sm:$0xf]
        %v1323 = vld [vmem:[%s4] sm:$0x1]
        %v1325 = vlaneseq
        %v1326 = vshrl.u32 %v1325, 7
        %v1327 = vsub.s32 0, %v1326
        %v1328 = vrot.slane %v1323, %v1327
        %v1378 = vunpack.c.l.b16 %v1275
        %v1379 = vunpack.c.l.b16 %v1276
        %v1380 = vunpack.c.l.b16 %v1277
        %v1381 = vunpack.c.l.b16 %v1278
        %v1382 = vunpack.c.l.b16 %v1279
        %v1383 = vunpack.c.l.b16 %v1280
        %v1384 = vunpack.c.l.b16 %v1281
        %v1385 = vunpack.c.l.b16 %v1282
        %v1386 = vunpack.c.l.b16 %v1283
        %v1387 = vunpack.c.l.b16 %v1284
        %v1388 = vunpack.c.l.b16 %v1285
        %v1389 = vunpack.c.l.b16 %v1286
        %v1390 = vunpack.c.l.b16 %v1287
        %v1391 = vunpack.c.l.b16 %v1288
        %v1392 = vunpack.c.l.b16 %v1289
        %v1393 = vunpack.c.l.b16 %v1290
        %v1394 = vunpack.c.l.b16 %v1291
        %v1395 = vunpack.c.l.b16 %v1292
        %v1396 = vunpack.c.l.b16 %v1293
        %v1397 = vunpack.c.l.b16 %v1294
        %v1398 = vunpack.c.l.b16 %v1295
        %v1399 = vunpack.c.l.b16 %v1296
        %v1400 = vunpack.c.l.b16 %v1297
        %v1401 = vunpack.c.l.b16 %v1298
        %v1402 = vunpack.c.l.b16 %v1299
        %v1403 = vunpack.c.l.b16 %v1300
        %v1404 = vunpack.c.l.b16 %v1301
        %v1405 = vunpack.c.l.b16 %v1302
        %v1406 = vunpack.c.l.b16 %v1303
        %v1407 = vunpack.c.l.b16 %v1304
        %v1408 = vunpack.c.l.b16 %v1305
        %v1409 = vunpack.c.l.b16 %v1306
        %v1410 = vunpack.c.l.b16 %v1307
        %v1411 = vunpack.c.l.b16 %v1308
        %v1412 = vunpack.c.l.b16 %v1309
        %v1413 = vunpack.c.l.b16 %v1310
        %v1414 = vunpack.c.l.b16 %v1311
        %v1415 = vunpack.c.l.b16 %v1312
        %v1416 = vunpack.c.l.b16 %v1313
        %v1417 = vunpack.c.l.b16 %v1314
        %v1418 = vunpack.c.l.b16 %v1315
        %v1419 = vunpack.c.l.b16 %v1316
        %v1420 = vunpack.c.l.b16 %v1317
        %v1421 = vunpack.c.l.b16 %v1318
        %v1422 = vunpack.c.l.b16 %v1319
        %v1423 = vunpack.c.l.b16 %v1320
        %v1424 = vunpack.c.l.b16 %v1321
        %v1425 = vunpack.c.l.b16 %v1322
        %v1426 = vpack.c.b16 %v1379, %v1378
        %v1427 = vpack.c.b16 %v1381, %v1380
        %v1428 = vpack.c.b16 %v1383, %v1382
        %v1429 = vpack.c.b16 %v1385, %v1384
        %v1430 = vpack.c.b16 %v1387, %v1386
        %v1431 = vpack.c.b16 %v1389, %v1388
        %v1432 = vpack.c.b16 %v1391, %v1390
        %v1433 = vpack.c.b16 %v1393, %v1392
        %v1434 = vpack.c.b16 %v1395, %v1394
        %v1435 = vpack.c.b16 %v1397, %v1396
        %v1436 = vpack.c.b16 %v1399, %v1398
        %v1437 = vpack.c.b16 %v1401, %v1400
        %v1438 = vpack.c.b16 %v1403, %v1402
        %v1439 = vpack.c.b16 %v1405, %v1404
        %v1440 = vpack.c.b16 %v1407, %v1406
        %v1441 = vpack.c.b16 %v1409, %v1408
        %v1442 = vpack.c.b16 %v1411, %v1410
        %v1443 = vpack.c.b16 %v1413, %v1412
        %v1444 = vpack.c.b16 %v1415, %v1414
        %v1445 = vpack.c.b16 %v1417, %v1416
        %v1446 = vpack.c.b16 %v1419, %v1418
        %v1447 = vpack.c.b16 %v1421, %v1420
        %v1448 = vpack.c.b16 %v1423, %v1422
        %v1449 = vpack.c.b16 %v1425, %v1424
        %1474 = vmatprep.subr.bf16.mxu0 0
        %1475 = vmatpush1.bf16.msra.mxu0 %v1426
        %1476 = vmatprep.subr.bf16.mxu0 0
        %1477 = vmatpush1.bf16.msra.mxu0 %v1427
        %1478 = vmatprep.subr.bf16.mxu0 0
        %1479 = vmatpush1.bf16.msra.mxu0 %v1428
        %1480 = vmatprep.subr.bf16.mxu0 0
        %1481 = vmatpush1.bf16.msra.mxu0 %v1429
        %1482 = vmatprep.subr.bf16.mxu0 0
        %1483 = vmatpush1.bf16.msra.mxu0 %v1430
        %1484 = vmatprep.subr.bf16.mxu0 0
        %1485 = vmatpush1.bf16.msra.mxu0 %v1431
        %1486 = vmatprep.subr.bf16.mxu0 0
        %1487 = vmatpush1.bf16.msra.mxu0 %v1432
        %1488 = vmatprep.subr.bf16.mxu0 0
        %1489 = vmatpush1.bf16.msra.mxu0 %v1433
        %1490 = vmatprep.subr.bf16.mxu0 0
        %1491 = vmatpush1.bf16.msra.mxu0 %v1434
        %1492 = vmatprep.subr.bf16.mxu0 0
        %1493 = vmatpush1.bf16.msra.mxu0 %v1435
        %1494 = vmatprep.subr.bf16.mxu0 0
        %1495 = vmatpush1.bf16.msra.mxu0 %v1436
        %1496 = vmatprep.subr.bf16.mxu0 0
        %1497 = vmatpush1.bf16.msra.mxu0 %v1437
        %1498 = vmatprep.subr.bf16.mxu0 0
        %1499 = vmatpush1.bf16.msra.mxu0 %v1438
        %1500 = vmatprep.subr.bf16.mxu0 0
        %1501 = vmatpush1.bf16.msra.mxu0 %v1439
        %1502 = vmatprep.subr.bf16.mxu0 0
        %1503 = vmatpush1.bf16.msra.mxu0 %v1440
        %1504 = vmatprep.subr.bf16.mxu0 0
        %1505 = vmatpush1.bf16.msra.mxu0 %v1441
        %1506 = vmatprep.mubr.bf16.mxu0 %v1273
        %1507 = vmatmul.mubr.bf16.gmra.mrb[0].mxu0 %v1272
        %v1508 = vpop.f32.mrb[0].mxu0
        %v1509 = vadd.f32 %v1328, %v1508
        %v1510 = vpop.f32.mrb[0].mxu0
        %v1511 = vpop.f32.mrb[0].mxu0
        %v1512 = vpop.f32.mrb[0].mxu0
        %1513 = vdwg.mxu0
        %1514 = vmatprep.subr.bf16.mxu0 0
        %1515 = vmatpush1.bf16.msra.mxu0 %v1442
        %1516 = vmatprep.subr.bf16.mxu0 0
        %1517 = vmatpush1.bf16.msra.mxu0 %v1443
        %1518 = vmatprep.subr.bf16.mxu0 0
        %1519 = vmatpush1.bf16.msra.mxu0 %v1444
        %1520 = vmatprep.subr.bf16.mxu0 0
        %1521 = vmatpush1.bf16.msra.mxu0 %v1445
        %1522 = vmatprep.subr.bf16.mxu0 0
        %1523 = vmatpush1.bf16.msra.mxu0 %v1446
        %1524 = vmatprep.subr.bf16.mxu0 0
        %1525 = vmatpush1.bf16.msra.mxu0 %v1447
        %1526 = vmatprep.subr.bf16.mxu0 0
        %1527 = vmatpush1.bf16.msra.mxu0 %v1448
        %1528 = vmatprep.subr.bf16.mxu0 0
        %1529 = vmatpush1.bf16.msra.mxu0 %v1449
        %1530 = vmatprep.subr.bf16.mxu0 0
        %1531 = vmatpush1.bf16.msra.mxu0 0
        %1532 = vmatprep.subr.bf16.mxu0 0
        %1533 = vmatpush1.bf16.msra.mxu0 0
        %1534 = vmatprep.subr.bf16.mxu0 0
        %1535 = vmatpush1.bf16.msra.mxu0 0
        %1536 = vmatprep.subr.bf16.mxu0 0
        %1537 = vmatpush1.bf16.msra.mxu0 0
        %1538 = vmatprep.subr.bf16.mxu0 0
        %1539 = vmatpush1.bf16.msra.mxu0 0
        %1540 = vmatprep.subr.bf16.mxu0 0
        %1541 = vmatpush1.bf16.msra.mxu0 0
        %1542 = vmatprep.subr.bf16.mxu0 0
        %1543 = vmatpush1.bf16.msra.mxu0 0
        %1544 = vmatprep.subr.bf16.mxu0 0
        %1545 = vmatpush1.bf16.msra.mxu0 0
        %1546 = vmatprep.mubr.bf16.mxu0 0
        %1547 = vmatmul.mubr.bf16.gmra.mrb[0].mxu0 %v1274
        %v1548 = vpop.f32.mrb[0].mxu0
        %v1549 = vadd.f32 %v1509, %v1548
        %v1550 = vpop.f32.mrb[0].mxu0
        %v1551 = vpop.f32.mrb[0].mxu0
        %v1552 = vpop.f32.mrb[0].mxu0
        %1553 = vdwg.mxu0
        %v1554 = vmax.f32 %v1549, 0.0
        %v1556 = vrot.slane %v1554, 1
        %v1558 = vmax.f32 %v1554, %v1556
        %v1559 = vrot.slane %v1554, 2
        %v1561 = vmax.f32 %v1558, %v1559
        %v1563 = vrot.slane %v1561, 3
        %v1565 = vpack.c.bf16 %v1561, %v1561
        %v1566 = vpack.c.bf16 %v1563, %v1563
        %v1567 = vld [vmem:[%s5] sm:$0xff]
        %v1568 = vld [vmem:[%s5 + $0x8] sm:$0xff]
        %v1569 = vld [vmem:[%s5 + $0x10] sm:$0xff]
        %v1570 = vld [vmem:[%s5 + $0x18] sm:$0xff]
        %v1571 = vld [vmem:[%s5 + $0x20] sm:$0xff]
        %v1572 = vld [vmem:[%s5 + $0x28] sm:$0xff]
        %v1573 = vld [vmem:[%s5 + $0x30] sm:$0xff]
        %v1574 = vld [vmem:[%s5 + $0x38] sm:$0xff]
        %v1575 = vld [vmem:[%s5 + $0x40] sm:$0xff]
        %v1576 = vld [vmem:[%s5 + $0x48] sm:$0xff]
        %v1577 = vld [vmem:[%s5 + $0x50] sm:$0xff]
        %v1578 = vld [vmem:[%s5 + $0x58] sm:$0xff]
        %v1579 = vld [vmem:[%s5 + $0x60] sm:$0xff]
        %v1580 = vld [vmem:[%s5 + $0x68] sm:$0xff]
        %v1581 = vld [vmem:[%s5 + $0x70] sm:$0xff]
        %v1582 = vld [vmem:[%s5 + $0x78] sm:$0xff]
        %v1583 = vld [vmem:[%s5 + $0x80] sm:$0xff]
        %v1584 = vld [vmem:[%s5 + $0x88] sm:$0xff]
        %v1585 = vld [vmem:[%s5 + $0x90] sm:$0xff]
        %v1586 = vld [vmem:[%s5 + $0x98] sm:$0xff]
        %v1587 = vld [vmem:[%s5 + $0xa0] sm:$0xff]
        %v1588 = vld [vmem:[%s5 + $0xa8] sm:$0xff]
        %v1589 = vld [vmem:[%s5 + $0xb0] sm:$0xff]
        %v1590 = vld [vmem:[%s5 + $0xb8] sm:$0xff]
        %v1591 = vld [vmem:[%s5 + $0xc0] sm:$0xff]
        %v1592 = vld [vmem:[%s5 + $0xc8] sm:$0xff]
        %v1593 = vld [vmem:[%s5 + $0xd0] sm:$0xff]
        %v1594 = vld [vmem:[%s5 + $0xd8] sm:$0xff]
        %v1595 = vld [vmem:[%s5 + $0xe0] sm:$0xff]
        %v1596 = vld [vmem:[%s5 + $0xe8] sm:$0xff]
        %v1597 = vld [vmem:[%s5 + $0xf0] sm:$0xff]
        %v1598 = vld [vmem:[%s5 + $0xf8] sm:$0xff]
        %v1599 = vld [vmem:[%s5 + $0x100] sm:$0xff]
        %v1600 = vld [vmem:[%s5 + $0x108] sm:$0xff]
        %v1601 = vld [vmem:[%s5 + $0x110] sm:$0xff]
        %v1602 = vld [vmem:[%s5 + $0x118] sm:$0xff]
        %v1603 = vld [vmem:[%s5 + $0x120] sm:$0xff]
        %v1604 = vld [vmem:[%s5 + $0x128] sm:$0xff]
        %v1605 = vld [vmem:[%s5 + $0x130] sm:$0xff]
        %v1606 = vld [vmem:[%s5 + $0x138] sm:$0xff]
        %v1607 = vld [vmem:[%s5 + $0x140] sm:$0xff]
        %v1608 = vld [vmem:[%s5 + $0x148] sm:$0xff]
        %v1609 = vld [vmem:[%s5 + $0x150] sm:$0xff]
        %v1610 = vld [vmem:[%s5 + $0x158] sm:$0xff]
        %v1611 = vld [vmem:[%s5 + $0x160] sm:$0xff]
        %v1612 = vld [vmem:[%s5 + $0x168] sm:$0xff]
        %v1613 = vld [vmem:[%s5 + $0x170] sm:$0xff]
        %v1614 = vld [vmem:[%s5 + $0x178] sm:$0xff]
        %v1615 = vld [vmem:[%s5 + $0x180] sm:$0xff]
        %v1616 = vld [vmem:[%s5 + $0x188] sm:$0xff]
        %v1617 = vld [vmem:[%s5 + $0x190] sm:$0xff]
        %v1618 = vld [vmem:[%s5 + $0x198] sm:$0xff]
        %v1619 = vld [vmem:[%s5 + $0x1a0] sm:$0xff]
        %v1620 = vld [vmem:[%s5 + $0x1a8] sm:$0xff]
        %v1621 = vld [vmem:[%s5 + $0x1b0] sm:$0xff]
        %v1622 = vld [vmem:[%s5 + $0x1b8] sm:$0xff]
        %v1623 = vld [vmem:[%s5 + $0x1c0] sm:$0xff]
        %v1624 = vld [vmem:[%s5 + $0x1c8] sm:$0xff]
        %v1625 = vld [vmem:[%s5 + $0x1d0] sm:$0xff]
        %v1626 = vld [vmem:[%s5 + $0x1d8] sm:$0xff]
        %v1627 = vld [vmem:[%s5 + $0x1e0] sm:$0xff]
        %v1628 = vld [vmem:[%s5 + $0x1e8] sm:$0xff]
        %v1629 = vld [vmem:[%s5 + $0x1f0] sm:$0xff]
        %v1630 = vld [vmem:[%s5 + $0x1f8] sm:$0xff]
        %v1631 = vld [vmem:[%s6] sm:$0xf]
        %v1696 = vunpack.c.l.b16 %v1567
        %v1697 = vunpack.c.h.b16 %v1567
        %v1698 = vunpack.c.l.b16 %v1568
        %v1699 = vunpack.c.h.b16 %v1568
        %v1700 = vunpack.c.l.b16 %v1569
        %v1701 = vunpack.c.h.b16 %v1569
        %v1702 = vunpack.c.l.b16 %v1570
        %v1703 = vunpack.c.h.b16 %v1570
        %v1704 = vunpack.c.l.b16 %v1571
        %v1705 = vunpack.c.h.b16 %v1571
        %v1706 = vunpack.c.l.b16 %v1572
        %v1707 = vunpack.c.h.b16 %v1572
        %v1708 = vunpack.c.l.b16 %v1573
        %v1709 = vunpack.c.h.b16 %v1573
        %v1710 = vunpack.c.l.b16 %v1574
        %v1711 = vunpack.c.h.b16 %v1574
        %v1712 = vunpack.c.l.b16 %v1575
        %v1713 = vunpack.c.h.b16 %v1575
        %v1714 = vunpack.c.l.b16 %v1576
        %v1715 = vunpack.c.h.b16 %v1576
        %v1716 = vunpack.c.l.b16 %v1577
        %v1717 = vunpack.c.h.b16 %v1577
        %v1718 = vunpack.c.l.b16 %v1578
        %v1719 = vunpack.c.h.b16 %v1578
        %v1720 = vunpack.c.l.b16 %v1579
        %v1721 = vunpack.c.h.b16 %v1579
        %v1722 = vunpack.c.l.b16 %v1580
        %v1723 = vunpack.c.h.b16 %v1580
        %v1724 = vunpack.c.l.b16 %v1581
        %v1725 = vunpack.c.h.b16 %v1581
        %v1726 = vunpack.c.l.b16 %v1582
        %v1727 = vunpack.c.h.b16 %v1582
        %v1728 = vunpack.c.l.b16 %v1583
        %v1729 = vunpack.c.h.b16 %v1583
        %v1730 = vunpack.c.l.b16 %v1584
        %v1731 = vunpack.c.h.b16 %v1584
        %v1732 = vunpack.c.l.b16 %v1585
        %v1733 = vunpack.c.h.b16 %v1585
        %v1734 = vunpack.c.l.b16 %v1586
        %v1735 = vunpack.c.h.b16 %v1586
        %v1736 = vunpack.c.l.b16 %v1587
        %v1737 = vunpack.c.h.b16 %v1587
        %v1738 = vunpack.c.l.b16 %v1588
        %v1739 = vunpack.c.h.b16 %v1588
        %v1740 = vunpack.c.l.b16 %v1589
        %v1741 = vunpack.c.h.b16 %v1589
        %v1742 = vunpack.c.l.b16 %v1590
        %v1743 = vunpack.c.h.b16 %v1590
        %v1744 = vunpack.c.l.b16 %v1591
        %v1745 = vunpack.c.h.b16 %v1591
        %v1746 = vunpack.c.l.b16 %v1592
        %v1747 = vunpack.c.h.b16 %v1592
        %v1748 = vunpack.c.l.b16 %v1593
        %v1749 = vunpack.c.h.b16 %v1593
        %v1750 = vunpack.c.l.b16 %v1594
        %v1751 = vunpack.c.h.b16 %v1594
        %v1752 = vunpack.c.l.b16 %v1595
        %v1753 = vunpack.c.h.b16 %v1595
        %v1754 = vunpack.c.l.b16 %v1596
        %v1755 = vunpack.c.h.b16 %v1596
        %v1756 = vunpack.c.l.b16 %v1597
        %v1757 = vunpack.c.h.b16 %v1597
        %v1758 = vunpack.c.l.b16 %v1598
        %v1759 = vunpack.c.h.b16 %v1598
        %v1760 = vunpack.c.l.b16 %v1599
        %v1761 = vunpack.c.h.b16 %v1599
        %v1762 = vunpack.c.l.b16 %v1600
        %v1763 = vunpack.c.h.b16 %v1600
        %v1764 = vunpack.c.l.b16 %v1601
        %v1765 = vunpack.c.h.b16 %v1601
        %v1766 = vunpack.c.l.b16 %v1602
        %v1767 = vunpack.c.h.b16 %v1602
        %v1768 = vunpack.c.l.b16 %v1603
        %v1769 = vunpack.c.h.b16 %v1603
        %v1770 = vunpack.c.l.b16 %v1604
        %v1771 = vunpack.c.h.b16 %v1604
        %v1772 = vunpack.c.l.b16 %v1605
        %v1773 = vunpack.c.h.b16 %v1605
        %v1774 = vunpack.c.l.b16 %v1606
        %v1775 = vunpack.c.h.b16 %v1606
        %v1776 = vunpack.c.l.b16 %v1607
        %v1777 = vunpack.c.h.b16 %v1607
        %v1778 = vunpack.c.l.b16 %v1608
        %v1779 = vunpack.c.h.b16 %v1608
        %v1780 = vunpack.c.l.b16 %v1609
        %v1781 = vunpack.c.h.b16 %v1609
        %v1782 = vunpack.c.l.b16 %v1610
        %v1783 = vunpack.c.h.b16 %v1610
        %v1784 = vunpack.c.l.b16 %v1611
        %v1785 = vunpack.c.h.b16 %v1611
        %v1786 = vunpack.c.l.b16 %v1612
        %v1787 = vunpack.c.h.b16 %v1612
        %v1788 = vunpack.c.l.b16 %v1613
        %v1789 = vunpack.c.h.b16 %v1613
        %v1790 = vunpack.c.l.b16 %v1614
        %v1791 = vunpack.c.h.b16 %v1614
        %v1792 = vunpack.c.l.b16 %v1615
        %v1793 = vunpack.c.h.b16 %v1615
        %v1794 = vunpack.c.l.b16 %v1616
        %v1795 = vunpack.c.h.b16 %v1616
        %v1796 = vunpack.c.l.b16 %v1617
        %v1797 = vunpack.c.h.b16 %v1617
        %v1798 = vunpack.c.l.b16 %v1618
        %v1799 = vunpack.c.h.b16 %v1618
        %v1800 = vunpack.c.l.b16 %v1619
        %v1801 = vunpack.c.h.b16 %v1619
        %v1802 = vunpack.c.l.b16 %v1620
        %v1803 = vunpack.c.h.b16 %v1620
        %v1804 = vunpack.c.l.b16 %v1621
        %v1805 = vunpack.c.h.b16 %v1621
        %v1806 = vunpack.c.l.b16 %v1622
        %v1807 = vunpack.c.h.b16 %v1622
        %v1808 = vunpack.c.l.b16 %v1623
        %v1809 = vunpack.c.h.b16 %v1623
        %v1810 = vunpack.c.l.b16 %v1624
        %v1811 = vunpack.c.h.b16 %v1624
        %v1812 = vunpack.c.l.b16 %v1625
        %v1813 = vunpack.c.h.b16 %v1625
        %v1814 = vunpack.c.l.b16 %v1626
        %v1815 = vunpack.c.h.b16 %v1626
        %v1816 = vunpack.c.l.b16 %v1627
        %v1817 = vunpack.c.h.b16 %v1627
        %v1818 = vunpack.c.l.b16 %v1628
        %v1819 = vunpack.c.h.b16 %v1628
        %v1820 = vunpack.c.l.b16 %v1629
        %v1821 = vunpack.c.h.b16 %v1629
        %v1822 = vunpack.c.l.b16 %v1630
        %v1823 = vunpack.c.h.b16 %v1630
        %v1824 = vpack.c.b16 %v1700, %v1696
        %v1825 = vpack.c.b16 %v1701, %v1697
        %v1826 = vpack.c.b16 %v1702, %v1698
        %v1827 = vpack.c.b16 %v1703, %v1699
        %v1828 = vpack.c.b16 %v1708, %v1704
        %v1829 = vpack.c.b16 %v1709, %v1705
        %v1830 = vpack.c.b16 %v1710, %v1706
        %v1831 = vpack.c.b16 %v1711, %v1707
        %v1832 = vpack.c.b16 %v1716, %v1712
        %v1833 = vpack.c.b16 %v1717, %v1713
        %v1834 = vpack.c.b16 %v1718, %v1714
        %v1835 = vpack.c.b16 %v1719, %v1715
        %v1836 = vpack.c.b16 %v1724, %v1720
        %v1837 = vpack.c.b16 %v1725, %v1721
        %v1838 = vpack.c.b16 %v1726, %v1722
        %v1839 = vpack.c.b16 %v1727, %v1723
        %v1840 = vpack.c.b16 %v1732, %v1728
        %v1841 = vpack.c.b16 %v1733, %v1729
        %v1842 = vpack.c.b16 %v1734, %v1730
        %v1843 = vpack.c.b16 %v1735, %v1731
        %v1844 = vpack.c.b16 %v1740, %v1736
        %v1845 = vpack.c.b16 %v1741, %v1737
        %v1846 = vpack.c.b16 %v1742, %v1738
        %v1847 = vpack.c.b16 %v1743, %v1739
        %v1848 = vpack.c.b16 %v1748, %v1744
        %v1849 = vpack.c.b16 %v1749, %v1745
        %v1850 = vpack.c.b16 %v1750, %v1746
        %v1851 = vpack.c.b16 %v1751, %v1747
        %v1852 = vpack.c.b16 %v1756, %v1752
        %v1853 = vpack.c.b16 %v1757, %v1753
        %v1854 = vpack.c.b16 %v1758, %v1754
        %v1855 = vpack.c.b16 %v1759, %v1755
        %v1856 = vpack.c.b16 %v1764, %v1760
        %v1857 = vpack.c.b16 %v1765, %v1761
        %v1858 = vpack.c.b16 %v1766, %v1762
        %v1859 = vpack.c.b16 %v1767, %v1763
        %v1860 = vpack.c.b16 %v1772, %v1768
        %v1861 = vpack.c.b16 %v1773, %v1769
        %v1862 = vpack.c.b16 %v1774, %v1770
        %v1863 = vpack.c.b16 %v1775, %v1771
        %v1864 = vpack.c.b16 %v1780, %v1776
        %v1865 = vpack.c.b16 %v1781, %v1777
        %v1866 = vpack.c.b16 %v1782, %v1778
        %v1867 = vpack.c.b16 %v1783, %v1779
        %v1868 = vpack.c.b16 %v1788, %v1784
        %v1869 = vpack.c.b16 %v1789, %v1785
        %v1870 = vpack.c.b16 %v1790, %v1786
        %v1871 = vpack.c.b16 %v1791, %v1787
        %v1872 = vpack.c.b16 %v1796, %v1792
        %v1873 = vpack.c.b16 %v1797, %v1793
        %v1874 = vpack.c.b16 %v1798, %v1794
        %v1875 = vpack.c.b16 %v1799, %v1795
        %v1876 = vpack.c.b16 %v1804, %v1800
        %v1877 = vpack.c.b16 %v1805, %v1801
        %v1878 = vpack.c.b16 %v1806, %v1802
        %v1879 = vpack.c.b16 %v1807, %v1803
        %v1880 = vpack.c.b16 %v1812, %v1808
        %v1881 = vpack.c.b16 %v1813, %v1809
        %v1882 = vpack.c.b16 %v1814, %v1810
        %v1883 = vpack.c.b16 %v1815, %v1811
        %v1884 = vpack.c.b16 %v1820, %v1816
        %v1885 = vpack.c.b16 %v1821, %v1817
        %v1886 = vpack.c.b16 %v1822, %v1818
        %v1887 = vpack.c.b16 %v1823, %v1819
        %v1953 = vlaneseq
        %v1954 = vshrl.u32 %v1953, 7
        %v1955 = vsub.s32 0, %v1954
        %v1956 = vrot.slane %v1631, %v1955
        %v1957 = vlaneseq
        %v1958 = vshrl.u32 %v1957, 7
        %v1959 = vsub.s32 1, %v1958
        %v1960 = vrot.slane %v1631, %v1959
        %v1961 = vlaneseq
        %v1962 = vshrl.u32 %v1961, 7
        %v1963 = vsub.s32 2, %v1962
        %v1964 = vrot.slane %v1631, %v1963
        %v1965 = vlaneseq
        %v1966 = vshrl.u32 %v1965, 7
        %v1967 = vsub.s32 3, %v1966
        %v1968 = vrot.slane %v1631, %v1967
        %1973 = vmatprep.subr.bf16.mxu0 %v1825
        %1974 = vmatpush1.bf16.msra.mxu0 %v1824
        %1975 = vmatprep.subr.bf16.mxu0 %v1829
        %1976 = vmatpush1.bf16.msra.mxu0 %v1828
        %1977 = vmatprep.subr.bf16.mxu0 %v1833
        %1978 = vmatpush1.bf16.msra.mxu0 %v1832
        %1979 = vmatprep.subr.bf16.mxu0 %v1837
        %1980 = vmatpush1.bf16.msra.mxu0 %v1836
        %1981 = vmatprep.subr.bf16.mxu0 %v1841
        %1982 = vmatpush1.bf16.msra.mxu0 %v1840
        %1983 = vmatprep.subr.bf16.mxu0 %v1845
        %1984 = vmatpush1.bf16.msra.mxu0 %v1844
        %1985 = vmatprep.subr.bf16.mxu0 %v1849
        %1986 = vmatpush1.bf16.msra.mxu0 %v1848
        %1987 = vmatprep.subr.bf16.mxu0 %v1853
        %1988 = vmatpush1.bf16.msra.mxu0 %v1852
        %1989 = vmatprep.subr.bf16.mxu0 %v1857
        %1990 = vmatpush1.bf16.msra.mxu0 %v1856
        %1991 = vmatprep.subr.bf16.mxu0 %v1861
        %1992 = vmatpush1.bf16.msra.mxu0 %v1860
        %1993 = vmatprep.subr.bf16.mxu0 %v1865
        %1994 = vmatpush1.bf16.msra.mxu0 %v1864
        %1995 = vmatprep.subr.bf16.mxu0 %v1869
        %1996 = vmatpush1.bf16.msra.mxu0 %v1868
        %1997 = vmatprep.subr.bf16.mxu0 %v1873
        %1998 = vmatpush1.bf16.msra.mxu0 %v1872
        %1999 = vmatprep.subr.bf16.mxu0 %v1877
        %2000 = vmatpush1.bf16.msra.mxu0 %v1876
        %2001 = vmatprep.subr.bf16.mxu0 %v1881
        %2002 = vmatpush1.bf16.msra.mxu0 %v1880
        %2003 = vmatprep.subr.bf16.mxu0 %v1885
        %2004 = vmatpush1.bf16.msra.mxu0 %v1884
        %2005 = vmatprep.mubr.bf16.mxu0 %v1566
        %2006 = vmatmul.mubr.bf16.gmra.mrb[0].mxu0 %v1565
        %v2007 = vpop.f32.mrb[0].mxu0
        %v2008 = vadd.f32 %v1956, %v2007
        %v2009 = vpop.f32.mrb[0].mxu0
        %v2010 = vadd.f32 %v1960, %v2009
        %v2011 = vpop.f32.mrb[0].mxu0
        %v2012 = vpop.f32.mrb[0].mxu0
        %2013 = vdwg.mxu0
        %2014 = vmatprep.subr.bf16.mxu0 %v1827
        %2015 = vmatpush1.bf16.msra.mxu0 %v1826
        %2016 = vmatprep.subr.bf16.mxu0 %v1831
        %2017 = vmatpush1.bf16.msra.mxu0 %v1830
        %2018 = vmatprep.subr.bf16.mxu0 %v1835
        %2019 = vmatpush1.bf16.msra.mxu0 %v1834
        %2020 = vmatprep.subr.bf16.mxu0 %v1839
        %2021 = vmatpush1.bf16.msra.mxu0 %v1838
        %2022 = vmatprep.subr.bf16.mxu0 %v1843
        %2023 = vmatpush1.bf16.msra.mxu0 %v1842
        %2024 = vmatprep.subr.bf16.mxu0 %v1847
        %2025 = vmatpush1.bf16.msra.mxu0 %v1846
        %2026 = vmatprep.subr.bf16.mxu0 %v1851
        %2027 = vmatpush1.bf16.msra.mxu0 %v1850
        %2028 = vmatprep.subr.bf16.mxu0 %v1855
        %2029 = vmatpush1.bf16.msra.mxu0 %v1854
        %2030 = vmatprep.subr.bf16.mxu0 %v1859
        %2031 = vmatpush1.bf16.msra.mxu0 %v1858
        %2032 = vmatprep.subr.bf16.mxu0 %v1863
        %2033 = vmatpush1.bf16.msra.mxu0 %v1862
        %2034 = vmatprep.subr.bf16.mxu0 %v1867
        %2035 = vmatpush1.bf16.msra.mxu0 %v1866
        %2036 = vmatprep.subr.bf16.mxu0 %v1871
        %2037 = vmatpush1.bf16.msra.mxu0 %v1870
        %2038 = vmatprep.subr.bf16.mxu0 %v1875
        %2039 = vmatpush1.bf16.msra.mxu0 %v1874
        %2040 = vmatprep.subr.bf16.mxu0 %v1879
        %2041 = vmatpush1.bf16.msra.mxu0 %v1878
        %2042 = vmatprep.subr.bf16.mxu0 %v1883
        %2043 = vmatpush1.bf16.msra.mxu0 %v1882
        %2044 = vmatprep.subr.bf16.mxu0 %v1887
        %2045 = vmatpush1.bf16.msra.mxu0 %v1886
        %2046 = vmatprep.mubr.bf16.mxu0 %v1566
        %2047 = vmatmul.mubr.bf16.gmra.mrb[0].mxu0 %v1565
        %v2048 = vpop.f32.mrb[0].mxu0
        %v2049 = vadd.f32 %v1964, %v2048
        %v2050 = vpop.f32.mrb[0].mxu0
        %v2051 = vadd.f32 %v1968, %v2050
        %v2052 = vpop.f32.mrb[0].mxu0
        %v2053 = vpop.f32.mrb[0].mxu0
        %2054 = vdwg.mxu0
        %v2055 = vmax.f32 %v2008, 0.0
        %v2056 = vmax.f32 %v2010, 0.0
        %v2057 = vmax.f32 %v2049, 0.0
        %v2058 = vmax.f32 %v2051, 0.0
        %v2059 = vpack.c.bf16 %v2055, %v2055
        %v2060 = vpack.c.bf16 %v2056, %v2056
        %v2061 = vpack.c.bf16 %v2057, %v2057
        %v2062 = vpack.c.bf16 %v2058, %v2058
        %v2063 = vld [vmem:[%s7] sm:$0xf]
        %v2064 = vld [vmem:[%s7 + $0x4] sm:$0xf]
        %v2065 = vld [vmem:[%s7 + $0x8] sm:$0xf]
        %v2066 = vld [vmem:[%s7 + $0xc] sm:$0xf]
        %v2067 = vld [vmem:[%s7 + $0x10] sm:$0xf]
        %v2068 = vld [vmem:[%s7 + $0x14] sm:$0xf]
        %v2069 = vld [vmem:[%s7 + $0x18] sm:$0xf]
        %v2070 = vld [vmem:[%s7 + $0x1c] sm:$0xf]
        %v2071 = vld [vmem:[%s7 + $0x20] sm:$0xf]
        %v2072 = vld [vmem:[%s7 + $0x24] sm:$0xf]
        %v2073 = vld [vmem:[%s7 + $0x28] sm:$0xf]
        %v2074 = vld [vmem:[%s7 + $0x2c] sm:$0xf]
        %v2075 = vld [vmem:[%s7 + $0x30] sm:$0xf]
        %v2076 = vld [vmem:[%s7 + $0x34] sm:$0xf]
        %v2077 = vld [vmem:[%s7 + $0x38] sm:$0xf]
        %v2078 = vld [vmem:[%s7 + $0x3c] sm:$0xf]
        %v2079 = vld [vmem:[%s7 + $0x40] sm:$0xf]
        %v2080 = vld [vmem:[%s7 + $0x44] sm:$0xf]
        %v2081 = vld [vmem:[%s7 + $0x48] sm:$0xf]
        %v2082 = vld [vmem:[%s7 + $0x4c] sm:$0xf]
        %v2083 = vld [vmem:[%s7 + $0x50] sm:$0xf]
        %v2084 = vld [vmem:[%s7 + $0x54] sm:$0xf]
        %v2085 = vld [vmem:[%s7 + $0x58] sm:$0xf]
        %v2086 = vld [vmem:[%s7 + $0x5c] sm:$0xf]
        %v2087 = vld [vmem:[%s7 + $0x60] sm:$0xf]
        %v2088 = vld [vmem:[%s7 + $0x64] sm:$0xf]
        %v2089 = vld [vmem:[%s7 + $0x68] sm:$0xf]
        %v2090 = vld [vmem:[%s7 + $0x6c] sm:$0xf]
        %v2091 = vld [vmem:[%s7 + $0x70] sm:$0xf]
        %v2092 = vld [vmem:[%s7 + $0x74] sm:$0xf]
        %v2093 = vld [vmem:[%s7 + $0x78] sm:$0xf]
        %v2094 = vld [vmem:[%s7 + $0x7c] sm:$0xf]
        %v2095 = vld [vmem:[%s7 + $0x80] sm:$0xf]
        %v2096 = vld [vmem:[%s7 + $0x84] sm:$0xf]
        %v2097 = vld [vmem:[%s7 + $0x88] sm:$0xf]
        %v2098 = vld [vmem:[%s7 + $0x8c] sm:$0xf]
        %v2099 = vld [vmem:[%s7 + $0x90] sm:$0xf]
        %v2100 = vld [vmem:[%s7 + $0x94] sm:$0xf]
        %v2101 = vld [vmem:[%s7 + $0x98] sm:$0xf]
        %v2102 = vld [vmem:[%s7 + $0x9c] sm:$0xf]
        %v2103 = vld [vmem:[%s7 + $0xa0] sm:$0xf]
        %v2104 = vld [vmem:[%s7 + $0xa4] sm:$0xf]
        %v2105 = vld [vmem:[%s7 + $0xa8] sm:$0xf]
        %v2106 = vld [vmem:[%s7 + $0xac] sm:$0xf]
        %v2107 = vld [vmem:[%s7 + $0xb0] sm:$0xf]
        %v2108 = vld [vmem:[%s7 + $0xb4] sm:$0xf]
        %v2109 = vld [vmem:[%s7 + $0xb8] sm:$0xf]
        %v2110 = vld [vmem:[%s7 + $0xbc] sm:$0xf]
        %v2111 = vld [vmem:[%s7 + $0xc0] sm:$0xf]
        %v2112 = vld [vmem:[%s7 + $0xc4] sm:$0xf]
        %v2113 = vld [vmem:[%s7 + $0xc8] sm:$0xf]
        %v2114 = vld [vmem:[%s7 + $0xcc] sm:$0xf]
        %v2115 = vld [vmem:[%s7 + $0xd0] sm:$0xf]
        %v2116 = vld [vmem:[%s7 + $0xd4] sm:$0xf]
        %v2117 = vld [vmem:[%s7 + $0xd8] sm:$0xf]
        %v2118 = vld [vmem:[%s7 + $0xdc] sm:$0xf]
        %v2119 = vld [vmem:[%s7 + $0xe0] sm:$0xf]
        %v2120 = vld [vmem:[%s7 + $0xe4] sm:$0xf]
        %v2121 = vld [vmem:[%s7 + $0xe8] sm:$0xf]
        %v2122 = vld [vmem:[%s7 + $0xec] sm:$0xf]
        %v2123 = vld [vmem:[%s7 + $0xf0] sm:$0xf]
        %v2124 = vld [vmem:[%s7 + $0xf4] sm:$0xf]
        %v2125 = vld [vmem:[%s7 + $0xf8] sm:$0xf]
        %v2126 = vld [vmem:[%s7 + $0xfc] sm:$0xf]
        %v2127 = vld [vmem:[%s8] sm:$0x1]
        %v2192 = vunpack.c.l.b16 %v2063
        %v2193 = vunpack.c.l.b16 %v2064
        %v2194 = vunpack.c.l.b16 %v2065
        %v2195 = vunpack.c.l.b16 %v2066
        %v2196 = vunpack.c.l.b16 %v2067
        %v2197 = vunpack.c.l.b16 %v2068
        %v2198 = vunpack.c.l.b16 %v2069
        %v2199 = vunpack.c.l.b16 %v2070
        %v2200 = vunpack.c.l.b16 %v2071
        %v2201 = vunpack.c.l.b16 %v2072
        %v2202 = vunpack.c.l.b16 %v2073
        %v2203 = vunpack.c.l.b16 %v2074
        %v2204 = vunpack.c.l.b16 %v2075
        %v2205 = vunpack.c.l.b16 %v2076
        %v2206 = vunpack.c.l.b16 %v2077
        %v2207 = vunpack.c.l.b16 %v2078
        %v2208 = vunpack.c.l.b16 %v2079
        %v2209 = vunpack.c.l.b16 %v2080
        %v2210 = vunpack.c.l.b16 %v2081
        %v2211 = vunpack.c.l.b16 %v2082
        %v2212 = vunpack.c.l.b16 %v2083
        %v2213 = vunpack.c.l.b16 %v2084
        %v2214 = vunpack.c.l.b16 %v2085
        %v2215 = vunpack.c.l.b16 %v2086
        %v2216 = vunpack.c.l.b16 %v2087
        %v2217 = vunpack.c.l.b16 %v2088
        %v2218 = vunpack.c.l.b16 %v2089
        %v2219 = vunpack.c.l.b16 %v2090
        %v2220 = vunpack.c.l.b16 %v2091
        %v2221 = vunpack.c.l.b16 %v2092
        %v2222 = vunpack.c.l.b16 %v2093
        %v2223 = vunpack.c.l.b16 %v2094
        %v2224 = vunpack.c.l.b16 %v2095
        %v2225 = vunpack.c.l.b16 %v2096
        %v2226 = vunpack.c.l.b16 %v2097
        %v2227 = vunpack.c.l.b16 %v2098
        %v2228 = vunpack.c.l.b16 %v2099
        %v2229 = vunpack.c.l.b16 %v2100
        %v2230 = vunpack.c.l.b16 %v2101
        %v2231 = vunpack.c.l.b16 %v2102
        %v2232 = vunpack.c.l.b16 %v2103
        %v2233 = vunpack.c.l.b16 %v2104
        %v2234 = vunpack.c.l.b16 %v2105
        %v2235 = vunpack.c.l.b16 %v2106
        %v2236 = vunpack.c.l.b16 %v2107
        %v2237 = vunpack.c.l.b16 %v2108
        %v2238 = vunpack.c.l.b16 %v2109
        %v2239 = vunpack.c.l.b16 %v2110
        %v2240 = vunpack.c.l.b16 %v2111
        %v2241 = vunpack.c.l.b16 %v2112
        %v2242 = vunpack.c.l.b16 %v2113
        %v2243 = vunpack.c.l.b16 %v2114
        %v2244 = vunpack.c.l.b16 %v2115
        %v2245 = vunpack.c.l.b16 %v2116
        %v2246 = vunpack.c.l.b16 %v2117
        %v2247 = vunpack.c.l.b16 %v2118
        %v2248 = vunpack.c.l.b16 %v2119
        %v2249 = vunpack.c.l.b16 %v2120
        %v2250 = vunpack.c.l.b16 %v2121
        %v2251 = vunpack.c.l.b16 %v2122
        %v2252 = vunpack.c.l.b16 %v2123
        %v2253 = vunpack.c.l.b16 %v2124
        %v2254 = vunpack.c.l.b16 %v2125
        %v2255 = vunpack.c.l.b16 %v2126
        %v2256 = vpack.c.b16 %v2193, %v2192
        %v2257 = vpack.c.b16 %v2195, %v2194
        %v2258 = vpack.c.b16 %v2197, %v2196
        %v2259 = vpack.c.b16 %v2199, %v2198
        %v2260 = vpack.c.b16 %v2201, %v2200
        %v2261 = vpack.c.b16 %v2203, %v2202
        %v2262 = vpack.c.b16 %v2205, %v2204
        %v2263 = vpack.c.b16 %v2207, %v2206
        %v2264 = vpack.c.b16 %v2209, %v2208
        %v2265 = vpack.c.b16 %v2211, %v2210
        %v2266 = vpack.c.b16 %v2213, %v2212
        %v2267 = vpack.c.b16 %v2215, %v2214
        %v2268 = vpack.c.b16 %v2217, %v2216
        %v2269 = vpack.c.b16 %v2219, %v2218
        %v2270 = vpack.c.b16 %v2221, %v2220
        %v2271 = vpack.c.b16 %v2223, %v2222
        %v2272 = vpack.c.b16 %v2225, %v2224
        %v2273 = vpack.c.b16 %v2227, %v2226
        %v2274 = vpack.c.b16 %v2229, %v2228
        %v2275 = vpack.c.b16 %v2231, %v2230
        %v2276 = vpack.c.b16 %v2233, %v2232
        %v2277 = vpack.c.b16 %v2235, %v2234
        %v2278 = vpack.c.b16 %v2237, %v2236
        %v2279 = vpack.c.b16 %v2239, %v2238
        %v2280 = vpack.c.b16 %v2241, %v2240
        %v2281 = vpack.c.b16 %v2243, %v2242
        %v2282 = vpack.c.b16 %v2245, %v2244
        %v2283 = vpack.c.b16 %v2247, %v2246
        %v2284 = vpack.c.b16 %v2249, %v2248
        %v2285 = vpack.c.b16 %v2251, %v2250
        %v2286 = vpack.c.b16 %v2253, %v2252
        %v2287 = vpack.c.b16 %v2255, %v2254
        %2320 = vmatprep.subr.bf16.mxu0 0
        %2321 = vmatpush1.bf16.msra.mxu0 %v2256
        %2322 = vmatprep.subr.bf16.mxu0 0
        %2323 = vmatpush1.bf16.msra.mxu0 %v2257
        %2324 = vmatprep.subr.bf16.mxu0 0
        %2325 = vmatpush1.bf16.msra.mxu0 %v2258
        %2326 = vmatprep.subr.bf16.mxu0 0
        %2327 = vmatpush1.bf16.msra.mxu0 %v2259
        %2328 = vmatprep.subr.bf16.mxu0 0
        %2329 = vmatpush1.bf16.msra.mxu0 %v2260
        %2330 = vmatprep.subr.bf16.mxu0 0
        %2331 = vmatpush1.bf16.msra.mxu0 %v2261
        %2332 = vmatprep.subr.bf16.mxu0 0
        %2333 = vmatpush1.bf16.msra.mxu0 %v2262
        %2334 = vmatprep.subr.bf16.mxu0 0
        %2335 = vmatpush1.bf16.msra.mxu0 %v2263
        %2336 = vmatprep.subr.bf16.mxu0 0
        %2337 = vmatpush1.bf16.msra.mxu0 %v2264
        %2338 = vmatprep.subr.bf16.mxu0 0
        %2339 = vmatpush1.bf16.msra.mxu0 %v2265
        %2340 = vmatprep.subr.bf16.mxu0 0
        %2341 = vmatpush1.bf16.msra.mxu0 %v2266
        %2342 = vmatprep.subr.bf16.mxu0 0
        %2343 = vmatpush1.bf16.msra.mxu0 %v2267
        %2344 = vmatprep.subr.bf16.mxu0 0
        %2345 = vmatpush1.bf16.msra.mxu0 %v2268
        %2346 = vmatprep.subr.bf16.mxu0 0
        %2347 = vmatpush1.bf16.msra.mxu0 %v2269
        %2348 = vmatprep.subr.bf16.mxu0 0
        %2349 = vmatpush1.bf16.msra.mxu0 %v2270
        %2350 = vmatprep.subr.bf16.mxu0 0
        %2351 = vmatpush1.bf16.msra.mxu0 %v2271
        %2352 = vmatprep.mubr.bf16.mxu0 %v2060
        %2353 = vmatmul.mubr.bf16.gmra.mrb[0].mxu0 %v2059
        %v2354 = vpop.f32.mrb[0].mxu0
        %v2355 = vadd.f32 %v2127, %v2354
        %v2356 = vpop.f32.mrb[0].mxu0
        %v2357 = vpop.f32.mrb[0].mxu0
        %v2358 = vpop.f32.mrb[0].mxu0
        %2359 = vdwg.mxu0
        %2360 = vmatprep.subr.bf16.mxu0 0
        %2361 = vmatpush1.bf16.msra.mxu0 %v2272
        %2362 = vmatprep.subr.bf16.mxu0 0
        %2363 = vmatpush1.bf16.msra.mxu0 %v2273
        %2364 = vmatprep.subr.bf16.mxu0 0
        %2365 = vmatpush1.bf16.msra.mxu0 %v2274
        %2366 = vmatprep.subr.bf16.mxu0 0
        %2367 = vmatpush1.bf16.msra.mxu0 %v2275
        %2368 = vmatprep.subr.bf16.mxu0 0
        %2369 = vmatpush1.bf16.msra.mxu0 %v2276
        %2370 = vmatprep.subr.bf16.mxu0 0
        %2371 = vmatpush1.bf16.msra.mxu0 %v2277
        %2372 = vmatprep.subr.bf16.mxu0 0
        %2373 = vmatpush1.bf16.msra.mxu0 %v2278
        %2374 = vmatprep.subr.bf16.mxu0 0
        %2375 = vmatpush1.bf16.msra.mxu0 %v2279
        %2376 = vmatprep.subr.bf16.mxu0 0
        %2377 = vmatpush1.bf16.msra.mxu0 %v2280
        %2378 = vmatprep.subr.bf16.mxu0 0
        %2379 = vmatpush1.bf16.msra.mxu0 %v2281
        %2380 = vmatprep.subr.bf16.mxu0 0
        %2381 = vmatpush1.bf16.msra.mxu0 %v2282
        %2382 = vmatprep.subr.bf16.mxu0 0
        %2383 = vmatpush1.bf16.msra.mxu0 %v2283
        %2384 = vmatprep.subr.bf16.mxu0 0
        %2385 = vmatpush1.bf16.msra.mxu0 %v2284
        %2386 = vmatprep.subr.bf16.mxu0 0
        %2387 = vmatpush1.bf16.msra.mxu0 %v2285
        %2388 = vmatprep.subr.bf16.mxu0 0
        %2389 = vmatpush1.bf16.msra.mxu0 %v2286
        %2390 = vmatprep.subr.bf16.mxu0 0
        %2391 = vmatpush1.bf16.msra.mxu0 %v2287
        %2392 = vmatprep.mubr.bf16.mxu0 %v2062
        %2393 = vmatmul.mubr.bf16.gmra.mrb[0].mxu0 %v2061
        %v2394 = vpop.f32.mrb[0].mxu0
        %v2395 = vadd.f32 %v2355, %v2394
        %v2396 = vpop.f32.mrb[0].mxu0
        %v2397 = vpop.f32.mrb[0].mxu0
        %v2398 = vpop.f32.mrb[0].mxu0
        %2399 = vdwg.mxu0
        %v2400 = vmax.f32 %v2395, 0.0
        %v2401 = vld [vmem:[%s9] sm:$0xff]
        %v2402 = vld [vmem:[%s9 + $0x8] sm:$0x7]
        %v2403 = vld [vmem:[%s10] sm:$0x1]
        %vm2404 = vcmask 89088
        %v2406 = vsel %vm2404, %v2400, 0
        %vm2408 = vcmask 1042432
        %v2410 = vsel %vm2408, %v2402, 0
        %2412 = vmatprep.subr.mxu0 0.0
        %2413 = vmatpush1.msra.mxu0 %v2401
        %2414 = vmatprep.subr.mxu0 0.0
        %2415 = vmatpush1.msra.mxu0 %v2410
        %2416 = vmatprep.subr.mxu0 0.0
        %2417 = vmatpush1.msra.mxu0 0.0
        %2418 = vmatprep.subr.mxu0 0.0
        %2419 = vmatpush1.msra.mxu0 0.0
        %2420 = vmatprep.subr.mxu0 0.0
        %2421 = vmatpush1.msra.mxu0 0.0
        %2422 = vmatprep.subr.mxu0 0.0
        %2423 = vmatpush1.msra.mxu0 0.0
        %2424 = vmatprep.subr.mxu0 0.0
        %2425 = vmatpush1.msra.mxu0 0.0
        %2426 = vmatprep.subr.mxu0 0.0
        %2427 = vmatpush1.msra.mxu0 0.0
        %2428 = vmatprep.subr.mxu0 0.0
        %2429 = vmatpush1.msra.mxu0 0.0
        %2430 = vmatprep.subr.mxu0 0.0
        %2431 = vmatpush1.msra.mxu0 0.0
        %2432 = vmatprep.subr.mxu0 0.0
        %2433 = vmatpush1.msra.mxu0 0.0
        %2434 = vmatprep.subr.mxu0 0.0
        %2435 = vmatpush1.msra.mxu0 0.0
        %2436 = vmatprep.subr.mxu0 0.0
        %2437 = vmatpush1.msra.mxu0 0.0
        %2438 = vmatprep.subr.mxu0 0.0
        %2439 = vmatpush1.msra.mxu0 0.0
        %2440 = vmatprep.subr.mxu0 0.0
        %2441 = vmatpush1.msra.mxu0 0.0
        %2442 = vmatprep.subr.mxu0 0.0
        %2443 = vmatpush1.msra.mxu0 0.0
        %2444 = vmatprep.subr.mxu0 0.0
        %2445 = vmatpush1.msra.mxu0 0.0
        %2446 = vmatprep.subr.mxu0 0.0
        %2447 = vmatpush1.msra.mxu0 0.0
        %2448 = vmatprep.subr.mxu0 0.0
        %2449 = vmatpush1.msra.mxu0 0.0
        %2450 = vmatprep.subr.mxu0 0.0
        %2451 = vmatpush1.msra.mxu0 0.0
        %2452 = vmatprep.subr.mxu0 0.0
        %2453 = vmatpush1.msra.mxu0 0.0
        %2454 = vmatprep.subr.mxu0 0.0
        %2455 = vmatpush1.msra.mxu0 0.0
        %2456 = vmatprep.subr.mxu0 0.0
        %2457 = vmatpush1.msra.mxu0 0.0
        %2458 = vmatprep.subr.mxu0 0.0
        %2459 = vmatpush1.msra.mxu0 0.0
        %2460 = vmatprep.subr.mxu0 0.0
        %2461 = vmatpush1.msra.mxu0 0.0
        %2462 = vmatprep.subr.mxu0 0.0
        %2463 = vmatpush1.msra.mxu0 0.0
        %2464 = vmatprep.subr.mxu0 0.0
        %2465 = vmatpush1.msra.mxu0 0.0
        %2466 = vmatprep.subr.mxu0 0.0
        %2467 = vmatpush1.msra.mxu0 0.0
        %2468 = vmatprep.subr.mxu0 0.0
        %2469 = vmatpush1.msra.mxu0 0.0
        %2470 = vmatprep.subr.mxu0 0.0
        %2471 = vmatpush1.msra.mxu0 0.0
        %2472 = vmatprep.subr.mxu0 0.0
        %2473 = vmatpush1.msra.mxu0 0.0
        %2474 = vmatprep.subr.mxu0 0.0
        %2475 = vmatpush1.msra.mxu0 0.0
        %2476 = vmatprep.mubr.f32.mxu0 0.0
        %2477 = vmatmul.mubr.f32.gmra.mrb[0].mxu0 %v2406
        %v2478 = vpop.f32.mrb[0].mxu0
        %v2479 = vadd.f32 %v2403, %v2478
        %v2480 = vpop.f32.mrb[0].mxu0
        %2481 = vdwg.mxu0
        %vm2482 = vcmask 8192
        %2483 = vst.msk [vmem:[%s378] sm:$0x1] %vm2482, %v2479
        %s2484 = sand.u32 %s269, 1
        %s2485 = scalar_lea.sflag [#allocation5], %s2484
        %s2486 = sand.u32 %s269, 1
        %s2487 = scalar_lea.vmem [#allocation4], %s2486
        // Predicated region
        $region65: #{cnn1d_forward.1} parent=63 // pred_check
          %p2488 = pneg %p279
        $region66: #{cnn1d_forward.1} parent=63 // pred_check_branch
          %2490 = sbr.rel (%p2488) target = $region68
        $region67: #{cnn1d_forward.1} parent=63 // pred_region
          %s2492 = ssub.s32 16, 16
          %2493 = vsyncadd %s2485, %s2492
          %s2494 = smul.addr %s25, 16
          %s2495 = scalar_lea.hbm %s11, %s2494
          %s2497 = sshll.u32 %s2487, 4
          %s2498 = int_to_ptr.vmem [resolvable:$true] %s2497
          %2500 = dma.vmem_to_hbm [thread:$0]  %s2498, 16, %s2495, %s2485
        $region68: #{cnn1d_forward.1} parent=63 // pred_fallthru
          _
      $region64: #{cnn1d_forward.1} parent=5 // pred_fallthru
        _
      %p2501 = scmp.le.s32.totalorder 2, %s20
      // Predicated region
      $region69: #{cnn1d_forward.1} parent=5 // pred_check
        %p2502 = pneg %p2501
      $region70: #{cnn1d_forward.1} parent=5 // pred_check_branch
        %2504 = sbr.rel (%p2502) target = $region72
      $region71: #{cnn1d_forward.1} parent=5 // pred_region
        %s2505 = ssub.s32 %s20, 2
        // Predicated region
        $region73: #{cnn1d_forward.1} parent=71 // pred_check
          %p2506 = pneg %p285
        $region74: #{cnn1d_forward.1} parent=71 // pred_check_branch
          %2508 = sbr.rel (%p2506) target = $region76
        $region75: #{cnn1d_forward.1} parent=71 // pred_region
          %s2509 = sand.u32 %s270, 1
          %s2510 = scalar_lea.sflag [#allocation5], %s2509
          %s2511 = sand.u32 %s270, 1
          %s2512 = scalar_lea.vmem [#allocation4], %s2511
          %2513 = dma.done %s2510, 16
        $region76: #{cnn1d_forward.1} parent=71 // pred_fallthru
          _
      $region72: #{cnn1d_forward.1} parent=5 // pred_fallthru
        _
    $region6: #{cnn1d_forward.1} parent=1 // loop_footer
      %s24 = sadd.s32 1, %s20
    $region7: #{cnn1d_forward.1} parent=1 // loop_footer_branch
      %19 = sbr.rel target = $region3
    $region8: #{cnn1d_forward.1} parent=1 // loop_exit
      _
    %2514 = vsyncpa [#allocation5], 1
    %s2515 = scalar_lea.sflag [#allocation5], 1
    %2516 = vsyncpa %s2515, 1

</llo_original>
